<compile_context>
chip_gen: v6e
topology: v6e:2x2x1
jax: 0.10.0
libtpu: 0.0.40
codegen_flags: <defaults>
</compile_context>

<pallas_src>
import functools

import jax
import jax.numpy as jnp
from jax.experimental import pallas as pl
from jax.experimental.pallas import tpu as pltpu

# Keep f32 so the forward matches the f32 PyTorch module to 1e-4.
# (Switch to bf16 on v6e/v7x for full-rate MXU; accumulation stays f32.)
MATMUL_DTYPE = jnp.float32
VMEM_LIMIT_BYTES = 48 * 1024 * 1024   # explicit scoped-VMEM limit (< v7x 64 MiB)


# ---------------------------------------------------------------------------
# Pallas kernels
# ---------------------------------------------------------------------------
def _prelu(y, alpha):
    return jnp.where(y >= 0, y, alpha * y)


def _conv1x1_kernel(x_ref, w_ref, shift_ref, alpha_ref, o_ref):
    # out = PReLU((scale-folded W) @ x + shift)
    x = x_ref[0]                                            # (Cin, L)
    y = jnp.dot(w_ref[...].astype(MATMUL_DTYPE), x.astype(MATMUL_DTYPE),
                preferred_element_type=jnp.float32)         # (Cout, L)
    y = _prelu(y + shift_ref[...], alpha_ref[0, 0])
    o_ref[0] = y.astype(o_ref.dtype)


def _conv1x1_res_kernel(x_ref, w_ref, shift_ref, alpha_ref, res_ref, o_ref):
    # out = PReLU((scale-folded W) @ x + shift) + residual
    x = x_ref[0]
    y = jnp.dot(w_ref[...].astype(MATMUL_DTYPE), x.astype(MATMUL_DTYPE),
                preferred_element_type=jnp.float32)
    y = _prelu(y + shift_ref[...], alpha_ref[0, 0])
    o_ref[0] = (y + res_ref[0]).astype(o_ref.dtype)


def _conv3x3x3_kernel(*refs, tap_offsets, l_out, fuse_out):
    # grid = (N, D, 3); dz (axis 2) is the reduction axis, acc_ref accumulates
    # the 27-tap conv of one output depth-plane in VMEM.
    if fuse_out:
        (x_ref, w_ref, shift_ref, alpha_ref,
         wo_ref, bo_ref, o_ref, acc_ref) = refs
    else:
        (x_ref, w_ref, shift_ref, alpha_ref, o_ref, acc_ref) = refs

    dz = pl.program_id(2)

    @pl.when(dz == 0)
    def _():
        acc_ref[...] = jnp.zeros_like(acc_ref)

    x = x_ref[0, 0].astype(MATMUL_DTYPE)                    # (Cin, Ltot), loaded once
    acc = acc_ref[...]
    for t, off in enumerate(tap_offsets):                   # 9 static in-plane taps
        xs = x[:, off:off + l_out]                          # shifted (Cin, L) window
        wt = w_ref[0, t].astype(MATMUL_DTYPE)                # (Cout, Cin)
        acc = acc + jnp.dot(wt, xs, preferred_element_type=jnp.float32)
    acc_ref[...] = acc

    @pl.when(dz == pl.num_programs(2) - 1)
    def _():
        y = _prelu(acc_ref[...] + shift_ref[...], alpha_ref[0, 0])
        if fuse_out:                                        # fused 1x1x1 conv_out (+bias)
            y = jnp.dot(wo_ref[...].astype(MATMUL_DTYPE), y.astype(MATMUL_DTYPE),
                        preferred_element_type=jnp.float32) + bo_ref[...]
        o_ref[0, 0] = y.astype(o_ref.dtype)


# ---------------------------------------------------------------------------
# pallas_call wrappers
# ---------------------------------------------------------------------------
def conv1x1_bn_prelu(x, w, shift, alpha, residual=None):
    """Fused 1x1x1 conv (BN scale folded into w) + shift + PReLU [+ residual].

    x:        (B, Cin, L)   B = N*D planes, L = H*W voxels on lanes
    w:        (Cout, Cin)   scale-folded conv weight
    shift:    (Cout,)       folded BN shift
    residual: (B, Cout, L)  optional (added after the activation, aliased to out)
    """
    B, Cin, L = x.shape
    Cout = w.shape[0]
    shift2 = shift.reshape(Cout, 1).astype(jnp.float32)
    alpha2 = jnp.full((1, 1), alpha, jnp.float32)

    args = [x, w, shift2, alpha2]
    in_specs = [
        pl.BlockSpec((1, Cin, L), lambda i: (i, 0, 0)),
        pl.BlockSpec((Cout, Cin), lambda i: (0, 0)),
        pl.BlockSpec((Cout, 1), lambda i: (0, 0)),
        pl.BlockSpec(memory_space=pltpu.MemorySpace.SMEM),   # scalar alpha
    ]
    aliases = {}
    kernel = _conv1x1_kernel
    if residual is not None:
        kernel = _conv1x1_res_kernel
        args.append(residual)
        in_specs.append(pl.BlockSpec((1, Cout, L), lambda i: (i, 0, 0)))
        aliases = {4: 0}          # residual buffer is reused as the output

    out_bytes = 4 * B * Cout * L
    in_bytes = 4 * (x.size + w.size) + (out_bytes if residual is not None else 0)
    cost = pl.CostEstimate(flops=2 * B * L * Cin * Cout, transcendentals=0,
                           bytes_accessed=in_bytes + out_bytes)

    return pl.pallas_call(
        kernel,
        out_shape=jax.ShapeDtypeStruct((B, Cout, L), jnp.float32),
        grid=(B,),
        in_specs=in_specs,
        out_specs=pl.BlockSpec((1, Cout, L), lambda i: (i, 0, 0)),
        input_output_aliases=aliases,
        compiler_params=pltpu.CompilerParams(
            dimension_semantics=("parallel",),
            vmem_limit_bytes=VMEM_LIMIT_BYTES),
        cost_estimate=cost,
    )(*args)


def conv3x3x3_bn_prelu(xpad, w, shift, alpha, hp, wp, out_conv=None):
    """Fused 3x3x3 conv (padding=1, BN scale folded into w) + shift + PReLU,
    optionally followed by a fused 1x1x1 conv (+bias).  No HBM im2col.

    xpad:  (N, D+2, Cin, Ltot) spatially zero-padded planes flattened to Hp*Wp
           lanes with an extra (Wp+1)-wide lane margin on both sides, so every
           in-plane tap is a static, in-bounds slice: Ltot = Hp*Wp + 2*(Wp+1).
    w:     (3, 9, Cout, Cin)  taps ordered (dz, dy*3+dx), scale-folded.
    out_conv: optional (w_out (C2, Cout), b_out (C2,)) fused output conv.
    returns (N, D, Cfinal, Hp*Wp) in padded-plane layout (caller crops).
    """
    N, Dp, Cin, Ltot = xpad.shape
    D = Dp - 2
    Cout = w.shape[2]
    l_out = hp * wp
    assert Ltot == l_out + 2 * (wp + 1)
    taps = tuple(dy * wp + dx for dy in range(3) for dx in range(3))

    shift2 = shift.reshape(Cout, 1).astype(jnp.float32)
    alpha2 = jnp.full((1, 1), alpha, jnp.float32)

    args = [xpad, w, shift2, alpha2]
    in_specs = [
        pl.BlockSpec((1, 1, Cin, Ltot), lambda n, d, z: (n, d + z, 0, 0)),
        pl.BlockSpec((1, 9, Cout, Cin), lambda n, d, z: (z, 0, 0, 0)),
        pl.BlockSpec((Cout, 1), lambda n, d, z: (0, 0)),
        pl.BlockSpec(memory_space=pltpu.MemorySpace.SMEM),   # scalar alpha
    ]
    fuse = out_conv is not None
    c_final = Cout
    if fuse:
        wo, bo = out_conv
        c_final = wo.shape[0]
        args += [wo, bo.reshape(c_final, 1).astype(jnp.float32)]
        in_specs += [pl.BlockSpec((c_final, Cout), lambda n, d, z: (0, 0)),
                     pl.BlockSpec((c_final, 1), lambda n, d, z: (0, 0))]

    flops = 2 * N * D * 27 * Cin * Cout * l_out
    if fuse:
        flops += 2 * N * D * Cout * c_final * l_out
    cost = pl.CostEstimate(
        flops=flops, transcendentals=0,
        bytes_accessed=4 * (xpad.size + w.size + N * D * c_final * l_out))

    kernel = functools.partial(_conv3x3x3_kernel, tap_offsets=taps,
                               l_out=l_out, fuse_out=fuse)
    return pl.pallas_call(
        kernel,
        out_shape=jax.ShapeDtypeStruct((N, D, c_final, l_out), jnp.float32),
        grid=(N, D, 3),
        in_specs=in_specs,
        out_specs=pl.BlockSpec((1, 1, c_final, l_out), lambda n, d, z: (n, d, 0, 0)),
        scratch_shapes=[pltpu.VMEM((Cout, l_out), jnp.float32)],
        compiler_params=pltpu.CompilerParams(
            dimension_semantics=("parallel", "parallel", "arbitrary"),
            vmem_limit_bytes=VMEM_LIMIT_BYTES),
        cost_estimate=cost,
    )(*args)


# ---------------------------------------------------------------------------
# JAX glue: layout helpers, trilinear resize, BN folding
# ---------------------------------------------------------------------------
def pad_for_conv3(x, n, d, c, h, w):
    """(N*D, C, H*W) -> (N, D+2, C, Ltot) zero-padded planes with lane margin."""
    hp, wp = h + 2, w + 2
    x = x.reshape(n, d, c, h, w)
    x = jnp.pad(x, ((0, 0), (1, 1), (0, 0), (1, 1), (1, 1)))
    x = x.reshape(n, d + 2, c, hp * wp)
    x = jnp.pad(x, ((0, 0), (0, 0), (0, 0), (wp + 1, wp + 1)))
    return x, hp, wp


def crop_planes(y, n, d, c, hp, wp):
    """(N, D, C, Hp*Wp) padded-plane output -> (N, D, C, H, W) valid region."""
    return y.reshape(n, d, c, hp, wp)[:, :, :, 1:hp - 1, 1:wp - 1]


def _interp_coords(out_size, in_size):
    scale = in_size / out_size
    src = (jnp.arange(out_size, dtype=jnp.float32) + 0.5) * scale - 0.5
    src = jnp.clip(src, 0.0, in_size - 1)
    i0 = jnp.floor(src).astype(jnp.int32)
    i1 = jnp.minimum(i0 + 1, in_size - 1)
    w1 = src - i0.astype(jnp.float32)
    return i0, i1, 1.0 - w1, w1


def trilinear_resize(x, out_size, axes):
    # matches F.interpolate(..., mode='trilinear', align_corners=False)
    # TODO(synk): data-dependent gather interpolation kept in plain JAX; no
    # clean rectangular-tile Pallas equivalent at these sizes.
    def lin(x, axis, out_sz):
        in_sz = x.shape[axis]
        i0, i1, w0, w1 = _interp_coords(out_sz, in_sz)
        x0 = jnp.take(x, i0, axis=axis)
        x1 = jnp.take(x, i1, axis=axis)
        shp = [1] * x.ndim
        shp[axis] = out_sz
        return x0 * w0.reshape(shp) + x1 * w1.reshape(shp)

    for axis, sz in zip(axes, out_size):
        x = lin(x, axis, sz)
    return x


def fold_bn(gamma, beta, mean, var, eps=1e-5):
    scale = gamma / jnp.sqrt(var + eps)
    shift = beta - mean * scale
    return scale, shift


def fold_conv1x1_bn(layer):
    scale, shift = fold_bn(*layer['bn'])
    w = layer['w'].reshape(layer['w'].shape[0], -1) * scale[:, None]   # (Cout, Cin)
    return w, shift


def fold_conv3x3x3_bn(layer):
    scale, shift = fold_bn(*layer['bn'])
    w = layer['w'] * scale[:, None, None, None, None]                  # (Cout, Cin, 3,3,3)
    cout, cin = w.shape[0], w.shape[1]
    w = jnp.transpose(w, (2, 3, 4, 0, 1)).reshape(3, 9, cout, cin)     # (dz, dy*3+dx, o, c)
    return w, shift


# ---------------------------------------------------------------------------
# FCNHead forward (Pallas path)
# ---------------------------------------------------------------------------
def fcn_head_forward(params, x3, x4, x5):
    N, c3 = x3.shape[:2]
    c4, c5 = x4.shape[1], x5.shape[1]
    D4, H4, W4 = x4.shape[2:]
    D3, H3, W3 = x3.shape[2:]
    out_ch = params['conv_out']['w'].shape[0]

    # module boundary: NCDHW -> internal (N, D, C, H, W) layout (one permute each)
    x3i = jnp.transpose(x3, (0, 2, 1, 3, 4))
    x4i = jnp.transpose(x4, (0, 2, 1, 3, 4))
    x5i = jnp.transpose(x5, (0, 2, 1, 3, 4))

    # x5_up = conv5_4(interp(x5, x4 size));  "+ x4" fused as residual
    x5u = trilinear_resize(x5i, (D4, H4, W4), axes=(1, 3, 4))
    w, shift = fold_conv1x1_bn(params['conv5_4'])
    y = conv1x1_bn_prelu(x5u.reshape(N * D4, c5, H4 * W4), w, shift,
                         params['conv5_4']['alpha'],
                         residual=x4i.reshape(N * D4, c4, H4 * W4))

    # x4_refine = conv4_0(x5_up + x4)   (in-kernel 3x3x3, no im2col)
    xp, hp, wp = pad_for_conv3(y, N, D4, c4, H4, W4)
    w, shift = fold_conv3x3x3_bn(params['conv4_0'])
    y = conv3x3x3_bn_prelu(xp, w, shift, params['conv4_0']['alpha'], hp, wp)
    x4r = crop_planes(y, N, D4, c4, hp, wp)                  # (N, D4, c4, H4, W4)

    # x4_up = conv4_3(interp(x4_refine, x3 size));  "+ x3" fused as residual
    x4u = trilinear_resize(x4r, (D3, H3, W3), axes=(1, 3, 4))
    w, shift = fold_conv1x1_bn(params['conv4_3'])
    y = conv1x1_bn_prelu(x4u.reshape(N * D3, c4, H3 * W3), w, shift,
                         params['conv4_3']['alpha'],
                         residual=x3i.reshape(N * D3, c3, H3 * W3))

    # out = conv_out(conv3_0(x4_up + x3))  -- conv_out fused into the 3x3x3 kernel
    xp, hp, wp = pad_for_conv3(y, N, D3, c3, H3, W3)
    w, shift = fold_conv3x3x3_bn(params['conv3_0'])
    wout = params['conv_out']['w'].reshape(out_ch, c3)
    y = conv3x3x3_bn_prelu(xp, w, shift, params['conv3_0']['alpha'], hp, wp,
                           out_conv=(wout, params['conv_out']['b']))
    out = crop_planes(y, N, D3, out_ch, hp, wp)              # (N, D3, outC, H3, W3)

    # module boundary: internal layout -> NCDHW
    return jnp.transpose(out, (0, 2, 1, 3, 4))


# ---------------------------------------------------------------------------
# Pure-JAX reference (NCDHW, mirrors the PyTorch module) for correctness
# ---------------------------------------------------------------------------
def _ref_conv1x1_bn_prelu(x, layer, residual=None):
    scale, shift = fold_bn(*layer['bn'])
    w = layer['w'].reshape(layer['w'].shape[0], -1)
    y = jnp.einsum('oc,ncdhw->nodhw', w, x)
    y = y * scale.reshape(1, -1, 1, 1, 1) + shift.reshape(1, -1, 1, 1, 1)
    y = jnp.where(y >= 0, y, layer['alpha'] * y)
    if residual is not None:
        y = y + residual
    return y


def _ref_conv3x3x3_bn_prelu(x, layer):
    scale, shift = fold_bn(*layer['bn'])
    w = layer['w']
    N, C, D, H, W = x.shape
    xp = jnp.pad(x, ((0, 0), (0, 0), (1, 1), (1, 1), (1, 1)))
    acc = 0.0
    for dz in range(3):
        for dy in range(3):
            for dx in range(3):
                tap = xp[:, :, dz:dz + D, dy:dy + H, dx:dx + W]
                acc = acc + jnp.einsum('oc,ncdhw->nodhw', w[:, :, dz, dy, dx], tap)
    y = acc * scale.reshape(1, -1, 1, 1, 1) + shift.reshape(1, -1, 1, 1, 1)
    return jnp.where(y >= 0, y, layer['alpha'] * y)


def fcn_head_forward_reference(params, x3, x4, x5):
    D4, H4, W4 = x4.shape[2:]
    D3, H3, W3 = x3.shape[2:]
    x5u = _ref_conv1x1_bn_prelu(
        trilinear_resize(x5, (D4, H4, W4), axes=(2, 3, 4)), params['conv5_4'],
        residual=x4)
    x4r = _ref_conv3x3x3_bn_prelu(x5u, params['conv4_0'])
    x4u = _ref_conv1x1_bn_prelu(
        trilinear_resize(x4r, (D3, H3, W3), axes=(2, 3, 4)), params['conv4_3'],
        residual=x3)
    x3r = _ref_conv3x3x3_bn_prelu(x4u, params['conv3_0'])
    wout = params['conv_out']['w'].reshape(params['conv_out']['w'].shape[0], -1)
    return (jnp.einsum('oc,ncdhw->nodhw', wout, x3r)
            + params['conv_out']['b'].reshape(1, -1, 1, 1, 1))


# ---------------------------------------------------------------------------
# Deterministic parameter init (shapes from FCNHead.__init__)
# ---------------------------------------------------------------------------
def init_params(key, in_channels, out_channels):
    c3, c4, c5 = in_channels
    keys = jax.random.split(key, 10)

    def conv_w(k, cout, cin, ks):
        fan_in = cin * ks ** 3
        return jax.random.normal(k, (cout, cin, ks, ks, ks), jnp.float32) / jnp.sqrt(fan_in)

    def bn(k, c):
        k1, k2, k3, k4 = jax.random.split(k, 4)
        gamma = 1.0 + 0.1 * jax.random.normal(k1, (c,), jnp.float32)
        beta = 0.1 * jax.random.normal(k2, (c,), jnp.float32)
        mean = 0.1 * jax.random.normal(k3, (c,), jnp.float32)
        var = 1.0 + 0.1 * jax.random.uniform(k4, (c,), jnp.float32)
        return gamma, beta, mean, var

    return {
        'conv5_4': {'w': conv_w(keys[0], c4, c5, 1), 'bn': bn(keys[1], c4), 'alpha': 0.25},
        'conv4_0': {'w': conv_w(keys[2], c4, c4, 3), 'bn': bn(keys[3], c4), 'alpha': 0.25},
        'conv4_3': {'w': conv_w(keys[4], c3, c4, 1), 'bn': bn(keys[5], c3), 'alpha': 0.25},
        'conv3_0': {'w': conv_w(keys[6], c3, c3, 3), 'bn': bn(keys[7], c3), 'alpha': 0.25},
        'conv_out': {'w': conv_w(keys[8], out_channels, c3, 1),
                     'b': 0.1 * jax.random.normal(keys[9], (out_channels,), jnp.float32)},
    }


if __name__ == "__main__":
    key = jax.random.PRNGKey(0)
    kp, k3, k4, k5 = jax.random.split(key, 4)

    in_channels = (8, 16, 32)   # (c3, c4, c5)
    out_channels = 4
    params = init_params(kp, in_channels, out_channels)

    # NCDHW feature pyramid (x5 is the coarsest)
    x3 = jax.random.normal(k3, (2, 8, 8, 8, 8), jnp.float32)
    x4 = jax.random.normal(k4, (2, 16, 4, 4, 4), jnp.float32)
    x5 = jax.random.normal(k5, (2, 32, 2, 2, 2), jnp.float32)

    fwd = jax.jit(fcn_head_forward)
    out = jax.block_until_ready(fwd(params, x3, x4, x5))

    ref = fcn_head_forward_reference(params, x3, x4, x5)
    assert out.shape == (2, out_channels, 8, 8, 8), out.shape
    err = float(jnp.max(jnp.abs(out - ref)))
    assert jnp.allclose(out, ref, atol=1e-4, rtol=1e-4), err

    print("KERNEL_OK")
</pallas_src>

<mosaic_0001>
module attributes {stable_mosaic.version = 11 : i64} {
  func.func @_conv1x1_res_kernel(%arg0: i32, %arg1: memref<1x32x16xf32, #tpu.memory_space<vmem>>, %arg2: memref<16x32xf32, #tpu.memory_space<vmem>>, %arg3: memref<16x1xf32, #tpu.memory_space<vmem>>, %arg4: memref<1x1xf32, #tpu.memory_space<smem>>, %arg5: memref<1x16x16xf32, #tpu.memory_space<vmem>>, %arg6: memref<1x16x16xf32, #tpu.memory_space<vmem>>) attributes {dimension_semantics = [#tpu.dimension_semantics<parallel>], iteration_bounds = array<i64: 8>, scalar_prefetch = 0 : i64, scratch_operands = 0 : i64, tpu.core_type = #tpu.core_type<tc>, window_params = [{transform_indices = @transform_0, window_bounds = array<i64: 1, 32, 16>}, {pipeline_mode = #tpu.pipeline_mode<synchronous>, transform_indices = @transform_1, window_bounds = array<i64: 16, 32>}, {pipeline_mode = #tpu.pipeline_mode<synchronous>, transform_indices = @transform_2, window_bounds = array<i64: 16, 1>}, {transform_indices = @transform_3, window_bounds = array<i64: 1, 1>}, {transform_indices = @transform_4, window_bounds = array<i64: 1, 16, 16>}, {transform_indices = @transform_5, window_bounds = array<i64: 1, 16, 16>}]} {
    %c0 = arith.constant 0 : index
    %c0_0 = arith.constant 0 : index
    %c0_1 = arith.constant 0 : index
    %0 = vector.load %arg1[%c0, %c0_0, %c0_1] : memref<1x32x16xf32, #tpu.memory_space<vmem>>, vector<1x32x16xf32>
    %1 = vector.shape_cast %0 : vector<1x32x16xf32> to vector<32x16xf32>
    %c0_2 = arith.constant 0 : index
    %c0_3 = arith.constant 0 : index
    %2 = vector.load %arg2[%c0_2, %c0_3] : memref<16x32xf32, #tpu.memory_space<vmem>>, vector<16x32xf32>
    %cst = arith.constant dense<0.000000e+00> : vector<16x16xf32>
    %3 = tpu.matmul %2, %1, %cst {dimension_numbers = #tpu.dot_dimension_numbers<[1], [0], [0], [1], [0, 0, 1, 1], [], []>} : vector<16x32xf32>, vector<32x16xf32>, vector<16x16xf32> -> vector<16x16xf32>
    %c0_4 = arith.constant 0 : index
    %c0_5 = arith.constant 0 : index
    %4 = vector.load %arg3[%c0_4, %c0_5] : memref<16x1xf32, #tpu.memory_space<vmem>>, vector<16x1xf32>
    %5 = vector.broadcast %4 : vector<16x1xf32> to vector<16x16xf32>
    %6 = arith.addf %3, %5 : vector<16x16xf32>
    %c0_6 = arith.constant 0 : index
    %c0_7 = arith.constant 0 : index
    %7 = memref.load %arg4[%c0_6, %c0_7] : memref<1x1xf32, #tpu.memory_space<smem>>
    %cst_8 = arith.constant 0.000000e+00 : f32
    %8 = vector.broadcast %cst_8 : f32 to vector<16x16xf32>
    %9 = arith.cmpf oge, %6, %8 : vector<16x16xf32>
    %10 = vector.broadcast %7 : f32 to vector<16x16xf32>
    %11 = arith.mulf %10, %6 : vector<16x16xf32>
    %12 = arith.select %9, %6, %11 : vector<16x16xi1>, vector<16x16xf32>
    %c0_9 = arith.constant 0 : index
    %c0_10 = arith.constant 0 : index
    %c0_11 = arith.constant 0 : index
    %13 = vector.load %arg5[%c0_9, %c0_10, %c0_11] : memref<1x16x16xf32, #tpu.memory_space<vmem>>, vector<1x16x16xf32>
    %14 = vector.shape_cast %13 : vector<1x16x16xf32> to vector<16x16xf32>
    %15 = arith.addf %12, %14 : vector<16x16xf32>
    %c0_12 = arith.constant 0 : index
    %c0_13 = arith.constant 0 : index
    %c0_14 = arith.constant 0 : index
    %16 = vector.load %arg6[%c0_12, %c0_13, %c0_14] : memref<1x16x16xf32, #tpu.memory_space<vmem>>, vector<1x16x16xf32>
    %17 = vector.shape_cast %16 : vector<1x16x16xf32> to vector<16x16xf32>
    %18 = vector.shape_cast %15 : vector<16x16xf32> to vector<1x16x16xf32>
    tpu.vector_store %arg6[%c0_12, %c0_13, %c0_14], %18 {strides = array<i32>} : memref<1x16x16xf32, #tpu.memory_space<vmem>>, vector<1x16x16xf32>,
    return
  }
  func.func @transform_0(%arg0: i32) -> (i32, i32, i32) {
    %c0_i32 = arith.constant 0 : i32
    %c0_i32_0 = arith.constant 0 : i32
    %c0_i32_1 = arith.constant 0 : i32
    return %arg0, %c0_i32, %c0_i32_0 : i32, i32, i32
  }
  func.func @transform_1(%arg0: i32) -> (i32, i32) {
    %c0_i32 = arith.constant 0 : i32
    %c0_i32_0 = arith.constant 0 : i32
    %c0_i32_1 = arith.constant 0 : i32
    return %c0_i32, %c0_i32_0 : i32, i32
  }
  func.func @transform_2(%arg0: i32) -> (i32, i32) {
    %c0_i32 = arith.constant 0 : i32
    %c0_i32_0 = arith.constant 0 : i32
    %c0_i32_1 = arith.constant 0 : i32
    return %c0_i32, %c0_i32_0 : i32, i32
  }
  func.func @transform_3(%arg0: i32) -> (i32, i32) {
    %c0_i32 = arith.constant 0 : i32
    %c0_i32_0 = arith.constant 0 : i32
    %c0_i32_1 = arith.constant 0 : i32
    return %c0_i32, %c0_i32_0 : i32, i32
  }
  func.func @transform_4(%arg0: i32) -> (i32, i32, i32) {
    %c0_i32 = arith.constant 0 : i32
    %c0_i32_0 = arith.constant 0 : i32
    %c0_i32_1 = arith.constant 0 : i32
    return %arg0, %c0_i32, %c0_i32_0 : i32, i32, i32
  }
  func.func @transform_5(%arg0: i32) -> (i32, i32, i32) {
    %c0_i32 = arith.constant 0 : i32
    %c0_i32_0 = arith.constant 0 : i32
    %c0_i32_1 = arith.constant 0 : i32
    return %arg0, %c0_i32, %c0_i32_0 : i32, i32, i32
  }
}

module attributes {stable_mosaic.version = 11 : i64} {
  func.func @_conv3x3x3_kernel(%arg0: i32, %arg1: i32, %arg2: i32, %arg3: memref<1x1x16x50xf32, #tpu.memory_space<vmem>>, %arg4: memref<1x9x16x16xf32, #tpu.memory_space<vmem>>, %arg5: memref<16x1xf32, #tpu.memory_space<vmem>>, %arg6: memref<1x1xf32, #tpu.memory_space<smem>>, %arg7: memref<1x1x16x36xf32, #tpu.memory_space<vmem>>, %arg8: memref<16x36xf32, #tpu.memory_space<vmem>>) attributes {dimension_semantics = [#tpu.dimension_semantics<parallel>, #tpu.dimension_semantics<parallel>, #tpu.dimension_semantics<arbitrary>], iteration_bounds = array<i64: 2, 4, 3>, scalar_prefetch = 0 : i64, scratch_operands = 1 : i64, tpu.core_type = #tpu.core_type<tc>, window_params = [{transform_indices = @transform_0, window_bounds = array<i64: 1, 1, 16, 50>}, {transform_indices = @transform_1, window_bounds = array<i64: 1, 9, 16, 16>}, {pipeline_mode = #tpu.pipeline_mode<synchronous>, transform_indices = @transform_2, window_bounds = array<i64: 16, 1>}, {transform_indices = @transform_3, window_bounds = array<i64: 1, 1>}, {transform_indices = @transform_4, window_bounds = array<i64: 1, 1, 16, 36>}]} {
    %c0_i32 = arith.constant 0 : i32
    %0 = arith.cmpi eq, %arg2, %c0_i32 : i32
    %1 = arith.extui %0 : i1 to i32
    %c0_i32_0 = arith.constant 0 : i32
    %2 = arith.cmpi ne, %1, %c0_i32_0 : i32
    scf.if %2 {
      %cst_45 = arith.constant 0.000000e+00 : f32
      %55 = vector.broadcast %cst_45 : f32 to vector<16x36xf32>
      %c0_46 = arith.constant 0 : index
      %c0_47 = arith.constant 0 : index
      %56 = vector.load %arg8[%c0_46, %c0_47] : memref<16x36xf32, #tpu.memory_space<vmem>>, vector<16x36xf32>
      tpu.vector_store %arg8[%c0_46, %c0_47], %55 {strides = array<i32>} : memref<16x36xf32, #tpu.memory_space<vmem>>, vector<16x36xf32>,
    } else {
    }
    %c0 = arith.constant 0 : index
    %c0_1 = arith.constant 0 : index
    %c0_2 = arith.constant 0 : index
    %c0_3 = arith.constant 0 : index
    %3 = vector.load %arg3[%c0, %c0_1, %c0_2, %c0_3] : memref<1x1x16x50xf32, #tpu.memory_space<vmem>>, vector<1x1x16x50xf32>
    %4 = vector.shape_cast %3 : vector<1x1x16x50xf32> to vector<16x50xf32>
    %c0_4 = arith.constant 0 : index
    %c0_5 = arith.constant 0 : index
    %5 = vector.load %arg8[%c0_4, %c0_5] : memref<16x36xf32, #tpu.memory_space<vmem>>, vector<16x36xf32>
    %6 = vector.extract_strided_slice %4 {offsets = [0, 0], sizes = [16, 36], strides = [1, 1]} : vector<16x50xf32> to vector<16x36xf32>
    %c0_6 = arith.constant 0 : index
    %c0_7 = arith.constant 0 : index
    %c0_8 = arith.constant 0 : index
    %c0_9 = arith.constant 0 : index
    %7 = vector.load %arg4[%c0_6, %c0_7, %c0_8, %c0_9] : memref<1x9x16x16xf32, #tpu.memory_space<vmem>>, vector<1x1x16x16xf32>
    %8 = vector.shape_cast %7 : vector<1x1x16x16xf32> to vector<16x16xf32>
    %cst = arith.constant dense<0.000000e+00> : vector<16x36xf32>
    %9 = tpu.matmul %8, %6, %cst {dimension_numbers = #tpu.dot_dimension_numbers<[1], [0], [0], [1], [0, 0, 1, 1], [], []>} : vector<16x16xf32>, vector<16x36xf32>, vector<16x36xf32> -> vector<16x36xf32>
    %10 = arith.addf %5, %9 : vector<16x36xf32>
    %11 = vector.extract_strided_slice %4 {offsets = [0, 1], sizes = [16, 36], strides = [1, 1]} : vector<16x50xf32> to vector<16x36xf32>
    %c0_10 = arith.constant 0 : index
    %c1 = arith.constant 1 : index
    %c0_11 = arith.constant 0 : index
    %c0_12 = arith.constant 0 : index
    %12 = vector.load %arg4[%c0_10, %c1, %c0_11, %c0_12] : memref<1x9x16x16xf32, #tpu.memory_space<vmem>>, vector<1x1x16x16xf32>
    %13 = vector.shape_cast %12 : vector<1x1x16x16xf32> to vector<16x16xf32>
    %cst_13 = arith.constant dense<0.000000e+00> : vector<16x36xf32>
    %14 = tpu.matmul %13, %11, %cst_13 {dimension_numbers = #tpu.dot_dimension_numbers<[1], [0], [0], [1], [0, 0, 1, 1], [], []>} : vector<16x16xf32>, vector<16x36xf32>, vector<16x36xf32> -> vector<16x36xf32>
    %15 = arith.addf %10, %14 : vector<16x36xf32>
    %16 = vector.extract_strided_slice %4 {offsets = [0, 2], sizes = [16, 36], strides = [1, 1]} : vector<16x50xf32> to vector<16x36xf32>
    %c0_14 = arith.constant 0 : index
    %c2 = arith.constant 2 : index
    %c0_15 = arith.constant 0 : index
    %c0_16 = arith.constant 0 : index
    %17 = vector.load %arg4[%c0_14, %c2, %c0_15, %c0_16] : memref<1x9x16x16xf32, #tpu.memory_space<vmem>>, vector<1x1x16x16xf32>
    %18 = vector.shape_cast %17 : vector<1x1x16x16xf32> to vector<16x16xf32>
    %cst_17 = arith.constant dense<0.000000e+00> : vector<16x36xf32>
    %19 = tpu.matmul %18, %16, %cst_17 {dimension_numbers = #tpu.dot_dimension_numbers<[1], [0], [0], [1], [0, 0, 1, 1], [], []>} : vector<16x16xf32>, vector<16x36xf32>, vector<16x36xf32> -> vector<16x36xf32>
    %20 = arith.addf %15, %19 : vector<16x36xf32>
    %21 = vector.extract_strided_slice %4 {offsets = [0, 6], sizes = [16, 36], strides = [1, 1]} : vector<16x50xf32> to vector<16x36xf32>
    %c0_18 = arith.constant 0 : index
    %c3 = arith.constant 3 : index
    %c0_19 = arith.constant 0 : index
    %c0_20 = arith.constant 0 : index
    %22 = vector.load %arg4[%c0_18, %c3, %c0_19, %c0_20] : memref<1x9x16x16xf32, #tpu.memory_space<vmem>>, vector<1x1x16x16xf32>
    %23 = vector.shape_cast %22 : vector<1x1x16x16xf32> to vector<16x16xf32>
    %cst_21 = arith.constant dense<0.000000e+00> : vector<16x36xf32>
    %24 = tpu.matmul %23, %21, %cst_21 {dimension_numbers = #tpu.dot_dimension_numbers<[1], [0], [0], [1], [0, 0, 1, 1], [], []>} : vector<16x16xf32>, vector<16x36xf32>, vector<16x36xf32> -> vector<16x36xf32>
    %25 = arith.addf %20, %24 : vector<16x36xf32>
    %26 = vector.extract_strided_slice %4 {offsets = [0, 7], sizes = [16, 36], strides = [1, 1]} : vector<16x50xf32> to vector<16x36xf32>
    %c0_22 = arith.constant 0 : index
    %c4 = arith.constant 4 : index
    %c0_23 = arith.constant 0 : index
    %c0_24 = arith.constant 0 : index
    %27 = vector.load %arg4[%c0_22, %c4, %c0_23, %c0_24] : memref<1x9x16x16xf32, #tpu.memory_space<vmem>>, vector<1x1x16x16xf32>
    %28 = vector.shape_cast %27 : vector<1x1x16x16xf32> to vector<16x16xf32>
    %cst_25 = arith.constant dense<0.000000e+00> : vector<16x36xf32>
    %29 = tpu.matmul %28, %26, %cst_25 {dimension_numbers = #tpu.dot_dimension_numbers<[1], [0], [0], [1], [0, 0, 1, 1], [], []>} : vector<16x16xf32>, vector<16x36xf32>, vector<16x36xf32> -> vector<16x36xf32>
    %30 = arith.addf %25, %29 : vector<16x36xf32>
    %31 = vector.extract_strided_slice %4 {offsets = [0, 8], sizes = [16, 36], strides = [1, 1]} : vector<16x50xf32> to vector<16x36xf32>
    %c0_26 = arith.constant 0 : index
    %c5 = arith.constant 5 : index
    %c0_27 = arith.constant 0 : index
    %c0_28 = arith.constant 0 : index
    %32 = vector.load %arg4[%c0_26, %c5, %c0_27, %c0_28] : memref<1x9x16x16xf32, #tpu.memory_space<vmem>>, vector<1x1x16x16xf32>
    %33 = vector.shape_cast %32 : vector<1x1x16x16xf32> to vector<16x16xf32>
    %cst_29 = arith.constant dense<0.000000e+00> : vector<16x36xf32>
    %34 = tpu.matmul %33, %31, %cst_29 {dimension_numbers = #tpu.dot_dimension_numbers<[1], [0], [0], [1], [0, 0, 1, 1], [], []>} : vector<16x16xf32>, vector<16x36xf32>, vector<16x36xf32> -> vector<16x36xf32>
    %35 = arith.addf %30, %34 : vector<16x36xf32>
    %36 = vector.extract_strided_slice %4 {offsets = [0, 12], sizes = [16, 36], strides = [1, 1]} : vector<16x50xf32> to vector<16x36xf32>
    %c0_30 = arith.constant 0 : index
    %c6 = arith.constant 6 : index
    %c0_31 = arith.constant 0 : index
    %c0_32 = arith.constant 0 : index
    %37 = vector.load %arg4[%c0_30, %c6, %c0_31, %c0_32] : memref<1x9x16x16xf32, #tpu.memory_space<vmem>>, vector<1x1x16x16xf32>
    %38 = vector.shape_cast %37 : vector<1x1x16x16xf32> to vector<16x16xf32>
    %cst_33 = arith.constant dense<0.000000e+00> : vector<16x36xf32>
    %39 = tpu.matmul %38, %36, %cst_33 {dimension_numbers = #tpu.dot_dimension_numbers<[1], [0], [0], [1], [0, 0, 1, 1], [], []>} : vector<16x16xf32>, vector<16x36xf32>, vector<16x36xf32> -> vector<16x36xf32>
    %40 = arith.addf %35, %39 : vector<16x36xf32>
    %41 = vector.extract_strided_slice %4 {offsets = [0, 13], sizes = [16, 36], strides = [1, 1]} : vector<16x50xf32> to vector<16x36xf32>
    %c0_34 = arith.constant 0 : index
    %c7 = arith.constant 7 : index
    %c0_35 = arith.constant 0 : index
    %c0_36 = arith.constant 0 : index
    %42 = vector.load %arg4[%c0_34, %c7, %c0_35, %c0_36] : memref<1x9x16x16xf32, #tpu.memory_space<vmem>>, vector<1x1x16x16xf32>
    %43 = vector.shape_cast %42 : vector<1x1x16x16xf32> to vector<16x16xf32>
    %cst_37 = arith.constant dense<0.000000e+00> : vector<16x36xf32>
    %44 = tpu.matmul %43, %41, %cst_37 {dimension_numbers = #tpu.dot_dimension_numbers<[1], [0], [0], [1], [0, 0, 1, 1], [], []>} : vector<16x16xf32>, vector<16x36xf32>, vector<16x36xf32> -> vector<16x36xf32>
    %45 = arith.addf %40, %44 : vector<16x36xf32>
    %46 = vector.extract_strided_slice %4 {offsets = [0, 14], sizes = [16, 36], strides = [1, 1]} : vector<16x50xf32> to vector<16x36xf32>
    %c0_38 = arith.constant 0 : index
    %c8 = arith.constant 8 : index
    %c0_39 = arith.constant 0 : index
    %c0_40 = arith.constant 0 : index
    %47 = vector.load %arg4[%c0_38, %c8, %c0_39, %c0_40] : memref<1x9x16x16xf32, #tpu.memory_space<vmem>>, vector<1x1x16x16xf32>
    %48 = vector.shape_cast %47 : vector<1x1x16x16xf32> to vector<16x16xf32>
    %cst_41 = arith.constant dense<0.000000e+00> : vector<16x36xf32>
    %49 = tpu.matmul %48, %46, %cst_41 {dimension_numbers = #tpu.dot_dimension_numbers<[1], [0], [0], [1], [0, 0, 1, 1], [], []>} : vector<16x16xf32>, vector<16x36xf32>, vector<16x36xf32> -> vector<16x36xf32>
    %50 = arith.addf %45, %49 : vector<16x36xf32>
    %c0_42 = arith.constant 0 : index
    %c0_43 = arith.constant 0 : index
    %51 = vector.load %arg8[%c0_42, %c0_43] : memref<16x36xf32, #tpu.memory_space<vmem>>, vector<16x36xf32>
    tpu.vector_store %arg8[%c0_42, %c0_43], %50 {strides = array<i32>} : memref<16x36xf32, #tpu.memory_space<vmem>>, vector<16x36xf32>,
    %c2_i32 = arith.constant 2 : i32
    %52 = arith.cmpi eq, %arg2, %c2_i32 : i32
    %53 = arith.extui %52 : i1 to i32
    %c0_i32_44 = arith.constant 0 : i32
    %54 = arith.cmpi ne, %53, %c0_i32_44 : i32
    scf.if %54 {
      %c0_45 = arith.constant 0 : index
      %c0_46 = arith.constant 0 : index
      %55 = vector.load %arg8[%c0_45, %c0_46] : memref<16x36xf32, #tpu.memory_space<vmem>>, vector<16x36xf32>
      %c0_47 = arith.constant 0 : index
      %c0_48 = arith.constant 0 : index
      %56 = vector.load %arg5[%c0_47, %c0_48] : memref<16x1xf32, #tpu.memory_space<vmem>>, vector<16x1xf32>
      %57 = vector.broadcast %56 : vector<16x1xf32> to vector<16x36xf32>
      %58 = arith.addf %55, %57 : vector<16x36xf32>
      %c0_49 = arith.constant 0 : index
      %c0_50 = arith.constant 0 : index
      %59 = memref.load %arg6[%c0_49, %c0_50] : memref<1x1xf32, #tpu.memory_space<smem>>
      %cst_51 = arith.constant 0.000000e+00 : f32
      %60 = vector.broadcast %cst_51 : f32 to vector<16x36xf32>
      %61 = arith.cmpf oge, %58, %60 : vector<16x36xf32>
      %62 = vector.broadcast %59 : f32 to vector<16x36xf32>
      %63 = arith.mulf %62, %58 : vector<16x36xf32>
      %64 = arith.select %61, %58, %63 : vector<16x36xi1>, vector<16x36xf32>
      %c0_52 = arith.constant 0 : index
      %c0_53 = arith.constant 0 : index
      %c0_54 = arith.constant 0 : index
      %c0_55 = arith.constant 0 : index
      %65 = vector.load %arg7[%c0_52, %c0_53, %c0_54, %c0_55] : memref<1x1x16x36xf32, #tpu.memory_space<vmem>>, vector<1x1x16x36xf32>
      %66 = vector.shape_cast %65 : vector<1x1x16x36xf32> to vector<16x36xf32>
      %67 = vector.shape_cast %64 : vector<16x36xf32> to vector<1x1x16x36xf32>
      tpu.vector_store %arg7[%c0_52, %c0_53, %c0_54, %c0_55], %67 {strides = array<i32>} : memref<1x1x16x36xf32, #tpu.memory_space<vmem>>, vector<1x1x16x36xf32>,
    } else {
    }
    return
  }
  func.func @transform_0(%arg0: i32, %arg1: i32, %arg2: i32) -> (i32, i32, i32, i32) {
    %0 = arith.addi %arg1, %arg2 : i32
    %c0_i32 = arith.constant 0 : i32
    %c0_i32_0 = arith.constant 0 : i32
    %c0_i32_1 = arith.constant 0 : i32
    return %arg0, %0, %c0_i32, %c0_i32_0 : i32, i32, i32, i32
  }
  func.func @transform_1(%arg0: i32, %arg1: i32, %arg2: i32) -> (i32, i32, i32, i32) {
    %c0_i32 = arith.constant 0 : i32
    %c0_i32_0 = arith.constant 0 : i32
    %c0_i32_1 = arith.constant 0 : i32
    %c0_i32_2 = arith.constant 0 : i32
    return %arg2, %c0_i32, %c0_i32_0, %c0_i32_1 : i32, i32, i32, i32
  }
  func.func @transform_2(%arg0: i32, %arg1: i32, %arg2: i32) -> (i32, i32) {
    %c0_i32 = arith.constant 0 : i32
    %c0_i32_0 = arith.constant 0 : i32
    %c0_i32_1 = arith.constant 0 : i32
    return %c0_i32, %c0_i32_0 : i32, i32
  }
  func.func @transform_3(%arg0: i32, %arg1: i32, %arg2: i32) -> (i32, i32) {
    %c0_i32 = arith.constant 0 : i32
    %c0_i32_0 = arith.constant 0 : i32
    %c0_i32_1 = arith.constant 0 : i32
    return %c0_i32, %c0_i32_0 : i32, i32
  }
  func.func @transform_4(%arg0: i32, %arg1: i32, %arg2: i32) -> (i32, i32, i32, i32) {
    %c0_i32 = arith.constant 0 : i32
    %c0_i32_0 = arith.constant 0 : i32
    %c0_i32_1 = arith.constant 0 : i32
    return %arg0, %arg1, %c0_i32, %c0_i32_0 : i32, i32, i32, i32
  }
}

module attributes {stable_mosaic.version = 11 : i64} {
  func.func @_conv1x1_res_kernel(%arg0: i32, %arg1: memref<1x16x64xf32, #tpu.memory_space<vmem>>, %arg2: memref<8x16xf32, #tpu.memory_space<vmem>>, %arg3: memref<8x1xf32, #tpu.memory_space<vmem>>, %arg4: memref<1x1xf32, #tpu.memory_space<smem>>, %arg5: memref<1x8x64xf32, #tpu.memory_space<vmem>>, %arg6: memref<1x8x64xf32, #tpu.memory_space<vmem>>) attributes {dimension_semantics = [#tpu.dimension_semantics<parallel>], iteration_bounds = array<i64: 16>, scalar_prefetch = 0 : i64, scratch_operands = 0 : i64, tpu.core_type = #tpu.core_type<tc>, window_params = [{transform_indices = @transform_0, window_bounds = array<i64: 1, 16, 64>}, {pipeline_mode = #tpu.pipeline_mode<synchronous>, transform_indices = @transform_1, window_bounds = array<i64: 8, 16>}, {pipeline_mode = #tpu.pipeline_mode<synchronous>, transform_indices = @transform_2, window_bounds = array<i64: 8, 1>}, {transform_indices = @transform_3, window_bounds = array<i64: 1, 1>}, {transform_indices = @transform_4, window_bounds = array<i64: 1, 8, 64>}, {transform_indices = @transform_5, window_bounds = array<i64: 1, 8, 64>}]} {
    %c0 = arith.constant 0 : index
    %c0_0 = arith.constant 0 : index
    %c0_1 = arith.constant 0 : index
    %0 = vector.load %arg1[%c0, %c0_0, %c0_1] : memref<1x16x64xf32, #tpu.memory_space<vmem>>, vector<1x16x64xf32>
    %1 = vector.shape_cast %0 : vector<1x16x64xf32> to vector<16x64xf32>
    %c0_2 = arith.constant 0 : index
    %c0_3 = arith.constant 0 : index
    %2 = vector.load %arg2[%c0_2, %c0_3] : memref<8x16xf32, #tpu.memory_space<vmem>>, vector<8x16xf32>
    %cst = arith.constant dense<0.000000e+00> : vector<8x64xf32>
    %3 = tpu.matmul %2, %1, %cst {dimension_numbers = #tpu.dot_dimension_numbers<[1], [0], [0], [1], [0, 0, 1, 1], [], []>} : vector<8x16xf32>, vector<16x64xf32>, vector<8x64xf32> -> vector<8x64xf32>
    %c0_4 = arith.constant 0 : index
    %c0_5 = arith.constant 0 : index
    %4 = vector.load %arg3[%c0_4, %c0_5] : memref<8x1xf32, #tpu.memory_space<vmem>>, vector<8x1xf32>
    %5 = vector.broadcast %4 : vector<8x1xf32> to vector<8x64xf32>
    %6 = arith.addf %3, %5 : vector<8x64xf32>
    %c0_6 = arith.constant 0 : index
    %c0_7 = arith.constant 0 : index
    %7 = memref.load %arg4[%c0_6, %c0_7] : memref<1x1xf32, #tpu.memory_space<smem>>
    %cst_8 = arith.constant 0.000000e+00 : f32
    %8 = vector.broadcast %cst_8 : f32 to vector<8x64xf32>
    %9 = arith.cmpf oge, %6, %8 : vector<8x64xf32>
    %10 = vector.broadcast %7 : f32 to vector<8x64xf32>
    %11 = arith.mulf %10, %6 : vector<8x64xf32>
    %12 = arith.select %9, %6, %11 : vector<8x64xi1>, vector<8x64xf32>
    %c0_9 = arith.constant 0 : index
    %c0_10 = arith.constant 0 : index
    %c0_11 = arith.constant 0 : index
    %13 = vector.load %arg5[%c0_9, %c0_10, %c0_11] : memref<1x8x64xf32, #tpu.memory_space<vmem>>, vector<1x8x64xf32>
    %14 = vector.shape_cast %13 : vector<1x8x64xf32> to vector<8x64xf32>
    %15 = arith.addf %12, %14 : vector<8x64xf32>
    %c0_12 = arith.constant 0 : index
    %c0_13 = arith.constant 0 : index
    %c0_14 = arith.constant 0 : index
    %16 = vector.load %arg6[%c0_12, %c0_13, %c0_14] : memref<1x8x64xf32, #tpu.memory_space<vmem>>, vector<1x8x64xf32>
    %17 = vector.shape_cast %16 : vector<1x8x64xf32> to vector<8x64xf32>
    %18 = vector.shape_cast %15 : vector<8x64xf32> to vector<1x8x64xf32>
    tpu.vector_store %arg6[%c0_12, %c0_13, %c0_14], %18 {strides = array<i32>} : memref<1x8x64xf32, #tpu.memory_space<vmem>>, vector<1x8x64xf32>,
    return
  }
  func.func @transform_0(%arg0: i32) -> (i32, i32, i32) {
    %c0_i32 = arith.constant 0 : i32
    %c0_i32_0 = arith.constant 0 : i32
    %c0_i32_1 = arith.constant 0 : i32
    return %arg0, %c0_i32, %c0_i32_0 : i32, i32, i32
  }
  func.func @transform_1(%arg0: i32) -> (i32, i32) {
    %c0_i32 = arith.constant 0 : i32
    %c0_i32_0 = arith.constant 0 : i32
    %c0_i32_1 = arith.constant 0 : i32
    return %c0_i32, %c0_i32_0 : i32, i32
  }
  func.func @transform_2(%arg0: i32) -> (i32, i32) {
    %c0_i32 = arith.constant 0 : i32
    %c0_i32_0 = arith.constant 0 : i32
    %c0_i32_1 = arith.constant 0 : i32
    return %c0_i32, %c0_i32_0 : i32, i32
  }
  func.func @transform_3(%arg0: i32) -> (i32, i32) {
    %c0_i32 = arith.constant 0 : i32
    %c0_i32_0 = arith.constant 0 : i32
    %c0_i32_1 = arith.constant 0 : i32
    return %c0_i32, %c0_i32_0 : i32, i32
  }
  func.func @transform_4(%arg0: i32) -> (i32, i32, i32) {
    %c0_i32 = arith.constant 0 : i32
    %c0_i32_0 = arith.constant 0 : i32
    %c0_i32_1 = arith.constant 0 : i32
    return %arg0, %c0_i32, %c0_i32_0 : i32, i32, i32
  }
  func.func @transform_5(%arg0: i32) -> (i32, i32, i32) {
    %c0_i32 = arith.constant 0 : i32
    %c0_i32_0 = arith.constant 0 : i32
    %c0_i32_1 = arith.constant 0 : i32
    return %arg0, %c0_i32, %c0_i32_0 : i32, i32, i32
  }
}

module attributes {stable_mosaic.version = 11 : i64} {
  func.func @_conv3x3x3_kernel(%arg0: i32, %arg1: i32, %arg2: i32, %arg3: memref<1x1x8x122xf32, #tpu.memory_space<vmem>>, %arg4: memref<1x9x8x8xf32, #tpu.memory_space<vmem>>, %arg5: memref<8x1xf32, #tpu.memory_space<vmem>>, %arg6: memref<1x1xf32, #tpu.memory_space<smem>>, %arg7: memref<4x8xf32, #tpu.memory_space<vmem>>, %arg8: memref<4x1xf32, #tpu.memory_space<vmem>>, %arg9: memref<1x1x4x100xf32, #tpu.memory_space<vmem>>, %arg10: memref<8x100xf32, #tpu.memory_space<vmem>>) attributes {dimension_semantics = [#tpu.dimension_semantics<parallel>, #tpu.dimension_semantics<parallel>, #tpu.dimension_semantics<arbitrary>], iteration_bounds = array<i64: 2, 8, 3>, scalar_prefetch = 0 : i64, scratch_operands = 1 : i64, tpu.core_type = #tpu.core_type<tc>, window_params = [{transform_indices = @transform_0, window_bounds = array<i64: 1, 1, 8, 122>}, {transform_indices = @transform_1, window_bounds = array<i64: 1, 9, 8, 8>}, {pipeline_mode = #tpu.pipeline_mode<synchronous>, transform_indices = @transform_2, window_bounds = array<i64: 8, 1>}, {transform_indices = @transform_3, window_bounds = array<i64: 1, 1>}, {pipeline_mode = #tpu.pipeline_mode<synchronous>, transform_indices = @transform_4, window_bounds = array<i64: 4, 8>}, {pipeline_mode = #tpu.pipeline_mode<synchronous>, transform_indices = @transform_5, window_bounds = array<i64: 4, 1>}, {transform_indices = @transform_6, window_bounds = array<i64: 1, 1, 4, 100>}]} {
    %c0_i32 = arith.constant 0 : i32
    %0 = arith.cmpi eq, %arg2, %c0_i32 : i32
    %1 = arith.extui %0 : i1 to i32
    %c0_i32_0 = arith.constant 0 : i32
    %2 = arith.cmpi ne, %1, %c0_i32_0 : i32
    scf.if %2 {
      %cst_45 = arith.constant 0.000000e+00 : f32
      %55 = vector.broadcast %cst_45 : f32 to vector<8x100xf32>
      %c0_46 = arith.constant 0 : index
      %c0_47 = arith.constant 0 : index
      %56 = vector.load %arg10[%c0_46, %c0_47] : memref<8x100xf32, #tpu.memory_space<vmem>>, vector<8x100xf32>
      tpu.vector_store %arg10[%c0_46, %c0_47], %55 {strides = array<i32>} : memref<8x100xf32, #tpu.memory_space<vmem>>, vector<8x100xf32>,
    } else {
    }
    %c0 = arith.constant 0 : index
    %c0_1 = arith.constant 0 : index
    %c0_2 = arith.constant 0 : index
    %c0_3 = arith.constant 0 : index
    %3 = vector.load %arg3[%c0, %c0_1, %c0_2, %c0_3] : memref<1x1x8x122xf32, #tpu.memory_space<vmem>>, vector<1x1x8x122xf32>
    %4 = vector.shape_cast %3 : vector<1x1x8x122xf32> to vector<8x122xf32>
    %c0_4 = arith.constant 0 : index
    %c0_5 = arith.constant 0 : index
    %5 = vector.load %arg10[%c0_4, %c0_5] : memref<8x100xf32, #tpu.memory_space<vmem>>, vector<8x100xf32>
    %6 = vector.extract_strided_slice %4 {offsets = [0, 0], sizes = [8, 100], strides = [1, 1]} : vector<8x122xf32> to vector<8x100xf32>
    %c0_6 = arith.constant 0 : index
    %c0_7 = arith.constant 0 : index
    %c0_8 = arith.constant 0 : index
    %c0_9 = arith.constant 0 : index
    %7 = vector.load %arg4[%c0_6, %c0_7, %c0_8, %c0_9] : memref<1x9x8x8xf32, #tpu.memory_space<vmem>>, vector<1x1x8x8xf32>
    %8 = vector.shape_cast %7 : vector<1x1x8x8xf32> to vector<8x8xf32>
    %cst = arith.constant dense<0.000000e+00> : vector<8x100xf32>
    %9 = tpu.matmul %8, %6, %cst {dimension_numbers = #tpu.dot_dimension_numbers<[1], [0], [0], [1], [0, 0, 1, 1], [], []>} : vector<8x8xf32>, vector<8x100xf32>, vector<8x100xf32> -> vector<8x100xf32>
    %10 = arith.addf %5, %9 : vector<8x100xf32>
    %11 = vector.extract_strided_slice %4 {offsets = [0, 1], sizes = [8, 100], strides = [1, 1]} : vector<8x122xf32> to vector<8x100xf32>
    %c0_10 = arith.constant 0 : index
    %c1 = arith.constant 1 : index
    %c0_11 = arith.constant 0 : index
    %c0_12 = arith.constant 0 : index
    %12 = vector.load %arg4[%c0_10, %c1, %c0_11, %c0_12] : memref<1x9x8x8xf32, #tpu.memory_space<vmem>>, vector<1x1x8x8xf32>
    %13 = vector.shape_cast %12 : vector<1x1x8x8xf32> to vector<8x8xf32>
    %cst_13 = arith.constant dense<0.000000e+00> : vector<8x100xf32>
    %14 = tpu.matmul %13, %11, %cst_13 {dimension_numbers = #tpu.dot_dimension_numbers<[1], [0], [0], [1], [0, 0, 1, 1], [], []>} : vector<8x8xf32>, vector<8x100xf32>, vector<8x100xf32> -> vector<8x100xf32>
    %15 = arith.addf %10, %14 : vector<8x100xf32>
    %16 = vector.extract_strided_slice %4 {offsets = [0, 2], sizes = [8, 100], strides = [1, 1]} : vector<8x122xf32> to vector<8x100xf32>
    %c0_14 = arith.constant 0 : index
    %c2 = arith.constant 2 : index
    %c0_15 = arith.constant 0 : index
    %c0_16 = arith.constant 0 : index
    %17 = vector.load %arg4[%c0_14, %c2, %c0_15, %c0_16] : memref<1x9x8x8xf32, #tpu.memory_space<vmem>>, vector<1x1x8x8xf32>
    %18 = vector.shape_cast %17 : vector<1x1x8x8xf32> to vector<8x8xf32>
    %cst_17 = arith.constant dense<0.000000e+00> : vector<8x100xf32>
    %19 = tpu.matmul %18, %16, %cst_17 {dimension_numbers = #tpu.dot_dimension_numbers<[1], [0], [0], [1], [0, 0, 1, 1], [], []>} : vector<8x8xf32>, vector<8x100xf32>, vector<8x100xf32> -> vector<8x100xf32>
    %20 = arith.addf %15, %19 : vector<8x100xf32>
    %21 = vector.extract_strided_slice %4 {offsets = [0, 10], sizes = [8, 100], strides = [1, 1]} : vector<8x122xf32> to vector<8x100xf32>
    %c0_18 = arith.constant 0 : index
    %c3 = arith.constant 3 : index
    %c0_19 = arith.constant 0 : index
    %c0_20 = arith.constant 0 : index
    %22 = vector.load %arg4[%c0_18, %c3, %c0_19, %c0_20] : memref<1x9x8x8xf32, #tpu.memory_space<vmem>>, vector<1x1x8x8xf32>
    %23 = vector.shape_cast %22 : vector<1x1x8x8xf32> to vector<8x8xf32>
    %cst_21 = arith.constant dense<0.000000e+00> : vector<8x100xf32>
    %24 = tpu.matmul %23, %21, %cst_21 {dimension_numbers = #tpu.dot_dimension_numbers<[1], [0], [0], [1], [0, 0, 1, 1], [], []>} : vector<8x8xf32>, vector<8x100xf32>, vector<8x100xf32> -> vector<8x100xf32>
    %25 = arith.addf %20, %24 : vector<8x100xf32>
    %26 = vector.extract_strided_slice %4 {offsets = [0, 11], sizes = [8, 100], strides = [1, 1]} : vector<8x122xf32> to vector<8x100xf32>
    %c0_22 = arith.constant 0 : index
    %c4 = arith.constant 4 : index
    %c0_23 = arith.constant 0 : index
    %c0_24 = arith.constant 0 : index
    %27 = vector.load %arg4[%c0_22, %c4, %c0_23, %c0_24] : memref<1x9x8x8xf32, #tpu.memory_space<vmem>>, vector<1x1x8x8xf32>
    %28 = vector.shape_cast %27 : vector<1x1x8x8xf32> to vector<8x8xf32>
    %cst_25 = arith.constant dense<0.000000e+00> : vector<8x100xf32>
    %29 = tpu.matmul %28, %26, %cst_25 {dimension_numbers = #tpu.dot_dimension_numbers<[1], [0], [0], [1], [0, 0, 1, 1], [], []>} : vector<8x8xf32>, vector<8x100xf32>, vector<8x100xf32> -> vector<8x100xf32>
    %30 = arith.addf %25, %29 : vector<8x100xf32>
    %31 = vector.extract_strided_slice %4 {offsets = [0, 12], sizes = [8, 100], strides = [1, 1]} : vector<8x122xf32> to vector<8x100xf32>
    %c0_26 = arith.constant 0 : index
    %c5 = arith.constant 5 : index
    %c0_27 = arith.constant 0 : index
    %c0_28 = arith.constant 0 : index
    %32 = vector.load %arg4[%c0_26, %c5, %c0_27, %c0_28] : memref<1x9x8x8xf32, #tpu.memory_space<vmem>>, vector<1x1x8x8xf32>
    %33 = vector.shape_cast %32 : vector<1x1x8x8xf32> to vector<8x8xf32>
    %cst_29 = arith.constant dense<0.000000e+00> : vector<8x100xf32>
    %34 = tpu.matmul %33, %31, %cst_29 {dimension_numbers = #tpu.dot_dimension_numbers<[1], [0], [0], [1], [0, 0, 1, 1], [], []>} : vector<8x8xf32>, vector<8x100xf32>, vector<8x100xf32> -> vector<8x100xf32>
    %35 = arith.addf %30, %34 : vector<8x100xf32>
    %36 = vector.extract_strided_slice %4 {offsets = [0, 20], sizes = [8, 100], strides = [1, 1]} : vector<8x122xf32> to vector<8x100xf32>
    %c0_30 = arith.constant 0 : index
    %c6 = arith.constant 6 : index
    %c0_31 = arith.constant 0 : index
    %c0_32 = arith.constant 0 : index
    %37 = vector.load %arg4[%c0_30, %c6, %c0_31, %c0_32] : memref<1x9x8x8xf32, #tpu.memory_space<vmem>>, vector<1x1x8x8xf32>
    %38 = vector.shape_cast %37 : vector<1x1x8x8xf32> to vector<8x8xf32>
    %cst_33 = arith.constant dense<0.000000e+00> : vector<8x100xf32>
    %39 = tpu.matmul %38, %36, %cst_33 {dimension_numbers = #tpu.dot_dimension_numbers<[1], [0], [0], [1], [0, 0, 1, 1], [], []>} : vector<8x8xf32>, vector<8x100xf32>, vector<8x100xf32> -> vector<8x100xf32>
    %40 = arith.addf %35, %39 : vector<8x100xf32>
    %41 = vector.extract_strided_slice %4 {offsets = [0, 21], sizes = [8, 100], strides = [1, 1]} : vector<8x122xf32> to vector<8x100xf32>
    %c0_34 = arith.constant 0 : index
    %c7 = arith.constant 7 : index
    %c0_35 = arith.constant 0 : index
    %c0_36 = arith.constant 0 : index
    %42 = vector.load %arg4[%c0_34, %c7, %c0_35, %c0_36] : memref<1x9x8x8xf32, #tpu.memory_space<vmem>>, vector<1x1x8x8xf32>
    %43 = vector.shape_cast %42 : vector<1x1x8x8xf32> to vector<8x8xf32>
    %cst_37 = arith.constant dense<0.000000e+00> : vector<8x100xf32>
    %44 = tpu.matmul %43, %41, %cst_37 {dimension_numbers = #tpu.dot_dimension_numbers<[1], [0], [0], [1], [0, 0, 1, 1], [], []>} : vector<8x8xf32>, vector<8x100xf32>, vector<8x100xf32> -> vector<8x100xf32>
    %45 = arith.addf %40, %44 : vector<8x100xf32>
    %46 = vector.extract_strided_slice %4 {offsets = [0, 22], sizes = [8, 100], strides = [1, 1]} : vector<8x122xf32> to vector<8x100xf32>
    %c0_38 = arith.constant 0 : index
    %c8 = arith.constant 8 : index
    %c0_39 = arith.constant 0 : index
    %c0_40 = arith.constant 0 : index
    %47 = vector.load %arg4[%c0_38, %c8, %c0_39, %c0_40] : memref<1x9x8x8xf32, #tpu.memory_space<vmem>>, vector<1x1x8x8xf32>
    %48 = vector.shape_cast %47 : vector<1x1x8x8xf32> to vector<8x8xf32>
    %cst_41 = arith.constant dense<0.000000e+00> : vector<8x100xf32>
    %49 = tpu.matmul %48, %46, %cst_41 {dimension_numbers = #tpu.dot_dimension_numbers<[1], [0], [0], [1], [0, 0, 1, 1], [], []>} : vector<8x8xf32>, vector<8x100xf32>, vector<8x100xf32> -> vector<8x100xf32>
    %50 = arith.addf %45, %49 : vector<8x100xf32>
    %c0_42 = arith.constant 0 : index
    %c0_43 = arith.constant 0 : index
    %51 = vector.load %arg10[%c0_42, %c0_43] : memref<8x100xf32, #tpu.memory_space<vmem>>, vector<8x100xf32>
    tpu.vector_store %arg10[%c0_42, %c0_43], %50 {strides = array<i32>} : memref<8x100xf32, #tpu.memory_space<vmem>>, vector<8x100xf32>,
    %c2_i32 = arith.constant 2 : i32
    %52 = arith.cmpi eq, %arg2, %c2_i32 : i32
    %53 = arith.extui %52 : i1 to i32
    %c0_i32_44 = arith.constant 0 : i32
    %54 = arith.cmpi ne, %53, %c0_i32_44 : i32
    scf.if %54 {
      %c0_45 = arith.constant 0 : index
      %c0_46 = arith.constant 0 : index
      %55 = vector.load %arg10[%c0_45, %c0_46] : memref<8x100xf32, #tpu.memory_space<vmem>>, vector<8x100xf32>
      %c0_47 = arith.constant 0 : index
      %c0_48 = arith.constant 0 : index
      %56 = vector.load %arg5[%c0_47, %c0_48] : memref<8x1xf32, #tpu.memory_space<vmem>>, vector<8x1xf32>
      %57 = vector.broadcast %56 : vector<8x1xf32> to vector<8x100xf32>
      %58 = arith.addf %55, %57 : vector<8x100xf32>
      %c0_49 = arith.constant 0 : index
      %c0_50 = arith.constant 0 : index
      %59 = memref.load %arg6[%c0_49, %c0_50] : memref<1x1xf32, #tpu.memory_space<smem>>
      %cst_51 = arith.constant 0.000000e+00 : f32
      %60 = vector.broadcast %cst_51 : f32 to vector<8x100xf32>
      %61 = arith.cmpf oge, %58, %60 : vector<8x100xf32>
      %62 = vector.broadcast %59 : f32 to vector<8x100xf32>
      %63 = arith.mulf %62, %58 : vector<8x100xf32>
      %64 = arith.select %61, %58, %63 : vector<8x100xi1>, vector<8x100xf32>
      %c0_52 = arith.constant 0 : index
      %c0_53 = arith.constant 0 : index
      %65 = vector.load %arg7[%c0_52, %c0_53] : memref<4x8xf32, #tpu.memory_space<vmem>>, vector<4x8xf32>
      %cst_54 = arith.constant dense<0.000000e+00> : vector<4x100xf32>
      %66 = tpu.matmul %65, %64, %cst_54 {dimension_numbers = #tpu.dot_dimension_numbers<[1], [0], [0], [1], [0, 0, 1, 1], [], []>} : vector<4x8xf32>, vector<8x100xf32>, vector<4x100xf32> -> vector<4x100xf32>
      %c0_55 = arith.constant 0 : index
      %c0_56 = arith.constant 0 : index
      %67 = vector.load %arg8[%c0_55, %c0_56] : memref<4x1xf32, #tpu.memory_space<vmem>>, vector<4x1xf32>
      %68 = vector.broadcast %67 : vector<4x1xf32> to vector<4x100xf32>
      %69 = arith.addf %66, %68 : vector<4x100xf32>
      %c0_57 = arith.constant 0 : index
      %c0_58 = arith.constant 0 : index
      %c0_59 = arith.constant 0 : index
      %c0_60 = arith.constant 0 : index
      %70 = vector.load %arg9[%c0_57, %c0_58, %c0_59, %c0_60] : memref<1x1x4x100xf32, #tpu.memory_space<vmem>>, vector<1x1x4x100xf32>
      %71 = vector.shape_cast %70 : vector<1x1x4x100xf32> to vector<4x100xf32>
      %72 = vector.shape_cast %69 : vector<4x100xf32> to vector<1x1x4x100xf32>
      tpu.vector_store %arg9[%c0_57, %c0_58, %c0_59, %c0_60], %72 {strides = array<i32>} : memref<1x1x4x100xf32, #tpu.memory_space<vmem>>, vector<1x1x4x100xf32>,
    } else {
    }
    return
  }
  func.func @transform_0(%arg0: i32, %arg1: i32, %arg2: i32) -> (i32, i32, i32, i32) {
    %0 = arith.addi %arg1, %arg2 : i32
    %c0_i32 = arith.constant 0 : i32
    %c0_i32_0 = arith.constant 0 : i32
    %c0_i32_1 = arith.constant 0 : i32
    return %arg0, %0, %c0_i32, %c0_i32_0 : i32, i32, i32, i32
  }
  func.func @transform_1(%arg0: i32, %arg1: i32, %arg2: i32) -> (i32, i32, i32, i32) {
    %c0_i32 = arith.constant 0 : i32
    %c0_i32_0 = arith.constant 0 : i32
    %c0_i32_1 = arith.constant 0 : i32
    %c0_i32_2 = arith.constant 0 : i32
    return %arg2, %c0_i32, %c0_i32_0, %c0_i32_1 : i32, i32, i32, i32
  }
  func.func @transform_2(%arg0: i32, %arg1: i32, %arg2: i32) -> (i32, i32) {
    %c0_i32 = arith.constant 0 : i32
    %c0_i32_0 = arith.constant 0 : i32
    %c0_i32_1 = arith.constant 0 : i32
    return %c0_i32, %c0_i32_0 : i32, i32
  }
  func.func @transform_3(%arg0: i32, %arg1: i32, %arg2: i32) -> (i32, i32) {
    %c0_i32 = arith.constant 0 : i32
    %c0_i32_0 = arith.constant 0 : i32
    %c0_i32_1 = arith.constant 0 : i32
    return %c0_i32, %c0_i32_0 : i32, i32
  }
  func.func @transform_4(%arg0: i32, %arg1: i32, %arg2: i32) -> (i32, i32) {
    %c0_i32 = arith.constant 0 : i32
    %c0_i32_0 = arith.constant 0 : i32
    %c0_i32_1 = arith.constant 0 : i32
    return %c0_i32, %c0_i32_0 : i32, i32
  }
  func.func @transform_5(%arg0: i32, %arg1: i32, %arg2: i32) -> (i32, i32) {
    %c0_i32 = arith.constant 0 : i32
    %c0_i32_0 = arith.constant 0 : i32
    %c0_i32_1 = arith.constant 0 : i32
    return %c0_i32, %c0_i32_0 : i32, i32
  }
  func.func @transform_6(%arg0: i32, %arg1: i32, %arg2: i32) -> (i32, i32, i32, i32) {
    %c0_i32 = arith.constant 0 : i32
    %c0_i32_0 = arith.constant 0 : i32
    %c0_i32_1 = arith.constant 0 : i32
    return %arg0, %arg1, %c0_i32, %c0_i32_0 : i32, i32, i32, i32
  }
}

</mosaic_0001>

<llo_original>
// kernel: fcn_head_forward.4
$region0: #{fcn_head_forward.4}
  #allocation0 [shape = 'u32[]', space=smem, size = 0x4, offset = 0x4, fixed_abs, tag = 'smem constant byte address 0x4 - core index']
  #allocation1 [shape = 'u32[144,128]{1,0:T(1,128)}', space=vmem, size = 0x12000, scoped, tag = 'internal scratch']
  #allocation2 [shape = 'f32[1,1]{1,0:T(1,128)S(6)}', space=smem, size = 0x200, scoped, tag = 'scoped memory for fcn_head_forward.4']
  %s0 = inlined_call_operand.vmem [shape: f32[8,32,16], index: 0, kind: input, shape index: {}]
  %s1 = inlined_call_operand.vmem [shape: f32[16,32], index: 1, kind: input, shape index: {}]
  %s2 = inlined_call_operand.vmem [shape: f32[16,1], index: 2, kind: input, shape index: {}]
  %s3 = inlined_call_operand.<no memory space> [shape: f32[1,1], index: 3, kind: input, shape index: {}]
  %s4 = inlined_call_operand.vmem [shape: f32[8,16,16], index: 4, kind: input, shape index: {}, may-alias: {4,5}]
  %s5 = inlined_call_operand.vmem [shape: f32[8,16,16], index: 5, kind: output, shape index: {}, may-alias: {4,5}]
  %s6 = sld [smem:[#allocation0]]
  $region53: #{fcn_head_forward.4} parent=0
    _
  %s8 = ssub.s32 1, %s6
  %s9 = scalar_select 0, %s8, %s6
  %10 = sst [smem:[#allocation2]] %s3
  loop: start=0, step=1, limit=10
  $region2: #{fcn_head_forward.4} parent=0 // loop_pre_header
    _
  $region3: #{fcn_head_forward.4} parent=0 // loop_header
    %s12 = sphi 0, %s16
    %p13 = scmp.ge.s32.totalorder %s12, 10
    %s22 = sphi 0, %s24
    %s25 = sphi 0, %s22
    %s26 = sphi 0, %s25
    %s42 = sphi 0, %s26
    %s46 = sphi 0, %s46
    %s48 = sphi 0, %s46
    %s49 = sphi 0, %s48
    %s63 = sphi 0, %s49
    %s67 = sphi 0, %s67
    %s69 = sphi 0, %s67
    %s70 = sphi 0, %s69
    %s84 = sphi 0, %s70
    %s88 = sphi 0, %s88
    %s90 = sphi 0, %s88
    %s91 = sphi 0, %s90
    %s105 = sphi 0, %s91
    %s111 = sphi 0, %s113
    %s114 = sphi 0, %s111
    %s115 = sphi 0, %s114
    %s131 = sphi 0, %s115
    %s137 = sphi 0, %s139
    %s140 = sphi 0, %s137
    %s141 = sphi 0, %s140
    %s157 = sphi 0, %s141
  $region4: #{fcn_head_forward.4} parent=0 // loop_header_branch
    %15 = sbr.rel (%p13) target = $region8
  $region5: #{fcn_head_forward.4} parent=0 // loop_body
    %s17 = ssub.s32 %s12, 1
    %s18 = ssub.s32 %s12, 2
    %s19 = sadd.s32 %s12, 1
    %s20 = ssub.s32 %s12, %s19
    %p21 = scmp.eq.s32.totalorder %s20, 0
    %s23 = sadd.s32 %s22, 1
    %s24 = scalar_select %p21, %s22, %s23
    %p27 = pneg %p21
    %p28 = scmp.eq.s32.totalorder %s12, 7
    %p29 = por %p27, %p28
    %p30 = scmp.ne.s32.totalorder %s22, %s25
    %p31 = scmp.eq.s32.totalorder %s12, 0
    %p32 = por %p30, %p31
    %p33 = scmp.ne.s32.totalorder %s22, %s25
    %p34 = scmp.eq.s32.totalorder %s17, 7
    %p35 = por %p33, %p34
    %p36 = scmp.ne.s32.totalorder %s25, %s26
    %p37 = scmp.eq.s32.totalorder %s17, 0
    %p38 = por %p36, %p37
    %p39 = scmp.ne.s32.totalorder %s25, %s26
    %p40 = scmp.eq.s32.totalorder %s18, 7
    %p41 = por %p39, %p40
    %p43 = scmp.ne.s32.totalorder %s26, %s42
    %p44 = scmp.eq.s32.totalorder %s18, 0
    %p45 = por %p43, %p44
    %s47 = sadd.s32 %s46, 1
    %p50 = scmp.eq.s32.totalorder %s12, 7
    %p51 = scmp.ne.s32.totalorder %s46, %s48
    %p52 = scmp.eq.s32.totalorder %s12, 0
    %p53 = por %p51, %p52
    %p54 = scmp.ne.s32.totalorder %s46, %s48
    %p55 = scmp.eq.s32.totalorder %s17, 7
    %p56 = por %p54, %p55
    %p57 = scmp.ne.s32.totalorder %s48, %s49
    %p58 = scmp.eq.s32.totalorder %s17, 0
    %p59 = por %p57, %p58
    %p60 = scmp.ne.s32.totalorder %s48, %s49
    %p61 = scmp.eq.s32.totalorder %s18, 7
    %p62 = por %p60, %p61
    %p64 = scmp.ne.s32.totalorder %s49, %s63
    %p65 = scmp.eq.s32.totalorder %s18, 0
    %p66 = por %p64, %p65
    %s68 = sadd.s32 %s67, 1
    %p71 = scmp.eq.s32.totalorder %s12, 7
    %p72 = scmp.ne.s32.totalorder %s67, %s69
    %p73 = scmp.eq.s32.totalorder %s12, 0
    %p74 = por %p72, %p73
    %p75 = scmp.ne.s32.totalorder %s67, %s69
    %p76 = scmp.eq.s32.totalorder %s17, 7
    %p77 = por %p75, %p76
    %p78 = scmp.ne.s32.totalorder %s69, %s70
    %p79 = scmp.eq.s32.totalorder %s17, 0
    %p80 = por %p78, %p79
    %p81 = scmp.ne.s32.totalorder %s69, %s70
    %p82 = scmp.eq.s32.totalorder %s18, 7
    %p83 = por %p81, %p82
    %p85 = scmp.ne.s32.totalorder %s70, %s84
    %p86 = scmp.eq.s32.totalorder %s18, 0
    %p87 = por %p85, %p86
    %s89 = sadd.s32 %s88, 1
    %p92 = scmp.eq.s32.totalorder %s12, 7
    %p93 = scmp.ne.s32.totalorder %s88, %s90
    %p94 = scmp.eq.s32.totalorder %s12, 0
    %p95 = por %p93, %p94
    %p96 = scmp.ne.s32.totalorder %s88, %s90
    %p97 = scmp.eq.s32.totalorder %s17, 7
    %p98 = por %p96, %p97
    %p99 = scmp.ne.s32.totalorder %s90, %s91
    %p100 = scmp.eq.s32.totalorder %s17, 0
    %p101 = por %p99, %p100
    %p102 = scmp.ne.s32.totalorder %s90, %s91
    %p103 = scmp.eq.s32.totalorder %s18, 7
    %p104 = por %p102, %p103
    %p106 = scmp.ne.s32.totalorder %s91, %s105
    %p107 = scmp.eq.s32.totalorder %s18, 0
    %p108 = por %p106, %p107
    %s109 = ssub.s32 %s12, %s19
    %p110 = scmp.eq.s32.totalorder %s109, 0
    %s112 = sadd.s32 %s111, 1
    %s113 = scalar_select %p110, %s111, %s112
    %p116 = pneg %p110
    %p117 = scmp.eq.s32.totalorder %s12, 7
    %p118 = por %p116, %p117
    %p119 = scmp.ne.s32.totalorder %s111, %s114
    %p120 = scmp.eq.s32.totalorder %s12, 0
    %p121 = por %p119, %p120
    %p122 = scmp.ne.s32.totalorder %s111, %s114
    %p123 = scmp.eq.s32.totalorder %s17, 7
    %p124 = por %p122, %p123
    %p125 = scmp.ne.s32.totalorder %s114, %s115
    %p126 = scmp.eq.s32.totalorder %s17, 0
    %p127 = por %p125, %p126
    %p128 = scmp.ne.s32.totalorder %s114, %s115
    %p129 = scmp.eq.s32.totalorder %s18, 7
    %p130 = por %p128, %p129
    %p132 = scmp.ne.s32.totalorder %s115, %s131
    %p133 = scmp.eq.s32.totalorder %s18, 0
    %p134 = por %p132, %p133
    %s135 = ssub.s32 %s12, %s19
    %p136 = scmp.eq.s32.totalorder %s135, 0
    %s138 = sadd.s32 %s137, 1
    %s139 = scalar_select %p136, %s137, %s138
    %p142 = pneg %p136
    %p143 = scmp.eq.s32.totalorder %s12, 7
    %p144 = por %p142, %p143
    %p145 = scmp.ne.s32.totalorder %s137, %s140
    %p146 = scmp.eq.s32.totalorder %s12, 0
    %p147 = por %p145, %p146
    %p148 = scmp.ne.s32.totalorder %s137, %s140
    %p149 = scmp.eq.s32.totalorder %s17, 7
    %p150 = por %p148, %p149
    %p151 = scmp.ne.s32.totalorder %s140, %s141
    %p152 = scmp.eq.s32.totalorder %s17, 0
    %p153 = por %p151, %p152
    %p154 = scmp.ne.s32.totalorder %s140, %s141
    %p155 = scmp.eq.s32.totalorder %s18, 7
    %p156 = por %p154, %p155
    %p158 = scmp.ne.s32.totalorder %s141, %s157
    %p159 = scmp.eq.s32.totalorder %s18, 0
    %p160 = por %p158, %p159
    %p161 = scmp.le.s32.totalorder 1, %s12
    %p162 = scmp.lt.s32.totalorder %s12, 9
    %p163 = pnand %p161, %p162
    %p164 = pneg %p163
    // Predicated region
    $region9: #{fcn_head_forward.4} parent=5 // pred_check
      _
    $region10: #{fcn_head_forward.4} parent=5 // pred_check_branch
      %166 = sbr.rel (%p163) target = $region12
    $region11: #{fcn_head_forward.4} parent=5 // pred_region
      %s167 = ssub.s32 %s12, 1
      // Predicated region
      $region13: #{fcn_head_forward.4} parent=11 // pred_check
        %p168 = pneg %p59
      $region14: #{fcn_head_forward.4} parent=11 // pred_check_branch
        %170 = sbr.rel (%p168) target = $region16
      $region15: #{fcn_head_forward.4} parent=11 // pred_region
        _
      $region16: #{fcn_head_forward.4} parent=11 // pred_fallthru
        _
      // Predicated region
      $region17: #{fcn_head_forward.4} parent=11 // pred_check
        %p171 = pneg %p80
      $region18: #{fcn_head_forward.4} parent=11 // pred_check_branch
        %173 = sbr.rel (%p171) target = $region20
      $region19: #{fcn_head_forward.4} parent=11 // pred_region
        _
      $region20: #{fcn_head_forward.4} parent=11 // pred_fallthru
        _
      // Predicated region
      $region21: #{fcn_head_forward.4} parent=11 // pred_check
        %p174 = pneg %p101
      $region22: #{fcn_head_forward.4} parent=11 // pred_check_branch
        %176 = sbr.rel (%p174) target = $region24
      $region23: #{fcn_head_forward.4} parent=11 // pred_region
        _
      $region24: #{fcn_head_forward.4} parent=11 // pred_fallthru
        _
    $region12: #{fcn_head_forward.4} parent=5 // pred_fallthru
      _
    %p177 = scmp.lt.s32.totalorder %s12, 8
    // Predicated region
    $region25: #{fcn_head_forward.4} parent=5 // pred_check
      %p178 = pneg %p177
    $region26: #{fcn_head_forward.4} parent=5 // pred_check_branch
      %180 = sbr.rel (%p178) target = $region28
    $region27: #{fcn_head_forward.4} parent=5 // pred_region
      // Predicated region
      $region29: #{fcn_head_forward.4} parent=27 // pred_check
        %p181 = pneg %p32
      $region30: #{fcn_head_forward.4} parent=27 // pred_check_branch
        %183 = sbr.rel (%p181) target = $region32
      $region31: #{fcn_head_forward.4} parent=27 // pred_region
        %p184 = scmp.lt.s32.totalorder %s12, 7
        %s185 = scalar_select %p184, %s12, 7
        %s186 = smul.addr %s185, 4
        %s187 = smul.addr %s186, 8
        %s188 = scalar_lea.vmem %s0, %s187
      $region32: #{fcn_head_forward.4} parent=27 // pred_fallthru
        _
      // Predicated region
      $region33: #{fcn_head_forward.4} parent=27 // pred_check
        %p189 = pneg %p121
      $region34: #{fcn_head_forward.4} parent=27 // pred_check_branch
        %191 = sbr.rel (%p189) target = $region36
      $region35: #{fcn_head_forward.4} parent=27 // pred_region
        %p192 = scmp.lt.s32.totalorder %s12, 7
        %s193 = scalar_select %p192, %s12, 7
        %s194 = smul.addr %s193, 2
        %s195 = smul.addr %s194, 8
        %s196 = scalar_lea.vmem %s4, %s195
      $region36: #{fcn_head_forward.4} parent=27 // pred_fallthru
        _
    $region28: #{fcn_head_forward.4} parent=5 // pred_fallthru
      _
    %p197 = scmp.le.s32.totalorder 1, %s12
    %p198 = scmp.lt.s32.totalorder %s12, 9
    %p199 = pnand %p197, %p198
    %p200 = pneg %p199
    // Predicated region
    $region37: #{fcn_head_forward.4} parent=5 // pred_check
      _
    $region38: #{fcn_head_forward.4} parent=5 // pred_check_branch
      %202 = sbr.rel (%p199) target = $region40
    $region39: #{fcn_head_forward.4} parent=5 // pred_region
      %s203 = ssub.s32 %s12, 1
      %p204 = scmp.lt.s32.totalorder %s17, 7
      %s205 = scalar_select %p204, %s17, 7
      %s206 = smul.addr %s205, 4
      %s207 = smul.addr %s206, 8
      %s208 = scalar_lea.vmem %s0, %s207
      %p209 = pneg %p38
      %p210 = pneg %p35
      %p211 = pneg %p59
      %p212 = pneg %p56
      %p213 = pneg %p80
      %p214 = pneg %p77
      %p215 = pneg %p101
      %p216 = pneg %p98
      %p217 = scmp.lt.s32.totalorder %s17, 7
      %s218 = scalar_select %p217, %s17, 7
      %s219 = smul.addr %s218, 2
      %s220 = smul.addr %s219, 8
      %s221 = scalar_lea.vmem %s4, %s220
      %p222 = pneg %p127
      %p223 = pneg %p124
      %p224 = pneg %p153
      %p225 = pneg %p150
      %p226 = scmp.lt.s32.totalorder %s17, 7
      %s227 = scalar_select %p226, %s17, 7
      %s228 = smul.addr %s227, 2
      %s229 = smul.addr %s228, 8
      %s230 = scalar_lea.vmem %s5, %s229
      %p231 = scmp.lt.s32.totalorder %s17, 7
      %s232 = scalar_select %p231, %s17, 7
      %s233 = smul.addr %s232, 4
      %s234 = smul.addr %s233, 8
      %s235 = scalar_lea.vmem %s0, %s234
      %p236 = scmp.lt.s32.totalorder %s17, 7
      %s237 = scalar_select %p236, %s17, 7
      %s238 = smul.addr %s237, 2
      %s239 = smul.addr %s238, 8
      %s240 = scalar_lea.vmem %s4, %s239
      %p241 = scmp.lt.s32.totalorder %s17, 7
      %s242 = scalar_select %p241, %s17, 7
      %s243 = smul.addr %s242, 2
      %s244 = smul.addr %s243, 8
      %s245 = scalar_lea.vmem %s5, %s244
      %v246 = vld [vmem:[%s235] sm:$0xff]
      %v247 = vld [vmem:[%s235 + $0x8] sm:$0xff]
      %v248 = vld [vmem:[%s235 + $0x10] sm:$0xff]
      %v249 = vld [vmem:[%s235 + $0x18] sm:$0xff]
      %v250 = vld [vmem:[%s1] sm:$0xff]
      %v251 = vld [vmem:[%s1 + $0x8] sm:$0xff]
      %v252 = vld [vmem:[%s2] sm:$0xff]
      %v253 = vld [vmem:[%s2 + $0x8] sm:$0xff]
      %255 = vset.pattern.permute.xlu0 0
      %256 = vperm.xlu0 %255, %v252
      %v257 = vpop.permute.xlu0 %256
      %260 = vset.pattern.permute.xlu0 0
      %261 = vperm.xlu0 %260, %v253
      %v262 = vpop.permute.xlu0 %261
      %vm264 = vcmask 261120
      %v266 = vsel %vm264, %v250, 0
      %v269 = vsel %vm264, %v251, 0
      %271 = vmatprep.subr.mxu0 0.0
      %272 = vmatpush1.msra.mxu0 0.0
      %273 = vmatprep.subr.mxu0 0.0
      %274 = vmatpush1.msra.mxu0 0.0
      %275 = vmatprep.subr.mxu0 0.0
      %276 = vmatpush1.msra.mxu0 0.0
      %277 = vmatprep.subr.mxu0 0.0
      %278 = vmatpush1.msra.mxu0 0.0
      %279 = vmatprep.subr.mxu0 0.0
      %280 = vmatpush1.msra.mxu0 0.0
      %281 = vmatprep.subr.mxu0 0.0
      %282 = vmatpush1.msra.mxu0 0.0
      %283 = vmatprep.subr.mxu0 0.0
      %284 = vmatpush1.msra.mxu0 0.0
      %285 = vmatprep.subr.mxu0 0.0
      %286 = vmatpush1.msra.mxu0 0.0
      %287 = vmatprep.subr.mxu0 0.0
      %288 = vmatpush1.msra.mxu0 0.0
      %289 = vmatprep.subr.mxu0 0.0
      %290 = vmatpush1.msra.mxu0 0.0
      %291 = vmatprep.subr.mxu0 0.0
      %292 = vmatpush1.msra.mxu0 0.0
      %293 = vmatprep.subr.mxu0 0.0
      %294 = vmatpush1.msra.mxu0 0.0
      %295 = vmatprep.subr.mxu0 0.0
      %296 = vmatpush1.msra.mxu0 %v249
      %297 = vmatprep.subr.mxu0 0.0
      %298 = vmatpush1.msra.mxu0 %v248
      %299 = vmatprep.subr.mxu0 0.0
      %300 = vmatpush1.msra.mxu0 %v247
      %301 = vmatprep.subr.mxu0 0.0
      %302 = vmatpush1.msra.mxu0 %v246
      %303 = vmatprep.subr.mxu0 0.0
      %304 = vmatpush2.msra.mxu0 0.0
      %305 = vmatprep.subr.mxu0 0.0
      %306 = vmatpush2.msra.mxu0 0.0
      %307 = vmatprep.subr.mxu0 0.0
      %308 = vmatpush2.msra.mxu0 0.0
      %309 = vmatprep.subr.mxu0 0.0
      %310 = vmatpush2.msra.mxu0 0.0
      %311 = vmatprep.subr.mxu0 0.0
      %312 = vmatpush2.msra.mxu0 0.0
      %313 = vmatprep.subr.mxu0 0.0
      %314 = vmatpush2.msra.mxu0 0.0
      %315 = vmatprep.subr.mxu0 0.0
      %316 = vmatpush2.msra.mxu0 0.0
      %317 = vmatprep.subr.mxu0 0.0
      %318 = vmatpush2.msra.mxu0 0.0
      %319 = vmatprep.subr.mxu0 0.0
      %320 = vmatpush2.msra.mxu0 0.0
      %321 = vmatprep.subr.mxu0 0.0
      %322 = vmatpush2.msra.mxu0 0.0
      %323 = vmatprep.subr.mxu0 0.0
      %324 = vmatpush2.msra.mxu0 0.0
      %325 = vmatprep.subr.mxu0 0.0
      %326 = vmatpush2.msra.mxu0 0.0
      %327 = vmatprep.subr.mxu0 0.0
      %328 = vmatpush2.msra.mxu0 0.0
      %329 = vmatprep.subr.mxu0 0.0
      %330 = vmatpush2.msra.mxu0 0.0
      %331 = vmatprep.subr.mxu0 0.0
      %332 = vmatpush2.msra.mxu0 0.0
      %333 = vmatprep.subr.mxu0 0.0
      %334 = vmatpush2.msra.mxu0 0.0
      %335 = vmatprep.mubr.f32.mxu0 0.0
      %336 = vmatmul.mubr.f32.gmra.mxu0 %v266
      %v337 = vpop.f32.mrf.mxu0
      %v338 = vadd.f32 %v257, %v337
      %v339 = vpop.f32.mrf.mxu0
      %340 = vmatprep.mubr.f32.mxu0 0.0
      %341 = vmatmul.mubr.f32.gmra.mxu0 %v269
      %v342 = vpop.f32.mrf.mxu0
      %v343 = vadd.f32 %v262, %v342
      %v344 = vpop.f32.mrf.mxu0
      %345 = vdwg.mxu0
      %s346 = sld [smem:[#allocation2]]
      %vm347 = vcmp.ge.f32.partialorder %v338, 0.0
      %vm348 = vcmp.ge.f32.partialorder %v343, 0.0
      %v349 = vstv %s346
      %v350 = vmul.f32 %v349, %v338
      %v351 = vmul.f32 %v349, %v343
      %v352 = vsel %vm347, %v338, %v350
      %v353 = vsel %vm348, %v343, %v351
      %v354 = vld [vmem:[%s240] sm:$0xff]
      %v355 = vld [vmem:[%s240 + $0x8] sm:$0xff]
      %v356 = vadd.f32 %v352, %v354
      %v357 = vadd.f32 %v353, %v355
      %vm358 = vcmask 130048
      %359 = vst.msk [vmem:[%s245] sm:$0xff] %vm358, %v356
      %360 = vst.msk [vmem:[%s245 + $0x8] sm:$0xff] %vm358, %v357
      %p361 = scmp.lt.s32.totalorder %s17, 7
      %s362 = scalar_select %p361, %s17, 7
      %s363 = smul.addr %s362, 2
      %s364 = smul.addr %s363, 8
      %s365 = scalar_lea.vmem %s5, %s364
      // Predicated region
      $region41: #{fcn_head_forward.4} parent=39 // pred_check
        %p366 = pneg %p150
      $region42: #{fcn_head_forward.4} parent=39 // pred_check_branch
        %368 = sbr.rel (%p366) target = $region44
      $region43: #{fcn_head_forward.4} parent=39 // pred_region
        _
      $region44: #{fcn_head_forward.4} parent=39 // pred_fallthru
        _
    $region40: #{fcn_head_forward.4} parent=5 // pred_fallthru
      _
    %p369 = scmp.le.s32.totalorder 2, %s12
    // Predicated region
    $region45: #{fcn_head_forward.4} parent=5 // pred_check
      %p370 = pneg %p369
    $region46: #{fcn_head_forward.4} parent=5 // pred_check_branch
      %372 = sbr.rel (%p370) target = $region48
    $region47: #{fcn_head_forward.4} parent=5 // pred_region
      %s373 = ssub.s32 %s12, 2
      // Predicated region
      $region49: #{fcn_head_forward.4} parent=47 // pred_check
        %p374 = pneg %p156
      $region50: #{fcn_head_forward.4} parent=47 // pred_check_branch
        %376 = sbr.rel (%p374) target = $region52
      $region51: #{fcn_head_forward.4} parent=47 // pred_region
        %p377 = scmp.lt.s32.totalorder %s18, 7
        %s378 = scalar_select %p377, %s18, 7
        %s379 = smul.addr %s378, 2
        %s380 = smul.addr %s379, 8
        %s381 = scalar_lea.vmem %s5, %s380
      $region52: #{fcn_head_forward.4} parent=47 // pred_fallthru
        _
    $region48: #{fcn_head_forward.4} parent=5 // pred_fallthru
      _
  $region6: #{fcn_head_forward.4} parent=0 // loop_footer
    %s16 = sadd.s32 1, %s12
  $region7: #{fcn_head_forward.4} parent=0 // loop_footer_branch
    %11 = sbr.rel target = $region3
  $region8: #{fcn_head_forward.4} parent=0 // loop_exit
    _

// kernel: fcn_head_forward.5
$region0: #{fcn_head_forward.5}
  #allocation0 [shape = 'u32[]', space=smem, size = 0x4, offset = 0x4, fixed_abs, tag = 'smem constant byte address 0x4 - core index']
  #allocation1 [shape = 'u32[144,128]{1,0:T(1,128)}', space=vmem, size = 0x12000, scoped, tag = 'internal scratch']
  #allocation2 [shape = 'f32[16,36]{1,0:T(8,128)}', space=vmem, size = 0x2000, scoped, tag = 'scratch operand']
  #allocation3 [shape = 'f32[1,1]{1,0:T(1,128)S(6)}', space=smem, size = 0x200, scoped, tag = 'scoped memory for fcn_head_forward.5']
  %s0 = inlined_call_operand.vmem [shape: f32[2,6,16,50], index: 0, kind: input, shape index: {}]
  %s1 = inlined_call_operand.vmem [shape: f32[3,9,16,16], index: 1, kind: input, shape index: {}]
  %s2 = inlined_call_operand.vmem [shape: f32[16,1], index: 2, kind: input, shape index: {}]
  %s3 = inlined_call_operand.<no memory space> [shape: f32[1,1], index: 3, kind: input, shape index: {}]
  %s4 = inlined_call_operand.vmem [shape: f32[2,4,16,36], index: 4, kind: output, shape index: {}]
  %s5 = sld [smem:[#allocation0]]
  $region57: #{fcn_head_forward.5} parent=0
    _
  %s7 = ssub.s32 1, %s5
  %s8 = scalar_select 0, %s7, %s5
  %9 = sst [smem:[#allocation3]] %s3
  loop: start=0, step=1, limit=26
  $region2: #{fcn_head_forward.5} parent=0 // loop_pre_header
    _
  $region3: #{fcn_head_forward.5} parent=0 // loop_header
    %s11 = sphi 0, %s15
    %p12 = scmp.ge.s32.totalorder %s11, 26
    %s18 = sphi 0, %s37
    %s19 = sphi 0, %s33
    %s20 = sphi 0, %s29
    %s21 = sphi 0, %s18
    %s22 = sphi 0, %s19
    %s23 = sphi 0, %s20
    %s24 = sphi 0, %s21
    %s25 = sphi 0, %s22
    %s26 = sphi 0, %s23
    %s44 = sphi 0, %s46
    %s47 = sphi 0, %s44
    %s48 = sphi 0, %s47
    %s64 = sphi 0, %s48
    %s70 = sphi 0, %s72
    %s73 = sphi 0, %s70
    %s74 = sphi 0, %s73
    %s90 = sphi 0, %s74
    %s94 = sphi 0, %s94
    %s96 = sphi 0, %s94
    %s97 = sphi 0, %s96
    %s111 = sphi 0, %s97
    %s115 = sphi 0, %s115
    %s117 = sphi 0, %s115
    %s118 = sphi 0, %s117
    %s132 = sphi 0, %s118
    %s140 = sphi 0, %s142
    %s143 = sphi 0, %s140
    %s144 = sphi 0, %s143
    %s160 = sphi 0, %s144
  $region4: #{fcn_head_forward.5} parent=0 // loop_header_branch
    %14 = sbr.rel (%p12) target = $region8
  $region5: #{fcn_head_forward.5} parent=0 // loop_body
    %s16 = ssub.s32 %s11, 1
    %s17 = ssub.s32 %s11, 2
    %s27 = sadd.s32 1, %s20
    %p28 = scmp.ge.s32.totalorder %s27, 3
    %s29 = scalar_select %p28, 0, %s27
    %s30 = sadd.s32 1, %s19
    %s31 = scalar_select %p28, %s30, %s19
    %p32 = scmp.ge.s32.totalorder %s31, 4
    %s33 = scalar_select %p32, 0, %s31
    %s34 = sadd.s32 1, %s18
    %s35 = scalar_select %p32, %s34, %s18
    %p36 = scmp.ge.s32.totalorder %s35, 2
    %s37 = scalar_select %p36, 0, %s35
    %s38 = sadd.s32 %s19, %s20
    %s39 = sadd.s32 %s33, %s29
    %s40 = ssub.s32 %s18, %s37
    %s41 = ssub.s32 %s38, %s39
    %s42 = sor.u32 %s40, %s41
    %p43 = scmp.eq.s32.totalorder %s42, 0
    %s45 = sadd.s32 %s44, 1
    %s46 = scalar_select %p43, %s44, %s45
    %p49 = pneg %p43
    %p50 = scmp.eq.s32.totalorder %s11, 23
    %p51 = por %p49, %p50
    %p52 = scmp.ne.s32.totalorder %s44, %s47
    %p53 = scmp.eq.s32.totalorder %s11, 0
    %p54 = por %p52, %p53
    %p55 = scmp.ne.s32.totalorder %s44, %s47
    %p56 = scmp.eq.s32.totalorder %s16, 23
    %p57 = por %p55, %p56
    %p58 = scmp.ne.s32.totalorder %s47, %s48
    %p59 = scmp.eq.s32.totalorder %s16, 0
    %p60 = por %p58, %p59
    %p61 = scmp.ne.s32.totalorder %s47, %s48
    %p62 = scmp.eq.s32.totalorder %s17, 23
    %p63 = por %p61, %p62
    %p65 = scmp.ne.s32.totalorder %s48, %s64
    %p66 = scmp.eq.s32.totalorder %s17, 0
    %p67 = por %p65, %p66
    %s68 = ssub.s32 %s20, %s29
    %p69 = scmp.eq.s32.totalorder %s68, 0
    %s71 = sadd.s32 %s70, 1
    %s72 = scalar_select %p69, %s70, %s71
    %p75 = pneg %p69
    %p76 = scmp.eq.s32.totalorder %s11, 23
    %p77 = por %p75, %p76
    %p78 = scmp.ne.s32.totalorder %s70, %s73
    %p79 = scmp.eq.s32.totalorder %s11, 0
    %p80 = por %p78, %p79
    %p81 = scmp.ne.s32.totalorder %s70, %s73
    %p82 = scmp.eq.s32.totalorder %s16, 23
    %p83 = por %p81, %p82
    %p84 = scmp.ne.s32.totalorder %s73, %s74
    %p85 = scmp.eq.s32.totalorder %s16, 0
    %p86 = por %p84, %p85
    %p87 = scmp.ne.s32.totalorder %s73, %s74
    %p88 = scmp.eq.s32.totalorder %s17, 23
    %p89 = por %p87, %p88
    %p91 = scmp.ne.s32.totalorder %s74, %s90
    %p92 = scmp.eq.s32.totalorder %s17, 0
    %p93 = por %p91, %p92
    %s95 = sadd.s32 %s94, 1
    %p98 = scmp.eq.s32.totalorder %s11, 23
    %p99 = scmp.ne.s32.totalorder %s94, %s96
    %p100 = scmp.eq.s32.totalorder %s11, 0
    %p101 = por %p99, %p100
    %p102 = scmp.ne.s32.totalorder %s94, %s96
    %p103 = scmp.eq.s32.totalorder %s16, 23
    %p104 = por %p102, %p103
    %p105 = scmp.ne.s32.totalorder %s96, %s97
    %p106 = scmp.eq.s32.totalorder %s16, 0
    %p107 = por %p105, %p106
    %p108 = scmp.ne.s32.totalorder %s96, %s97
    %p109 = scmp.eq.s32.totalorder %s17, 23
    %p110 = por %p108, %p109
    %p112 = scmp.ne.s32.totalorder %s97, %s111
    %p113 = scmp.eq.s32.totalorder %s17, 0
    %p114 = por %p112, %p113
    %s116 = sadd.s32 %s115, 1
    %p119 = scmp.eq.s32.totalorder %s11, 23
    %p120 = scmp.ne.s32.totalorder %s115, %s117
    %p121 = scmp.eq.s32.totalorder %s11, 0
    %p122 = por %p120, %p121
    %p123 = scmp.ne.s32.totalorder %s115, %s117
    %p124 = scmp.eq.s32.totalorder %s16, 23
    %p125 = por %p123, %p124
    %p126 = scmp.ne.s32.totalorder %s117, %s118
    %p127 = scmp.eq.s32.totalorder %s16, 0
    %p128 = por %p126, %p127
    %p129 = scmp.ne.s32.totalorder %s117, %s118
    %p130 = scmp.eq.s32.totalorder %s17, 23
    %p131 = por %p129, %p130
    %p133 = scmp.ne.s32.totalorder %s118, %s132
    %p134 = scmp.eq.s32.totalorder %s17, 0
    %p135 = por %p133, %p134
    %s136 = ssub.s32 %s18, %s37
    %s137 = ssub.s32 %s19, %s33
    %s138 = sor.u32 %s136, %s137
    %p139 = scmp.eq.s32.totalorder %s138, 0
    %s141 = sadd.s32 %s140, 1
    %s142 = scalar_select %p139, %s140, %s141
    %p145 = pneg %p139
    %p146 = scmp.eq.s32.totalorder %s11, 23
    %p147 = por %p145, %p146
    %p148 = scmp.ne.s32.totalorder %s140, %s143
    %p149 = scmp.eq.s32.totalorder %s11, 0
    %p150 = por %p148, %p149
    %p151 = scmp.ne.s32.totalorder %s140, %s143
    %p152 = scmp.eq.s32.totalorder %s16, 23
    %p153 = por %p151, %p152
    %p154 = scmp.ne.s32.totalorder %s143, %s144
    %p155 = scmp.eq.s32.totalorder %s16, 0
    %p156 = por %p154, %p155
    %p157 = scmp.ne.s32.totalorder %s143, %s144
    %p158 = scmp.eq.s32.totalorder %s17, 23
    %p159 = por %p157, %p158
    %p161 = scmp.ne.s32.totalorder %s144, %s160
    %p162 = scmp.eq.s32.totalorder %s17, 0
    %p163 = por %p161, %p162
    %p164 = scmp.le.s32.totalorder 1, %s11
    %p165 = scmp.lt.s32.totalorder %s11, 25
    %p166 = pnand %p164, %p165
    %p167 = pneg %p166
    // Predicated region
    $region9: #{fcn_head_forward.5} parent=5 // pred_check
      _
    $region10: #{fcn_head_forward.5} parent=5 // pred_check_branch
      %169 = sbr.rel (%p166) target = $region12
    $region11: #{fcn_head_forward.5} parent=5 // pred_region
      %s170 = ssub.s32 %s11, 1
      // Predicated region
      $region13: #{fcn_head_forward.5} parent=11 // pred_check
        %p171 = pneg %p107
      $region14: #{fcn_head_forward.5} parent=11 // pred_check_branch
        %173 = sbr.rel (%p171) target = $region16
      $region15: #{fcn_head_forward.5} parent=11 // pred_region
        _
      $region16: #{fcn_head_forward.5} parent=11 // pred_fallthru
        _
      // Predicated region
      $region17: #{fcn_head_forward.5} parent=11 // pred_check
        %p174 = pneg %p128
      $region18: #{fcn_head_forward.5} parent=11 // pred_check_branch
        %176 = sbr.rel (%p174) target = $region20
      $region19: #{fcn_head_forward.5} parent=11 // pred_region
        _
      $region20: #{fcn_head_forward.5} parent=11 // pred_fallthru
        _
    $region12: #{fcn_head_forward.5} parent=5 // pred_fallthru
      _
    %p177 = scmp.lt.s32.totalorder %s11, 24
    // Predicated region
    $region21: #{fcn_head_forward.5} parent=5 // pred_check
      %p178 = pneg %p177
    $region22: #{fcn_head_forward.5} parent=5 // pred_check_branch
      %180 = sbr.rel (%p178) target = $region24
    $region23: #{fcn_head_forward.5} parent=5 // pred_region
      // Predicated region
      $region25: #{fcn_head_forward.5} parent=23 // pred_check
        %p181 = pneg %p54
      $region26: #{fcn_head_forward.5} parent=23 // pred_check_branch
        %183 = sbr.rel (%p181) target = $region28
      $region27: #{fcn_head_forward.5} parent=23 // pred_region
        %s184 = sadd.s32 %s19, %s20
        %p185 = scmp.lt.s32.totalorder %s18, 1
        %s186 = scalar_select %p185, %s18, 1
        %p187 = scmp.lt.s32.totalorder %s184, 5
        %s188 = scalar_select %p187, %s184, 5
        %s189 = smul.addr %s188, 2
        %s190 = smul.addr %s186, 12
        %s191 = sadd.s32 %s189, %s190
        %s192 = smul.addr %s191, 8
        %s193 = scalar_lea.vmem %s0, %s192
        %s194 = sadd.s32 %s19, %s20
      $region28: #{fcn_head_forward.5} parent=23 // pred_fallthru
        _
      // Predicated region
      $region29: #{fcn_head_forward.5} parent=23 // pred_check
        %p195 = pneg %p80
      $region30: #{fcn_head_forward.5} parent=23 // pred_check_branch
        %197 = sbr.rel (%p195) target = $region32
      $region31: #{fcn_head_forward.5} parent=23 // pred_region
        %p198 = scmp.lt.s32.totalorder %s20, 2
        %s199 = scalar_select %p198, %s20, 2
        %s200 = smul.addr %s199, 18
        %s201 = smul.addr %s200, 8
        %s202 = scalar_lea.vmem %s1, %s201
      $region32: #{fcn_head_forward.5} parent=23 // pred_fallthru
        _
    $region24: #{fcn_head_forward.5} parent=5 // pred_fallthru
      _
    %p203 = scmp.le.s32.totalorder 1, %s11
    %p204 = scmp.lt.s32.totalorder %s11, 25
    %p205 = pnand %p203, %p204
    %p206 = pneg %p205
    // Predicated region
    $region33: #{fcn_head_forward.5} parent=5 // pred_check
      _
    $region34: #{fcn_head_forward.5} parent=5 // pred_check_branch
      %208 = sbr.rel (%p205) target = $region36
    $region35: #{fcn_head_forward.5} parent=5 // pred_region
      %s209 = ssub.s32 %s11, 1
      %s210 = sadd.s32 %s22, %s23
      %p211 = scmp.lt.s32.totalorder %s21, 1
      %s212 = scalar_select %p211, %s21, 1
      %p213 = scmp.lt.s32.totalorder %s210, 5
      %s214 = scalar_select %p213, %s210, 5
      %s215 = smul.addr %s214, 2
      %s216 = smul.addr %s212, 12
      %s217 = sadd.s32 %s215, %s216
      %s218 = smul.addr %s217, 8
      %s219 = scalar_lea.vmem %s0, %s218
      %p220 = pneg %p60
      %p221 = pneg %p57
      %p222 = scmp.lt.s32.totalorder %s23, 2
      %s223 = scalar_select %p222, %s23, 2
      %s224 = smul.addr %s223, 18
      %s225 = smul.addr %s224, 8
      %s226 = scalar_lea.vmem %s1, %s225
      %p227 = pneg %p86
      %p228 = pneg %p83
      %p229 = pneg %p107
      %p230 = pneg %p104
      %p231 = pneg %p128
      %p232 = pneg %p125
      %p233 = pneg %p156
      %p234 = pneg %p153
      %p235 = scmp.lt.s32.totalorder %s21, 1
      %s236 = scalar_select %p235, %s21, 1
      %p237 = scmp.lt.s32.totalorder %s22, 3
      %s238 = scalar_select %p237, %s22, 3
      %s239 = smul.addr %s238, 2
      %s240 = smul.addr %s236, 8
      %s241 = sadd.s32 %s239, %s240
      %s242 = smul.addr %s241, 8
      %s243 = scalar_lea.vmem %s4, %s242
      %s244 = sadd.s32 %s22, %s23
      %p245 = scmp.lt.s32.totalorder %s21, 1
      %s246 = scalar_select %p245, %s21, 1
      %p247 = scmp.lt.s32.totalorder %s244, 5
      %s248 = scalar_select %p247, %s244, 5
      %s249 = smul.addr %s248, 2
      %s250 = smul.addr %s246, 12
      %s251 = sadd.s32 %s249, %s250
      %s252 = smul.addr %s251, 8
      %s253 = scalar_lea.vmem %s0, %s252
      %s254 = sadd.s32 %s22, %s23
      %p255 = scmp.lt.s32.totalorder %s23, 2
      %s256 = scalar_select %p255, %s23, 2
      %s257 = smul.addr %s256, 18
      %s258 = smul.addr %s257, 8
      %s259 = scalar_lea.vmem %s1, %s258
      %p260 = scmp.lt.s32.totalorder %s21, 1
      %s261 = scalar_select %p260, %s21, 1
      %p262 = scmp.lt.s32.totalorder %s22, 3
      %s263 = scalar_select %p262, %s22, 3
      %s264 = smul.addr %s263, 2
      %s265 = smul.addr %s261, 8
      %s266 = sadd.s32 %s264, %s265
      %s267 = smul.addr %s266, 8
      %s268 = scalar_lea.vmem %s4, %s267
      %p269 = scmp.eq.s32.totalorder %s23, 0
      // Predicated region
      $region37: #{fcn_head_forward.5} parent=35 // pred_check
        %p270 = pneg %p269
      $region38: #{fcn_head_forward.5} parent=35 // pred_check_branch
        %272 = sbr.rel (%p270) target = $region40
      $region39: #{fcn_head_forward.5} parent=35 // pred_region
        %vm273 = vcmask 293888
        %274 = vst.msk [vmem:[#allocation2] sm:$0xff] %vm273, 0.0
        %275 = vst.msk [vmem:[#allocation2 + $0x8] sm:$0xff] %vm273, 0.0
      $region40: #{fcn_head_forward.5} parent=35 // pred_fallthru
        _
      %v276 = vld [vmem:[%s253] sm:$0xff]
      %v277 = vld [vmem:[%s253 + $0x8] sm:$0xff]
      %v278 = vld [vmem:[#allocation2] sm:$0xff]
      %v279 = vld [vmem:[#allocation2 + $0x8] sm:$0xff]
      %v280 = vld [vmem:[%s259] sm:$0xff]
      %v281 = vld [vmem:[%s259 + $0x8] sm:$0xff]
      %vm282 = vcmask 130048
      %v284 = vsel %vm282, %v280, 0
      %v287 = vsel %vm282, %v281, 0
      %289 = vmatprep.subr.mxu0 0.0
      %290 = vmatpush1.msra.mxu0 0.0
      %291 = vmatprep.subr.mxu0 0.0
      %292 = vmatpush1.msra.mxu0 0.0
      %293 = vmatprep.subr.mxu0 0.0
      %294 = vmatpush1.msra.mxu0 0.0
      %295 = vmatprep.subr.mxu0 0.0
      %296 = vmatpush1.msra.mxu0 0.0
      %297 = vmatprep.subr.mxu0 0.0
      %298 = vmatpush1.msra.mxu0 0.0
      %299 = vmatprep.subr.mxu0 0.0
      %300 = vmatpush1.msra.mxu0 0.0
      %301 = vmatprep.subr.mxu0 0.0
      %302 = vmatpush1.msra.mxu0 0.0
      %303 = vmatprep.subr.mxu0 0.0
      %304 = vmatpush1.msra.mxu0 0.0
      %305 = vmatprep.subr.mxu0 0.0
      %306 = vmatpush1.msra.mxu0 0.0
      %307 = vmatprep.subr.mxu0 0.0
      %308 = vmatpush1.msra.mxu0 0.0
      %309 = vmatprep.subr.mxu0 0.0
      %310 = vmatpush1.msra.mxu0 0.0
      %311 = vmatprep.subr.mxu0 0.0
      %312 = vmatpush1.msra.mxu0 0.0
      %313 = vmatprep.subr.mxu0 0.0
      %314 = vmatpush1.msra.mxu0 0.0
      %315 = vmatprep.subr.mxu0 0.0
      %316 = vmatpush1.msra.mxu0 0.0
      %317 = vmatprep.subr.mxu0 0.0
      %318 = vmatpush1.msra.mxu0 %v277
      %319 = vmatprep.subr.mxu0 0.0
      %320 = vmatpush1.msra.mxu0 %v276
      %321 = vmatprep.subr.mxu0 0.0
      %322 = vmatpush2.msra.mxu0 0.0
      %323 = vmatprep.subr.mxu0 0.0
      %324 = vmatpush2.msra.mxu0 0.0
      %325 = vmatprep.subr.mxu0 0.0
      %326 = vmatpush2.msra.mxu0 0.0
      %327 = vmatprep.subr.mxu0 0.0
      %328 = vmatpush2.msra.mxu0 0.0
      %329 = vmatprep.subr.mxu0 0.0
      %330 = vmatpush2.msra.mxu0 0.0
      %331 = vmatprep.subr.mxu0 0.0
      %332 = vmatpush2.msra.mxu0 0.0
      %333 = vmatprep.subr.mxu0 0.0
      %334 = vmatpush2.msra.mxu0 0.0
      %335 = vmatprep.subr.mxu0 0.0
      %336 = vmatpush2.msra.mxu0 0.0
      %337 = vmatprep.subr.mxu0 0.0
      %338 = vmatpush2.msra.mxu0 0.0
      %339 = vmatprep.subr.mxu0 0.0
      %340 = vmatpush2.msra.mxu0 0.0
      %341 = vmatprep.subr.mxu0 0.0
      %342 = vmatpush2.msra.mxu0 0.0
      %343 = vmatprep.subr.mxu0 0.0
      %344 = vmatpush2.msra.mxu0 0.0
      %345 = vmatprep.subr.mxu0 0.0
      %346 = vmatpush2.msra.mxu0 0.0
      %347 = vmatprep.subr.mxu0 0.0
      %348 = vmatpush2.msra.mxu0 0.0
      %349 = vmatprep.subr.mxu0 0.0
      %350 = vmatpush2.msra.mxu0 0.0
      %351 = vmatprep.subr.mxu0 0.0
      %352 = vmatpush2.msra.mxu0 0.0
      %353 = vmatprep.mubr.f32.mxu0 0.0
      %354 = vmatmul.mubr.f32.gmra.mxu0 %v284
      %v355 = vpop.f32.mrf.mxu0
      %v356 = vadd.f32 0.0, %v355
      %v357 = vpop.f32.mrf.mxu0
      %358 = vmatprep.mubr.f32.mxu0 0.0
      %359 = vmatmul.mubr.f32.gmra.mxu0 %v287
      %v360 = vpop.f32.mrf.mxu0
      %v361 = vadd.f32 0.0, %v360
      %v362 = vpop.f32.mrf.mxu0
      %363 = vdwg.mxu0
      %v364 = vadd.f32 %v278, %v356
      %v365 = vadd.f32 %v279, %v361
      %s366 = scalar_lea.vmem %s259, 16
      %v367 = vld [vmem:[%s366] sm:$0xff]
      %v368 = vld [vmem:[%s366 + $0x8] sm:$0xff]
      %371 = vrot.lane.b32.xlu0 %v276, 127
      %v372 = vpop.permute.xlu0 %371
      %373 = vrot.lane.b32.xlu0 %v277, 127
      %v374 = vpop.permute.xlu0 %373
      %v378 = vsel %vm282, %v367, 0
      %v381 = vsel %vm282, %v368, 0
      %383 = vmatprep.subr.mxu0 0.0
      %384 = vmatpush1.msra.mxu0 0.0
      %385 = vmatprep.subr.mxu0 0.0
      %386 = vmatpush1.msra.mxu0 0.0
      %387 = vmatprep.subr.mxu0 0.0
      %388 = vmatpush1.msra.mxu0 0.0
      %389 = vmatprep.subr.mxu0 0.0
      %390 = vmatpush1.msra.mxu0 0.0
      %391 = vmatprep.subr.mxu0 0.0
      %392 = vmatpush1.msra.mxu0 0.0
      %393 = vmatprep.subr.mxu0 0.0
      %394 = vmatpush1.msra.mxu0 0.0
      %395 = vmatprep.subr.mxu0 0.0
      %396 = vmatpush1.msra.mxu0 0.0
      %397 = vmatprep.subr.mxu0 0.0
      %398 = vmatpush1.msra.mxu0 0.0
      %399 = vmatprep.subr.mxu0 0.0
      %400 = vmatpush1.msra.mxu0 0.0
      %401 = vmatprep.subr.mxu0 0.0
      %402 = vmatpush1.msra.mxu0 0.0
      %403 = vmatprep.subr.mxu0 0.0
      %404 = vmatpush1.msra.mxu0 0.0
      %405 = vmatprep.subr.mxu0 0.0
      %406 = vmatpush1.msra.mxu0 0.0
      %407 = vmatprep.subr.mxu0 0.0
      %408 = vmatpush1.msra.mxu0 0.0
      %409 = vmatprep.subr.mxu0 0.0
      %410 = vmatpush1.msra.mxu0 0.0
      %411 = vmatprep.subr.mxu0 0.0
      %412 = vmatpush1.msra.mxu0 %v374
      %413 = vmatprep.subr.mxu0 0.0
      %414 = vmatpush1.msra.mxu0 %v372
      %415 = vmatprep.subr.mxu0 0.0
      %416 = vmatpush2.msra.mxu0 0.0
      %417 = vmatprep.subr.mxu0 0.0
      %418 = vmatpush2.msra.mxu0 0.0
      %419 = vmatprep.subr.mxu0 0.0
      %420 = vmatpush2.msra.mxu0 0.0
      %421 = vmatprep.subr.mxu0 0.0
      %422 = vmatpush2.msra.mxu0 0.0
      %423 = vmatprep.subr.mxu0 0.0
      %424 = vmatpush2.msra.mxu0 0.0
      %425 = vmatprep.subr.mxu0 0.0
      %426 = vmatpush2.msra.mxu0 0.0
      %427 = vmatprep.subr.mxu0 0.0
      %428 = vmatpush2.msra.mxu0 0.0
      %429 = vmatprep.subr.mxu0 0.0
      %430 = vmatpush2.msra.mxu0 0.0
      %431 = vmatprep.subr.mxu0 0.0
      %432 = vmatpush2.msra.mxu0 0.0
      %433 = vmatprep.subr.mxu0 0.0
      %434 = vmatpush2.msra.mxu0 0.0
      %435 = vmatprep.subr.mxu0 0.0
      %436 = vmatpush2.msra.mxu0 0.0
      %437 = vmatprep.subr.mxu0 0.0
      %438 = vmatpush2.msra.mxu0 0.0
      %439 = vmatprep.subr.mxu0 0.0
      %440 = vmatpush2.msra.mxu0 0.0
      %441 = vmatprep.subr.mxu0 0.0
      %442 = vmatpush2.msra.mxu0 0.0
      %443 = vmatprep.subr.mxu0 0.0
      %444 = vmatpush2.msra.mxu0 0.0
      %445 = vmatprep.subr.mxu0 0.0
      %446 = vmatpush2.msra.mxu0 0.0
      %447 = vmatprep.mubr.f32.mxu0 0.0
      %448 = vmatmul.mubr.f32.gmra.mxu0 %v378
      %v449 = vpop.f32.mrf.mxu0
      %v450 = vadd.f32 0.0, %v449
      %v451 = vpop.f32.mrf.mxu0
      %452 = vmatprep.mubr.f32.mxu0 0.0
      %453 = vmatmul.mubr.f32.gmra.mxu0 %v381
      %v454 = vpop.f32.mrf.mxu0
      %v455 = vadd.f32 0.0, %v454
      %v456 = vpop.f32.mrf.mxu0
      %457 = vdwg.mxu0
      %v458 = vadd.f32 %v364, %v450
      %v459 = vadd.f32 %v365, %v455
      %s460 = scalar_lea.vmem %s259, 32
      %v461 = vld [vmem:[%s460] sm:$0xff]
      %v462 = vld [vmem:[%s460 + $0x8] sm:$0xff]
      %463 = vrot.lane.b32.xlu0 %v276, 126
      %v464 = vpop.permute.xlu0 %463
      %465 = vrot.lane.b32.xlu0 %v277, 126
      %v466 = vpop.permute.xlu0 %465
      %v470 = vsel %vm282, %v461, 0
      %v473 = vsel %vm282, %v462, 0
      %475 = vmatprep.subr.mxu0 0.0
      %476 = vmatpush1.msra.mxu0 0.0
      %477 = vmatprep.subr.mxu0 0.0
      %478 = vmatpush1.msra.mxu0 0.0
      %479 = vmatprep.subr.mxu0 0.0
      %480 = vmatpush1.msra.mxu0 0.0
      %481 = vmatprep.subr.mxu0 0.0
      %482 = vmatpush1.msra.mxu0 0.0
      %483 = vmatprep.subr.mxu0 0.0
      %484 = vmatpush1.msra.mxu0 0.0
      %485 = vmatprep.subr.mxu0 0.0
      %486 = vmatpush1.msra.mxu0 0.0
      %487 = vmatprep.subr.mxu0 0.0
      %488 = vmatpush1.msra.mxu0 0.0
      %489 = vmatprep.subr.mxu0 0.0
      %490 = vmatpush1.msra.mxu0 0.0
      %491 = vmatprep.subr.mxu0 0.0
      %492 = vmatpush1.msra.mxu0 0.0
      %493 = vmatprep.subr.mxu0 0.0
      %494 = vmatpush1.msra.mxu0 0.0
      %495 = vmatprep.subr.mxu0 0.0
      %496 = vmatpush1.msra.mxu0 0.0
      %497 = vmatprep.subr.mxu0 0.0
      %498 = vmatpush1.msra.mxu0 0.0
      %499 = vmatprep.subr.mxu0 0.0
      %500 = vmatpush1.msra.mxu0 0.0
      %501 = vmatprep.subr.mxu0 0.0
      %502 = vmatpush1.msra.mxu0 0.0
      %503 = vmatprep.subr.mxu0 0.0
      %504 = vmatpush1.msra.mxu0 %v466
      %505 = vmatprep.subr.mxu0 0.0
      %506 = vmatpush1.msra.mxu0 %v464
      %507 = vmatprep.subr.mxu0 0.0
      %508 = vmatpush2.msra.mxu0 0.0
      %509 = vmatprep.subr.mxu0 0.0
      %510 = vmatpush2.msra.mxu0 0.0
      %511 = vmatprep.subr.mxu0 0.0
      %512 = vmatpush2.msra.mxu0 0.0
      %513 = vmatprep.subr.mxu0 0.0
      %514 = vmatpush2.msra.mxu0 0.0
      %515 = vmatprep.subr.mxu0 0.0
      %516 = vmatpush2.msra.mxu0 0.0
      %517 = vmatprep.subr.mxu0 0.0
      %518 = vmatpush2.msra.mxu0 0.0
      %519 = vmatprep.subr.mxu0 0.0
      %520 = vmatpush2.msra.mxu0 0.0
      %521 = vmatprep.subr.mxu0 0.0
      %522 = vmatpush2.msra.mxu0 0.0
      %523 = vmatprep.subr.mxu0 0.0
      %524 = vmatpush2.msra.mxu0 0.0
      %525 = vmatprep.subr.mxu0 0.0
      %526 = vmatpush2.msra.mxu0 0.0
      %527 = vmatprep.subr.mxu0 0.0
      %528 = vmatpush2.msra.mxu0 0.0
      %529 = vmatprep.subr.mxu0 0.0
      %530 = vmatpush2.msra.mxu0 0.0
      %531 = vmatprep.subr.mxu0 0.0
      %532 = vmatpush2.msra.mxu0 0.0
      %533 = vmatprep.subr.mxu0 0.0
      %534 = vmatpush2.msra.mxu0 0.0
      %535 = vmatprep.subr.mxu0 0.0
      %536 = vmatpush2.msra.mxu0 0.0
      %537 = vmatprep.subr.mxu0 0.0
      %538 = vmatpush2.msra.mxu0 0.0
      %539 = vmatprep.mubr.f32.mxu0 0.0
      %540 = vmatmul.mubr.f32.gmra.mxu0 %v470
      %v541 = vpop.f32.mrf.mxu0
      %v542 = vadd.f32 0.0, %v541
      %v543 = vpop.f32.mrf.mxu0
      %544 = vmatprep.mubr.f32.mxu0 0.0
      %545 = vmatmul.mubr.f32.gmra.mxu0 %v473
      %v546 = vpop.f32.mrf.mxu0
      %v547 = vadd.f32 0.0, %v546
      %v548 = vpop.f32.mrf.mxu0
      %549 = vdwg.mxu0
      %v550 = vadd.f32 %v458, %v542
      %v551 = vadd.f32 %v459, %v547
      %s552 = scalar_lea.vmem %s259, 48
      %v553 = vld [vmem:[%s552] sm:$0xff]
      %v554 = vld [vmem:[%s552 + $0x8] sm:$0xff]
      %555 = vrot.lane.b32.xlu0 %v276, 122
      %v556 = vpop.permute.xlu0 %555
      %557 = vrot.lane.b32.xlu0 %v277, 122
      %v558 = vpop.permute.xlu0 %557
      %v562 = vsel %vm282, %v553, 0
      %v565 = vsel %vm282, %v554, 0
      %567 = vmatprep.subr.mxu0 0.0
      %568 = vmatpush1.msra.mxu0 0.0
      %569 = vmatprep.subr.mxu0 0.0
      %570 = vmatpush1.msra.mxu0 0.0
      %571 = vmatprep.subr.mxu0 0.0
      %572 = vmatpush1.msra.mxu0 0.0
      %573 = vmatprep.subr.mxu0 0.0
      %574 = vmatpush1.msra.mxu0 0.0
      %575 = vmatprep.subr.mxu0 0.0
      %576 = vmatpush1.msra.mxu0 0.0
      %577 = vmatprep.subr.mxu0 0.0
      %578 = vmatpush1.msra.mxu0 0.0
      %579 = vmatprep.subr.mxu0 0.0
      %580 = vmatpush1.msra.mxu0 0.0
      %581 = vmatprep.subr.mxu0 0.0
      %582 = vmatpush1.msra.mxu0 0.0
      %583 = vmatprep.subr.mxu0 0.0
      %584 = vmatpush1.msra.mxu0 0.0
      %585 = vmatprep.subr.mxu0 0.0
      %586 = vmatpush1.msra.mxu0 0.0
      %587 = vmatprep.subr.mxu0 0.0
      %588 = vmatpush1.msra.mxu0 0.0
      %589 = vmatprep.subr.mxu0 0.0
      %590 = vmatpush1.msra.mxu0 0.0
      %591 = vmatprep.subr.mxu0 0.0
      %592 = vmatpush1.msra.mxu0 0.0
      %593 = vmatprep.subr.mxu0 0.0
      %594 = vmatpush1.msra.mxu0 0.0
      %595 = vmatprep.subr.mxu0 0.0
      %596 = vmatpush1.msra.mxu0 %v558
      %597 = vmatprep.subr.mxu0 0.0
      %598 = vmatpush1.msra.mxu0 %v556
      %599 = vmatprep.subr.mxu0 0.0
      %600 = vmatpush2.msra.mxu0 0.0
      %601 = vmatprep.subr.mxu0 0.0
      %602 = vmatpush2.msra.mxu0 0.0
      %603 = vmatprep.subr.mxu0 0.0
      %604 = vmatpush2.msra.mxu0 0.0
      %605 = vmatprep.subr.mxu0 0.0
      %606 = vmatpush2.msra.mxu0 0.0
      %607 = vmatprep.subr.mxu0 0.0
      %608 = vmatpush2.msra.mxu0 0.0
      %609 = vmatprep.subr.mxu0 0.0
      %610 = vmatpush2.msra.mxu0 0.0
      %611 = vmatprep.subr.mxu0 0.0
      %612 = vmatpush2.msra.mxu0 0.0
      %613 = vmatprep.subr.mxu0 0.0
      %614 = vmatpush2.msra.mxu0 0.0
      %615 = vmatprep.subr.mxu0 0.0
      %616 = vmatpush2.msra.mxu0 0.0
      %617 = vmatprep.subr.mxu0 0.0
      %618 = vmatpush2.msra.mxu0 0.0
      %619 = vmatprep.subr.mxu0 0.0
      %620 = vmatpush2.msra.mxu0 0.0
      %621 = vmatprep.subr.mxu0 0.0
      %622 = vmatpush2.msra.mxu0 0.0
      %623 = vmatprep.subr.mxu0 0.0
      %624 = vmatpush2.msra.mxu0 0.0
      %625 = vmatprep.subr.mxu0 0.0
      %626 = vmatpush2.msra.mxu0 0.0
      %627 = vmatprep.subr.mxu0 0.0
      %628 = vmatpush2.msra.mxu0 0.0
      %629 = vmatprep.subr.mxu0 0.0
      %630 = vmatpush2.msra.mxu0 0.0
      %631 = vmatprep.mubr.f32.mxu0 0.0
      %632 = vmatmul.mubr.f32.gmra.mxu0 %v562
      %v633 = vpop.f32.mrf.mxu0
      %v634 = vadd.f32 0.0, %v633
      %v635 = vpop.f32.mrf.mxu0
      %636 = vmatprep.mubr.f32.mxu0 0.0
      %637 = vmatmul.mubr.f32.gmra.mxu0 %v565
      %v638 = vpop.f32.mrf.mxu0
      %v639 = vadd.f32 0.0, %v638
      %v640 = vpop.f32.mrf.mxu0
      %641 = vdwg.mxu0
      %v642 = vadd.f32 %v550, %v634
      %v643 = vadd.f32 %v551, %v639
      %s644 = scalar_lea.vmem %s259, 64
      %v645 = vld [vmem:[%s644] sm:$0xff]
      %v646 = vld [vmem:[%s644 + $0x8] sm:$0xff]
      %647 = vrot.lane.b32.xlu0 %v276, 121
      %v648 = vpop.permute.xlu0 %647
      %649 = vrot.lane.b32.xlu0 %v277, 121
      %v650 = vpop.permute.xlu0 %649
      %v654 = vsel %vm282, %v645, 0
      %v657 = vsel %vm282, %v646, 0
      %659 = vmatprep.subr.mxu0 0.0
      %660 = vmatpush1.msra.mxu0 0.0
      %661 = vmatprep.subr.mxu0 0.0
      %662 = vmatpush1.msra.mxu0 0.0
      %663 = vmatprep.subr.mxu0 0.0
      %664 = vmatpush1.msra.mxu0 0.0
      %665 = vmatprep.subr.mxu0 0.0
      %666 = vmatpush1.msra.mxu0 0.0
      %667 = vmatprep.subr.mxu0 0.0
      %668 = vmatpush1.msra.mxu0 0.0
      %669 = vmatprep.subr.mxu0 0.0
      %670 = vmatpush1.msra.mxu0 0.0
      %671 = vmatprep.subr.mxu0 0.0
      %672 = vmatpush1.msra.mxu0 0.0
      %673 = vmatprep.subr.mxu0 0.0
      %674 = vmatpush1.msra.mxu0 0.0
      %675 = vmatprep.subr.mxu0 0.0
      %676 = vmatpush1.msra.mxu0 0.0
      %677 = vmatprep.subr.mxu0 0.0
      %678 = vmatpush1.msra.mxu0 0.0
      %679 = vmatprep.subr.mxu0 0.0
      %680 = vmatpush1.msra.mxu0 0.0
      %681 = vmatprep.subr.mxu0 0.0
      %682 = vmatpush1.msra.mxu0 0.0
      %683 = vmatprep.subr.mxu0 0.0
      %684 = vmatpush1.msra.mxu0 0.0
      %685 = vmatprep.subr.mxu0 0.0
      %686 = vmatpush1.msra.mxu0 0.0
      %687 = vmatprep.subr.mxu0 0.0
      %688 = vmatpush1.msra.mxu0 %v650
      %689 = vmatprep.subr.mxu0 0.0
      %690 = vmatpush1.msra.mxu0 %v648
      %691 = vmatprep.subr.mxu0 0.0
      %692 = vmatpush2.msra.mxu0 0.0
      %693 = vmatprep.subr.mxu0 0.0
      %694 = vmatpush2.msra.mxu0 0.0
      %695 = vmatprep.subr.mxu0 0.0
      %696 = vmatpush2.msra.mxu0 0.0
      %697 = vmatprep.subr.mxu0 0.0
      %698 = vmatpush2.msra.mxu0 0.0
      %699 = vmatprep.subr.mxu0 0.0
      %700 = vmatpush2.msra.mxu0 0.0
      %701 = vmatprep.subr.mxu0 0.0
      %702 = vmatpush2.msra.mxu0 0.0
      %703 = vmatprep.subr.mxu0 0.0
      %704 = vmatpush2.msra.mxu0 0.0
      %705 = vmatprep.subr.mxu0 0.0
      %706 = vmatpush2.msra.mxu0 0.0
      %707 = vmatprep.subr.mxu0 0.0
      %708 = vmatpush2.msra.mxu0 0.0
      %709 = vmatprep.subr.mxu0 0.0
      %710 = vmatpush2.msra.mxu0 0.0
      %711 = vmatprep.subr.mxu0 0.0
      %712 = vmatpush2.msra.mxu0 0.0
      %713 = vmatprep.subr.mxu0 0.0
      %714 = vmatpush2.msra.mxu0 0.0
      %715 = vmatprep.subr.mxu0 0.0
      %716 = vmatpush2.msra.mxu0 0.0
      %717 = vmatprep.subr.mxu0 0.0
      %718 = vmatpush2.msra.mxu0 0.0
      %719 = vmatprep.subr.mxu0 0.0
      %720 = vmatpush2.msra.mxu0 0.0
      %721 = vmatprep.subr.mxu0 0.0
      %722 = vmatpush2.msra.mxu0 0.0
      %723 = vmatprep.mubr.f32.mxu0 0.0
      %724 = vmatmul.mubr.f32.gmra.mxu0 %v654
      %v725 = vpop.f32.mrf.mxu0
      %v726 = vadd.f32 0.0, %v725
      %v727 = vpop.f32.mrf.mxu0
      %728 = vmatprep.mubr.f32.mxu0 0.0
      %729 = vmatmul.mubr.f32.gmra.mxu0 %v657
      %v730 = vpop.f32.mrf.mxu0
      %v731 = vadd.f32 0.0, %v730
      %v732 = vpop.f32.mrf.mxu0
      %733 = vdwg.mxu0
      %v734 = vadd.f32 %v642, %v726
      %v735 = vadd.f32 %v643, %v731
      %s736 = scalar_lea.vmem %s259, 80
      %v737 = vld [vmem:[%s736] sm:$0xff]
      %v738 = vld [vmem:[%s736 + $0x8] sm:$0xff]
      %739 = vrot.lane.b32.xlu0 %v276, 120
      %v740 = vpop.permute.xlu0 %739
      %741 = vrot.lane.b32.xlu0 %v277, 120
      %v742 = vpop.permute.xlu0 %741
      %v746 = vsel %vm282, %v737, 0
      %v749 = vsel %vm282, %v738, 0
      %751 = vmatprep.subr.mxu0 0.0
      %752 = vmatpush1.msra.mxu0 0.0
      %753 = vmatprep.subr.mxu0 0.0
      %754 = vmatpush1.msra.mxu0 0.0
      %755 = vmatprep.subr.mxu0 0.0
      %756 = vmatpush1.msra.mxu0 0.0
      %757 = vmatprep.subr.mxu0 0.0
      %758 = vmatpush1.msra.mxu0 0.0
      %759 = vmatprep.subr.mxu0 0.0
      %760 = vmatpush1.msra.mxu0 0.0
      %761 = vmatprep.subr.mxu0 0.0
      %762 = vmatpush1.msra.mxu0 0.0
      %763 = vmatprep.subr.mxu0 0.0
      %764 = vmatpush1.msra.mxu0 0.0
      %765 = vmatprep.subr.mxu0 0.0
      %766 = vmatpush1.msra.mxu0 0.0
      %767 = vmatprep.subr.mxu0 0.0
      %768 = vmatpush1.msra.mxu0 0.0
      %769 = vmatprep.subr.mxu0 0.0
      %770 = vmatpush1.msra.mxu0 0.0
      %771 = vmatprep.subr.mxu0 0.0
      %772 = vmatpush1.msra.mxu0 0.0
      %773 = vmatprep.subr.mxu0 0.0
      %774 = vmatpush1.msra.mxu0 0.0
      %775 = vmatprep.subr.mxu0 0.0
      %776 = vmatpush1.msra.mxu0 0.0
      %777 = vmatprep.subr.mxu0 0.0
      %778 = vmatpush1.msra.mxu0 0.0
      %779 = vmatprep.subr.mxu0 0.0
      %780 = vmatpush1.msra.mxu0 %v742
      %781 = vmatprep.subr.mxu0 0.0
      %782 = vmatpush1.msra.mxu0 %v740
      %783 = vmatprep.subr.mxu0 0.0
      %784 = vmatpush2.msra.mxu0 0.0
      %785 = vmatprep.subr.mxu0 0.0
      %786 = vmatpush2.msra.mxu0 0.0
      %787 = vmatprep.subr.mxu0 0.0
      %788 = vmatpush2.msra.mxu0 0.0
      %789 = vmatprep.subr.mxu0 0.0
      %790 = vmatpush2.msra.mxu0 0.0
      %791 = vmatprep.subr.mxu0 0.0
      %792 = vmatpush2.msra.mxu0 0.0
      %793 = vmatprep.subr.mxu0 0.0
      %794 = vmatpush2.msra.mxu0 0.0
      %795 = vmatprep.subr.mxu0 0.0
      %796 = vmatpush2.msra.mxu0 0.0
      %797 = vmatprep.subr.mxu0 0.0
      %798 = vmatpush2.msra.mxu0 0.0
      %799 = vmatprep.subr.mxu0 0.0
      %800 = vmatpush2.msra.mxu0 0.0
      %801 = vmatprep.subr.mxu0 0.0
      %802 = vmatpush2.msra.mxu0 0.0
      %803 = vmatprep.subr.mxu0 0.0
      %804 = vmatpush2.msra.mxu0 0.0
      %805 = vmatprep.subr.mxu0 0.0
      %806 = vmatpush2.msra.mxu0 0.0
      %807 = vmatprep.subr.mxu0 0.0
      %808 = vmatpush2.msra.mxu0 0.0
      %809 = vmatprep.subr.mxu0 0.0
      %810 = vmatpush2.msra.mxu0 0.0
      %811 = vmatprep.subr.mxu0 0.0
      %812 = vmatpush2.msra.mxu0 0.0
      %813 = vmatprep.subr.mxu0 0.0
      %814 = vmatpush2.msra.mxu0 0.0
      %815 = vmatprep.mubr.f32.mxu0 0.0
      %816 = vmatmul.mubr.f32.gmra.mxu0 %v746
      %v817 = vpop.f32.mrf.mxu0
      %v818 = vadd.f32 0.0, %v817
      %v819 = vpop.f32.mrf.mxu0
      %820 = vmatprep.mubr.f32.mxu0 0.0
      %821 = vmatmul.mubr.f32.gmra.mxu0 %v749
      %v822 = vpop.f32.mrf.mxu0
      %v823 = vadd.f32 0.0, %v822
      %v824 = vpop.f32.mrf.mxu0
      %825 = vdwg.mxu0
      %v826 = vadd.f32 %v734, %v818
      %v827 = vadd.f32 %v735, %v823
      %s828 = scalar_lea.vmem %s259, 96
      %v829 = vld [vmem:[%s828] sm:$0xff]
      %v830 = vld [vmem:[%s828 + $0x8] sm:$0xff]
      %831 = vrot.lane.b32.xlu0 %v276, 116
      %v832 = vpop.permute.xlu0 %831
      %833 = vrot.lane.b32.xlu0 %v277, 116
      %v834 = vpop.permute.xlu0 %833
      %v838 = vsel %vm282, %v829, 0
      %v841 = vsel %vm282, %v830, 0
      %843 = vmatprep.subr.mxu0 0.0
      %844 = vmatpush1.msra.mxu0 0.0
      %845 = vmatprep.subr.mxu0 0.0
      %846 = vmatpush1.msra.mxu0 0.0
      %847 = vmatprep.subr.mxu0 0.0
      %848 = vmatpush1.msra.mxu0 0.0
      %849 = vmatprep.subr.mxu0 0.0
      %850 = vmatpush1.msra.mxu0 0.0
      %851 = vmatprep.subr.mxu0 0.0
      %852 = vmatpush1.msra.mxu0 0.0
      %853 = vmatprep.subr.mxu0 0.0
      %854 = vmatpush1.msra.mxu0 0.0
      %855 = vmatprep.subr.mxu0 0.0
      %856 = vmatpush1.msra.mxu0 0.0
      %857 = vmatprep.subr.mxu0 0.0
      %858 = vmatpush1.msra.mxu0 0.0
      %859 = vmatprep.subr.mxu0 0.0
      %860 = vmatpush1.msra.mxu0 0.0
      %861 = vmatprep.subr.mxu0 0.0
      %862 = vmatpush1.msra.mxu0 0.0
      %863 = vmatprep.subr.mxu0 0.0
      %864 = vmatpush1.msra.mxu0 0.0
      %865 = vmatprep.subr.mxu0 0.0
      %866 = vmatpush1.msra.mxu0 0.0
      %867 = vmatprep.subr.mxu0 0.0
      %868 = vmatpush1.msra.mxu0 0.0
      %869 = vmatprep.subr.mxu0 0.0
      %870 = vmatpush1.msra.mxu0 0.0
      %871 = vmatprep.subr.mxu0 0.0
      %872 = vmatpush1.msra.mxu0 %v834
      %873 = vmatprep.subr.mxu0 0.0
      %874 = vmatpush1.msra.mxu0 %v832
      %875 = vmatprep.subr.mxu0 0.0
      %876 = vmatpush2.msra.mxu0 0.0
      %877 = vmatprep.subr.mxu0 0.0
      %878 = vmatpush2.msra.mxu0 0.0
      %879 = vmatprep.subr.mxu0 0.0
      %880 = vmatpush2.msra.mxu0 0.0
      %881 = vmatprep.subr.mxu0 0.0
      %882 = vmatpush2.msra.mxu0 0.0
      %883 = vmatprep.subr.mxu0 0.0
      %884 = vmatpush2.msra.mxu0 0.0
      %885 = vmatprep.subr.mxu0 0.0
      %886 = vmatpush2.msra.mxu0 0.0
      %887 = vmatprep.subr.mxu0 0.0
      %888 = vmatpush2.msra.mxu0 0.0
      %889 = vmatprep.subr.mxu0 0.0
      %890 = vmatpush2.msra.mxu0 0.0
      %891 = vmatprep.subr.mxu0 0.0
      %892 = vmatpush2.msra.mxu0 0.0
      %893 = vmatprep.subr.mxu0 0.0
      %894 = vmatpush2.msra.mxu0 0.0
      %895 = vmatprep.subr.mxu0 0.0
      %896 = vmatpush2.msra.mxu0 0.0
      %897 = vmatprep.subr.mxu0 0.0
      %898 = vmatpush2.msra.mxu0 0.0
      %899 = vmatprep.subr.mxu0 0.0
      %900 = vmatpush2.msra.mxu0 0.0
      %901 = vmatprep.subr.mxu0 0.0
      %902 = vmatpush2.msra.mxu0 0.0
      %903 = vmatprep.subr.mxu0 0.0
      %904 = vmatpush2.msra.mxu0 0.0
      %905 = vmatprep.subr.mxu0 0.0
      %906 = vmatpush2.msra.mxu0 0.0
      %907 = vmatprep.mubr.f32.mxu0 0.0
      %908 = vmatmul.mubr.f32.gmra.mxu0 %v838
      %v909 = vpop.f32.mrf.mxu0
      %v910 = vadd.f32 0.0, %v909
      %v911 = vpop.f32.mrf.mxu0
      %912 = vmatprep.mubr.f32.mxu0 0.0
      %913 = vmatmul.mubr.f32.gmra.mxu0 %v841
      %v914 = vpop.f32.mrf.mxu0
      %v915 = vadd.f32 0.0, %v914
      %v916 = vpop.f32.mrf.mxu0
      %917 = vdwg.mxu0
      %v918 = vadd.f32 %v826, %v910
      %v919 = vadd.f32 %v827, %v915
      %s920 = scalar_lea.vmem %s259, 112
      %v921 = vld [vmem:[%s920] sm:$0xff]
      %v922 = vld [vmem:[%s920 + $0x8] sm:$0xff]
      %923 = vrot.lane.b32.xlu0 %v276, 115
      %v924 = vpop.permute.xlu0 %923
      %925 = vrot.lane.b32.xlu0 %v277, 115
      %v926 = vpop.permute.xlu0 %925
      %v930 = vsel %vm282, %v921, 0
      %v933 = vsel %vm282, %v922, 0
      %935 = vmatprep.subr.mxu0 0.0
      %936 = vmatpush1.msra.mxu0 0.0
      %937 = vmatprep.subr.mxu0 0.0
      %938 = vmatpush1.msra.mxu0 0.0
      %939 = vmatprep.subr.mxu0 0.0
      %940 = vmatpush1.msra.mxu0 0.0
      %941 = vmatprep.subr.mxu0 0.0
      %942 = vmatpush1.msra.mxu0 0.0
      %943 = vmatprep.subr.mxu0 0.0
      %944 = vmatpush1.msra.mxu0 0.0
      %945 = vmatprep.subr.mxu0 0.0
      %946 = vmatpush1.msra.mxu0 0.0
      %947 = vmatprep.subr.mxu0 0.0
      %948 = vmatpush1.msra.mxu0 0.0
      %949 = vmatprep.subr.mxu0 0.0
      %950 = vmatpush1.msra.mxu0 0.0
      %951 = vmatprep.subr.mxu0 0.0
      %952 = vmatpush1.msra.mxu0 0.0
      %953 = vmatprep.subr.mxu0 0.0
      %954 = vmatpush1.msra.mxu0 0.0
      %955 = vmatprep.subr.mxu0 0.0
      %956 = vmatpush1.msra.mxu0 0.0
      %957 = vmatprep.subr.mxu0 0.0
      %958 = vmatpush1.msra.mxu0 0.0
      %959 = vmatprep.subr.mxu0 0.0
      %960 = vmatpush1.msra.mxu0 0.0
      %961 = vmatprep.subr.mxu0 0.0
      %962 = vmatpush1.msra.mxu0 0.0
      %963 = vmatprep.subr.mxu0 0.0
      %964 = vmatpush1.msra.mxu0 %v926
      %965 = vmatprep.subr.mxu0 0.0
      %966 = vmatpush1.msra.mxu0 %v924
      %967 = vmatprep.subr.mxu0 0.0
      %968 = vmatpush2.msra.mxu0 0.0
      %969 = vmatprep.subr.mxu0 0.0
      %970 = vmatpush2.msra.mxu0 0.0
      %971 = vmatprep.subr.mxu0 0.0
      %972 = vmatpush2.msra.mxu0 0.0
      %973 = vmatprep.subr.mxu0 0.0
      %974 = vmatpush2.msra.mxu0 0.0
      %975 = vmatprep.subr.mxu0 0.0
      %976 = vmatpush2.msra.mxu0 0.0
      %977 = vmatprep.subr.mxu0 0.0
      %978 = vmatpush2.msra.mxu0 0.0
      %979 = vmatprep.subr.mxu0 0.0
      %980 = vmatpush2.msra.mxu0 0.0
      %981 = vmatprep.subr.mxu0 0.0
      %982 = vmatpush2.msra.mxu0 0.0
      %983 = vmatprep.subr.mxu0 0.0
      %984 = vmatpush2.msra.mxu0 0.0
      %985 = vmatprep.subr.mxu0 0.0
      %986 = vmatpush2.msra.mxu0 0.0
      %987 = vmatprep.subr.mxu0 0.0
      %988 = vmatpush2.msra.mxu0 0.0
      %989 = vmatprep.subr.mxu0 0.0
      %990 = vmatpush2.msra.mxu0 0.0
      %991 = vmatprep.subr.mxu0 0.0
      %992 = vmatpush2.msra.mxu0 0.0
      %993 = vmatprep.subr.mxu0 0.0
      %994 = vmatpush2.msra.mxu0 0.0
      %995 = vmatprep.subr.mxu0 0.0
      %996 = vmatpush2.msra.mxu0 0.0
      %997 = vmatprep.subr.mxu0 0.0
      %998 = vmatpush2.msra.mxu0 0.0
      %999 = vmatprep.mubr.f32.mxu0 0.0
      %1000 = vmatmul.mubr.f32.gmra.mxu0 %v930
      %v1001 = vpop.f32.mrf.mxu0
      %v1002 = vadd.f32 0.0, %v1001
      %v1003 = vpop.f32.mrf.mxu0
      %1004 = vmatprep.mubr.f32.mxu0 0.0
      %1005 = vmatmul.mubr.f32.gmra.mxu0 %v933
      %v1006 = vpop.f32.mrf.mxu0
      %v1007 = vadd.f32 0.0, %v1006
      %v1008 = vpop.f32.mrf.mxu0
      %1009 = vdwg.mxu0
      %v1010 = vadd.f32 %v918, %v1002
      %v1011 = vadd.f32 %v919, %v1007
      %s1012 = scalar_lea.vmem %s259, 128
      %v1013 = vld [vmem:[%s1012] sm:$0xff]
      %v1014 = vld [vmem:[%s1012 + $0x8] sm:$0xff]
      %1015 = vrot.lane.b32.xlu0 %v276, 114
      %v1016 = vpop.permute.xlu0 %1015
      %1017 = vrot.lane.b32.xlu0 %v277, 114
      %v1018 = vpop.permute.xlu0 %1017
      %v1022 = vsel %vm282, %v1013, 0
      %v1025 = vsel %vm282, %v1014, 0
      %1027 = vmatprep.subr.mxu0 0.0
      %1028 = vmatpush1.msra.mxu0 0.0
      %1029 = vmatprep.subr.mxu0 0.0
      %1030 = vmatpush1.msra.mxu0 0.0
      %1031 = vmatprep.subr.mxu0 0.0
      %1032 = vmatpush1.msra.mxu0 0.0
      %1033 = vmatprep.subr.mxu0 0.0
      %1034 = vmatpush1.msra.mxu0 0.0
      %1035 = vmatprep.subr.mxu0 0.0
      %1036 = vmatpush1.msra.mxu0 0.0
      %1037 = vmatprep.subr.mxu0 0.0
      %1038 = vmatpush1.msra.mxu0 0.0
      %1039 = vmatprep.subr.mxu0 0.0
      %1040 = vmatpush1.msra.mxu0 0.0
      %1041 = vmatprep.subr.mxu0 0.0
      %1042 = vmatpush1.msra.mxu0 0.0
      %1043 = vmatprep.subr.mxu0 0.0
      %1044 = vmatpush1.msra.mxu0 0.0
      %1045 = vmatprep.subr.mxu0 0.0
      %1046 = vmatpush1.msra.mxu0 0.0
      %1047 = vmatprep.subr.mxu0 0.0
      %1048 = vmatpush1.msra.mxu0 0.0
      %1049 = vmatprep.subr.mxu0 0.0
      %1050 = vmatpush1.msra.mxu0 0.0
      %1051 = vmatprep.subr.mxu0 0.0
      %1052 = vmatpush1.msra.mxu0 0.0
      %1053 = vmatprep.subr.mxu0 0.0
      %1054 = vmatpush1.msra.mxu0 0.0
      %1055 = vmatprep.subr.mxu0 0.0
      %1056 = vmatpush1.msra.mxu0 %v1018
      %1057 = vmatprep.subr.mxu0 0.0
      %1058 = vmatpush1.msra.mxu0 %v1016
      %1059 = vmatprep.subr.mxu0 0.0
      %1060 = vmatpush2.msra.mxu0 0.0
      %1061 = vmatprep.subr.mxu0 0.0
      %1062 = vmatpush2.msra.mxu0 0.0
      %1063 = vmatprep.subr.mxu0 0.0
      %1064 = vmatpush2.msra.mxu0 0.0
      %1065 = vmatprep.subr.mxu0 0.0
      %1066 = vmatpush2.msra.mxu0 0.0
      %1067 = vmatprep.subr.mxu0 0.0
      %1068 = vmatpush2.msra.mxu0 0.0
      %1069 = vmatprep.subr.mxu0 0.0
      %1070 = vmatpush2.msra.mxu0 0.0
      %1071 = vmatprep.subr.mxu0 0.0
      %1072 = vmatpush2.msra.mxu0 0.0
      %1073 = vmatprep.subr.mxu0 0.0
      %1074 = vmatpush2.msra.mxu0 0.0
      %1075 = vmatprep.subr.mxu0 0.0
      %1076 = vmatpush2.msra.mxu0 0.0
      %1077 = vmatprep.subr.mxu0 0.0
      %1078 = vmatpush2.msra.mxu0 0.0
      %1079 = vmatprep.subr.mxu0 0.0
      %1080 = vmatpush2.msra.mxu0 0.0
      %1081 = vmatprep.subr.mxu0 0.0
      %1082 = vmatpush2.msra.mxu0 0.0
      %1083 = vmatprep.subr.mxu0 0.0
      %1084 = vmatpush2.msra.mxu0 0.0
      %1085 = vmatprep.subr.mxu0 0.0
      %1086 = vmatpush2.msra.mxu0 0.0
      %1087 = vmatprep.subr.mxu0 0.0
      %1088 = vmatpush2.msra.mxu0 0.0
      %1089 = vmatprep.subr.mxu0 0.0
      %1090 = vmatpush2.msra.mxu0 0.0
      %1091 = vmatprep.mubr.f32.mxu0 0.0
      %1092 = vmatmul.mubr.f32.gmra.mxu0 %v1022
      %v1093 = vpop.f32.mrf.mxu0
      %v1094 = vadd.f32 0.0, %v1093
      %v1095 = vpop.f32.mrf.mxu0
      %1096 = vmatprep.mubr.f32.mxu0 0.0
      %1097 = vmatmul.mubr.f32.gmra.mxu0 %v1025
      %v1098 = vpop.f32.mrf.mxu0
      %v1099 = vadd.f32 0.0, %v1098
      %v1100 = vpop.f32.mrf.mxu0
      %1101 = vdwg.mxu0
      %v1102 = vadd.f32 %v1010, %v1094
      %v1103 = vadd.f32 %v1011, %v1099
      %vm1104 = vcmask 293888
      %1105 = vst.msk [vmem:[#allocation2] sm:$0xff] %vm1104, %v1102
      %1106 = vst.msk [vmem:[#allocation2 + $0x8] sm:$0xff] %vm1104, %v1103
      %p1107 = scmp.eq.s32.totalorder %s23, 2
      // Predicated region
      $region41: #{fcn_head_forward.5} parent=35 // pred_check
        %p1108 = pneg %p1107
      $region42: #{fcn_head_forward.5} parent=35 // pred_check_branch
        %1110 = sbr.rel (%p1108) target = $region44
      $region43: #{fcn_head_forward.5} parent=35 // pred_region
        %v1111 = vld [vmem:[#allocation2] sm:$0xff]
        %v1112 = vld [vmem:[#allocation2 + $0x8] sm:$0xff]
        %v1113 = vld [vmem:[%s2] sm:$0xff]
        %v1114 = vld [vmem:[%s2 + $0x8] sm:$0xff]
        %1116 = vset.pattern.permute.xlu0 0
        %1117 = vperm.xlu0 %1116, %v1113
        %v1118 = vpop.permute.xlu0 %1117
        %1121 = vset.pattern.permute.xlu0 0
        %1122 = vperm.xlu0 %1121, %v1114
        %v1123 = vpop.permute.xlu0 %1122
        %v1125 = vadd.f32 %v1111, %v1118
        %v1126 = vadd.f32 %v1112, %v1123
        %s1127 = sld [smem:[#allocation3]]
        %vm1128 = vcmp.ge.f32.partialorder %v1125, 0.0
        %vm1129 = vcmp.ge.f32.partialorder %v1126, 0.0
        %v1130 = vstv %s1127
        %v1131 = vmul.f32 %v1130, %v1125
        %v1132 = vmul.f32 %v1130, %v1126
        %v1133 = vsel %vm1128, %v1125, %v1131
        %v1134 = vsel %vm1129, %v1126, %v1132
        %1135 = vst.msk [vmem:[%s268] sm:$0xff] %vm1104, %v1133
        %1136 = vst.msk [vmem:[%s268 + $0x8] sm:$0xff] %vm1104, %v1134
      $region44: #{fcn_head_forward.5} parent=35 // pred_fallthru
        _
      %p1137 = scmp.lt.s32.totalorder %s21, 1
      %s1138 = scalar_select %p1137, %s21, 1
      %p1139 = scmp.lt.s32.totalorder %s22, 3
      %s1140 = scalar_select %p1139, %s22, 3
      %s1141 = smul.addr %s1140, 2
      %s1142 = smul.addr %s1138, 8
      %s1143 = sadd.s32 %s1141, %s1142
      %s1144 = smul.addr %s1143, 8
      %s1145 = scalar_lea.vmem %s4, %s1144
      // Predicated region
      $region45: #{fcn_head_forward.5} parent=35 // pred_check
        %p1146 = pneg %p153
      $region46: #{fcn_head_forward.5} parent=35 // pred_check_branch
        %1148 = sbr.rel (%p1146) target = $region48
      $region47: #{fcn_head_forward.5} parent=35 // pred_region
        _
      $region48: #{fcn_head_forward.5} parent=35 // pred_fallthru
        _
    $region36: #{fcn_head_forward.5} parent=5 // pred_fallthru
      _
    %p1149 = scmp.le.s32.totalorder 2, %s11
    // Predicated region
    $region49: #{fcn_head_forward.5} parent=5 // pred_check
      %p1150 = pneg %p1149
    $region50: #{fcn_head_forward.5} parent=5 // pred_check_branch
      %1152 = sbr.rel (%p1150) target = $region52
    $region51: #{fcn_head_forward.5} parent=5 // pred_region
      %s1153 = ssub.s32 %s11, 2
      // Predicated region
      $region53: #{fcn_head_forward.5} parent=51 // pred_check
        %p1154 = pneg %p159
      $region54: #{fcn_head_forward.5} parent=51 // pred_check_branch
        %1156 = sbr.rel (%p1154) target = $region56
      $region55: #{fcn_head_forward.5} parent=51 // pred_region
        %p1157 = scmp.lt.s32.totalorder %s24, 1
        %s1158 = scalar_select %p1157, %s24, 1
        %p1159 = scmp.lt.s32.totalorder %s25, 3
        %s1160 = scalar_select %p1159, %s25, 3
        %s1161 = smul.addr %s1160, 2
        %s1162 = smul.addr %s1158, 8
        %s1163 = sadd.s32 %s1161, %s1162
        %s1164 = smul.addr %s1163, 8
        %s1165 = scalar_lea.vmem %s4, %s1164
      $region56: #{fcn_head_forward.5} parent=51 // pred_fallthru
        _
    $region52: #{fcn_head_forward.5} parent=5 // pred_fallthru
      _
  $region6: #{fcn_head_forward.5} parent=0 // loop_footer
    %s15 = sadd.s32 1, %s11
  $region7: #{fcn_head_forward.5} parent=0 // loop_footer_branch
    %10 = sbr.rel target = $region3
  $region8: #{fcn_head_forward.5} parent=0 // loop_exit
    _

// kernel: fcn_head_forward.6
$region0: #{fcn_head_forward.6}
  #allocation0 [shape = 'u32[]', space=smem, size = 0x4, offset = 0x4, fixed_abs, tag = 'smem constant byte address 0x4 - core index']
  #allocation1 [shape = 'u32[144,128]{1,0:T(1,128)}', space=vmem, size = 0x12000, scoped, tag = 'internal scratch']
  #allocation2 [shape = 'f32[1,1]{1,0:T(1,128)S(6)}', space=smem, size = 0x200, scoped, tag = 'scoped memory for fcn_head_forward.6']
  %s0 = inlined_call_operand.vmem [shape: f32[16,16,64], index: 0, kind: input, shape index: {}]
  %s1 = inlined_call_operand.vmem [shape: f32[8,16], index: 1, kind: input, shape index: {}]
  %s2 = inlined_call_operand.vmem [shape: f32[8,1], index: 2, kind: input, shape index: {}]
  %s3 = inlined_call_operand.<no memory space> [shape: f32[1,1], index: 3, kind: input, shape index: {}]
  %s4 = inlined_call_operand.vmem [shape: f32[16,8,64], index: 4, kind: input, shape index: {}, may-alias: {4,5}]
  %s5 = inlined_call_operand.vmem [shape: f32[16,8,64], index: 5, kind: output, shape index: {}, may-alias: {4,5}]
  %s6 = sld [smem:[#allocation0]]
  $region53: #{fcn_head_forward.6} parent=0
    _
  %s8 = ssub.s32 1, %s6
  %s9 = scalar_select 0, %s8, %s6
  %10 = sst [smem:[#allocation2]] %s3
  loop: start=0, step=1, limit=18
  $region2: #{fcn_head_forward.6} parent=0 // loop_pre_header
    _
  $region3: #{fcn_head_forward.6} parent=0 // loop_header
    %s12 = sphi 0, %s16
    %p13 = scmp.ge.s32.totalorder %s12, 18
    %s22 = sphi 0, %s24
    %s25 = sphi 0, %s22
    %s26 = sphi 0, %s25
    %s42 = sphi 0, %s26
    %s46 = sphi 0, %s46
    %s48 = sphi 0, %s46
    %s49 = sphi 0, %s48
    %s63 = sphi 0, %s49
    %s67 = sphi 0, %s67
    %s69 = sphi 0, %s67
    %s70 = sphi 0, %s69
    %s84 = sphi 0, %s70
    %s88 = sphi 0, %s88
    %s90 = sphi 0, %s88
    %s91 = sphi 0, %s90
    %s105 = sphi 0, %s91
    %s111 = sphi 0, %s113
    %s114 = sphi 0, %s111
    %s115 = sphi 0, %s114
    %s131 = sphi 0, %s115
    %s137 = sphi 0, %s139
    %s140 = sphi 0, %s137
    %s141 = sphi 0, %s140
    %s157 = sphi 0, %s141
  $region4: #{fcn_head_forward.6} parent=0 // loop_header_branch
    %15 = sbr.rel (%p13) target = $region8
  $region5: #{fcn_head_forward.6} parent=0 // loop_body
    %s17 = ssub.s32 %s12, 1
    %s18 = ssub.s32 %s12, 2
    %s19 = sadd.s32 %s12, 1
    %s20 = ssub.s32 %s12, %s19
    %p21 = scmp.eq.s32.totalorder %s20, 0
    %s23 = sadd.s32 %s22, 1
    %s24 = scalar_select %p21, %s22, %s23
    %p27 = pneg %p21
    %p28 = scmp.eq.s32.totalorder %s12, 15
    %p29 = por %p27, %p28
    %p30 = scmp.ne.s32.totalorder %s22, %s25
    %p31 = scmp.eq.s32.totalorder %s12, 0
    %p32 = por %p30, %p31
    %p33 = scmp.ne.s32.totalorder %s22, %s25
    %p34 = scmp.eq.s32.totalorder %s17, 15
    %p35 = por %p33, %p34
    %p36 = scmp.ne.s32.totalorder %s25, %s26
    %p37 = scmp.eq.s32.totalorder %s17, 0
    %p38 = por %p36, %p37
    %p39 = scmp.ne.s32.totalorder %s25, %s26
    %p40 = scmp.eq.s32.totalorder %s18, 15
    %p41 = por %p39, %p40
    %p43 = scmp.ne.s32.totalorder %s26, %s42
    %p44 = scmp.eq.s32.totalorder %s18, 0
    %p45 = por %p43, %p44
    %s47 = sadd.s32 %s46, 1
    %p50 = scmp.eq.s32.totalorder %s12, 15
    %p51 = scmp.ne.s32.totalorder %s46, %s48
    %p52 = scmp.eq.s32.totalorder %s12, 0
    %p53 = por %p51, %p52
    %p54 = scmp.ne.s32.totalorder %s46, %s48
    %p55 = scmp.eq.s32.totalorder %s17, 15
    %p56 = por %p54, %p55
    %p57 = scmp.ne.s32.totalorder %s48, %s49
    %p58 = scmp.eq.s32.totalorder %s17, 0
    %p59 = por %p57, %p58
    %p60 = scmp.ne.s32.totalorder %s48, %s49
    %p61 = scmp.eq.s32.totalorder %s18, 15
    %p62 = por %p60, %p61
    %p64 = scmp.ne.s32.totalorder %s49, %s63
    %p65 = scmp.eq.s32.totalorder %s18, 0
    %p66 = por %p64, %p65
    %s68 = sadd.s32 %s67, 1
    %p71 = scmp.eq.s32.totalorder %s12, 15
    %p72 = scmp.ne.s32.totalorder %s67, %s69
    %p73 = scmp.eq.s32.totalorder %s12, 0
    %p74 = por %p72, %p73
    %p75 = scmp.ne.s32.totalorder %s67, %s69
    %p76 = scmp.eq.s32.totalorder %s17, 15
    %p77 = por %p75, %p76
    %p78 = scmp.ne.s32.totalorder %s69, %s70
    %p79 = scmp.eq.s32.totalorder %s17, 0
    %p80 = por %p78, %p79
    %p81 = scmp.ne.s32.totalorder %s69, %s70
    %p82 = scmp.eq.s32.totalorder %s18, 15
    %p83 = por %p81, %p82
    %p85 = scmp.ne.s32.totalorder %s70, %s84
    %p86 = scmp.eq.s32.totalorder %s18, 0
    %p87 = por %p85, %p86
    %s89 = sadd.s32 %s88, 1
    %p92 = scmp.eq.s32.totalorder %s12, 15
    %p93 = scmp.ne.s32.totalorder %s88, %s90
    %p94 = scmp.eq.s32.totalorder %s12, 0
    %p95 = por %p93, %p94
    %p96 = scmp.ne.s32.totalorder %s88, %s90
    %p97 = scmp.eq.s32.totalorder %s17, 15
    %p98 = por %p96, %p97
    %p99 = scmp.ne.s32.totalorder %s90, %s91
    %p100 = scmp.eq.s32.totalorder %s17, 0
    %p101 = por %p99, %p100
    %p102 = scmp.ne.s32.totalorder %s90, %s91
    %p103 = scmp.eq.s32.totalorder %s18, 15
    %p104 = por %p102, %p103
    %p106 = scmp.ne.s32.totalorder %s91, %s105
    %p107 = scmp.eq.s32.totalorder %s18, 0
    %p108 = por %p106, %p107
    %s109 = ssub.s32 %s12, %s19
    %p110 = scmp.eq.s32.totalorder %s109, 0
    %s112 = sadd.s32 %s111, 1
    %s113 = scalar_select %p110, %s111, %s112
    %p116 = pneg %p110
    %p117 = scmp.eq.s32.totalorder %s12, 15
    %p118 = por %p116, %p117
    %p119 = scmp.ne.s32.totalorder %s111, %s114
    %p120 = scmp.eq.s32.totalorder %s12, 0
    %p121 = por %p119, %p120
    %p122 = scmp.ne.s32.totalorder %s111, %s114
    %p123 = scmp.eq.s32.totalorder %s17, 15
    %p124 = por %p122, %p123
    %p125 = scmp.ne.s32.totalorder %s114, %s115
    %p126 = scmp.eq.s32.totalorder %s17, 0
    %p127 = por %p125, %p126
    %p128 = scmp.ne.s32.totalorder %s114, %s115
    %p129 = scmp.eq.s32.totalorder %s18, 15
    %p130 = por %p128, %p129
    %p132 = scmp.ne.s32.totalorder %s115, %s131
    %p133 = scmp.eq.s32.totalorder %s18, 0
    %p134 = por %p132, %p133
    %s135 = ssub.s32 %s12, %s19
    %p136 = scmp.eq.s32.totalorder %s135, 0
    %s138 = sadd.s32 %s137, 1
    %s139 = scalar_select %p136, %s137, %s138
    %p142 = pneg %p136
    %p143 = scmp.eq.s32.totalorder %s12, 15
    %p144 = por %p142, %p143
    %p145 = scmp.ne.s32.totalorder %s137, %s140
    %p146 = scmp.eq.s32.totalorder %s12, 0
    %p147 = por %p145, %p146
    %p148 = scmp.ne.s32.totalorder %s137, %s140
    %p149 = scmp.eq.s32.totalorder %s17, 15
    %p150 = por %p148, %p149
    %p151 = scmp.ne.s32.totalorder %s140, %s141
    %p152 = scmp.eq.s32.totalorder %s17, 0
    %p153 = por %p151, %p152
    %p154 = scmp.ne.s32.totalorder %s140, %s141
    %p155 = scmp.eq.s32.totalorder %s18, 15
    %p156 = por %p154, %p155
    %p158 = scmp.ne.s32.totalorder %s141, %s157
    %p159 = scmp.eq.s32.totalorder %s18, 0
    %p160 = por %p158, %p159
    %p161 = scmp.le.s32.totalorder 1, %s12
    %p162 = scmp.lt.s32.totalorder %s12, 17
    %p163 = pnand %p161, %p162
    %p164 = pneg %p163
    // Predicated region
    $region9: #{fcn_head_forward.6} parent=5 // pred_check
      _
    $region10: #{fcn_head_forward.6} parent=5 // pred_check_branch
      %166 = sbr.rel (%p163) target = $region12
    $region11: #{fcn_head_forward.6} parent=5 // pred_region
      %s167 = ssub.s32 %s12, 1
      // Predicated region
      $region13: #{fcn_head_forward.6} parent=11 // pred_check
        %p168 = pneg %p59
      $region14: #{fcn_head_forward.6} parent=11 // pred_check_branch
        %170 = sbr.rel (%p168) target = $region16
      $region15: #{fcn_head_forward.6} parent=11 // pred_region
        _
      $region16: #{fcn_head_forward.6} parent=11 // pred_fallthru
        _
      // Predicated region
      $region17: #{fcn_head_forward.6} parent=11 // pred_check
        %p171 = pneg %p80
      $region18: #{fcn_head_forward.6} parent=11 // pred_check_branch
        %173 = sbr.rel (%p171) target = $region20
      $region19: #{fcn_head_forward.6} parent=11 // pred_region
        _
      $region20: #{fcn_head_forward.6} parent=11 // pred_fallthru
        _
      // Predicated region
      $region21: #{fcn_head_forward.6} parent=11 // pred_check
        %p174 = pneg %p101
      $region22: #{fcn_head_forward.6} parent=11 // pred_check_branch
        %176 = sbr.rel (%p174) target = $region24
      $region23: #{fcn_head_forward.6} parent=11 // pred_region
        _
      $region24: #{fcn_head_forward.6} parent=11 // pred_fallthru
        _
    $region12: #{fcn_head_forward.6} parent=5 // pred_fallthru
      _
    %p177 = scmp.lt.s32.totalorder %s12, 16
    // Predicated region
    $region25: #{fcn_head_forward.6} parent=5 // pred_check
      %p178 = pneg %p177
    $region26: #{fcn_head_forward.6} parent=5 // pred_check_branch
      %180 = sbr.rel (%p178) target = $region28
    $region27: #{fcn_head_forward.6} parent=5 // pred_region
      // Predicated region
      $region29: #{fcn_head_forward.6} parent=27 // pred_check
        %p181 = pneg %p32
      $region30: #{fcn_head_forward.6} parent=27 // pred_check_branch
        %183 = sbr.rel (%p181) target = $region32
      $region31: #{fcn_head_forward.6} parent=27 // pred_region
        %p184 = scmp.lt.s32.totalorder %s12, 15
        %s185 = scalar_select %p184, %s12, 15
        %s186 = smul.addr %s185, 2
        %s187 = smul.addr %s186, 8
        %s188 = scalar_lea.vmem %s0, %s187
      $region32: #{fcn_head_forward.6} parent=27 // pred_fallthru
        _
      // Predicated region
      $region33: #{fcn_head_forward.6} parent=27 // pred_check
        %p189 = pneg %p121
      $region34: #{fcn_head_forward.6} parent=27 // pred_check_branch
        %191 = sbr.rel (%p189) target = $region36
      $region35: #{fcn_head_forward.6} parent=27 // pred_region
        %p192 = scmp.lt.s32.totalorder %s12, 15
        %s193 = scalar_select %p192, %s12, 15
        %s194 = smul.addr %s193, 8
        %s195 = scalar_lea.vmem %s4, %s194
      $region36: #{fcn_head_forward.6} parent=27 // pred_fallthru
        _
    $region28: #{fcn_head_forward.6} parent=5 // pred_fallthru
      _
    %p196 = scmp.le.s32.totalorder 1, %s12
    %p197 = scmp.lt.s32.totalorder %s12, 17
    %p198 = pnand %p196, %p197
    %p199 = pneg %p198
    // Predicated region
    $region37: #{fcn_head_forward.6} parent=5 // pred_check
      _
    $region38: #{fcn_head_forward.6} parent=5 // pred_check_branch
      %201 = sbr.rel (%p198) target = $region40
    $region39: #{fcn_head_forward.6} parent=5 // pred_region
      %s202 = ssub.s32 %s12, 1
      %p203 = scmp.lt.s32.totalorder %s17, 15
      %s204 = scalar_select %p203, %s17, 15
      %s205 = smul.addr %s204, 2
      %s206 = smul.addr %s205, 8
      %s207 = scalar_lea.vmem %s0, %s206
      %p208 = pneg %p38
      %p209 = pneg %p35
      %p210 = pneg %p59
      %p211 = pneg %p56
      %p212 = pneg %p80
      %p213 = pneg %p77
      %p214 = pneg %p101
      %p215 = pneg %p98
      %p216 = scmp.lt.s32.totalorder %s17, 15
      %s217 = scalar_select %p216, %s17, 15
      %s218 = smul.addr %s217, 8
      %s219 = scalar_lea.vmem %s4, %s218
      %p220 = pneg %p127
      %p221 = pneg %p124
      %p222 = pneg %p153
      %p223 = pneg %p150
      %p224 = scmp.lt.s32.totalorder %s17, 15
      %s225 = scalar_select %p224, %s17, 15
      %s226 = smul.addr %s225, 8
      %s227 = scalar_lea.vmem %s5, %s226
      %p228 = scmp.lt.s32.totalorder %s17, 15
      %s229 = scalar_select %p228, %s17, 15
      %s230 = smul.addr %s229, 2
      %s231 = smul.addr %s230, 8
      %s232 = scalar_lea.vmem %s0, %s231
      %p233 = scmp.lt.s32.totalorder %s17, 15
      %s234 = scalar_select %p233, %s17, 15
      %s235 = smul.addr %s234, 8
      %s236 = scalar_lea.vmem %s4, %s235
      %p237 = scmp.lt.s32.totalorder %s17, 15
      %s238 = scalar_select %p237, %s17, 15
      %s239 = smul.addr %s238, 8
      %s240 = scalar_lea.vmem %s5, %s239
      %v241 = vld [vmem:[%s232] sm:$0xff]
      %v242 = vld [vmem:[%s232 + $0x8] sm:$0xff]
      %v243 = vld [vmem:[%s1] sm:$0xff]
      %v244 = vld [vmem:[%s2] sm:$0xff]
      %246 = vset.pattern.permute.xlu0 0
      %247 = vperm.xlu0 %246, %v244
      %v248 = vpop.permute.xlu0 %247
      %vm250 = vcmask 130048
      %v252 = vsel %vm250, %v243, 0
      %254 = vmatprep.subr.mxu0 0.0
      %255 = vmatpush1.msra.mxu0 0.0
      %256 = vmatprep.subr.mxu0 0.0
      %257 = vmatpush1.msra.mxu0 0.0
      %258 = vmatprep.subr.mxu0 0.0
      %259 = vmatpush1.msra.mxu0 0.0
      %260 = vmatprep.subr.mxu0 0.0
      %261 = vmatpush1.msra.mxu0 0.0
      %262 = vmatprep.subr.mxu0 0.0
      %263 = vmatpush1.msra.mxu0 0.0
      %264 = vmatprep.subr.mxu0 0.0
      %265 = vmatpush1.msra.mxu0 0.0
      %266 = vmatprep.subr.mxu0 0.0
      %267 = vmatpush1.msra.mxu0 0.0
      %268 = vmatprep.subr.mxu0 0.0
      %269 = vmatpush1.msra.mxu0 0.0
      %270 = vmatprep.subr.mxu0 0.0
      %271 = vmatpush1.msra.mxu0 0.0
      %272 = vmatprep.subr.mxu0 0.0
      %273 = vmatpush1.msra.mxu0 0.0
      %274 = vmatprep.subr.mxu0 0.0
      %275 = vmatpush1.msra.mxu0 0.0
      %276 = vmatprep.subr.mxu0 0.0
      %277 = vmatpush1.msra.mxu0 0.0
      %278 = vmatprep.subr.mxu0 0.0
      %279 = vmatpush1.msra.mxu0 0.0
      %280 = vmatprep.subr.mxu0 0.0
      %281 = vmatpush1.msra.mxu0 0.0
      %282 = vmatprep.subr.mxu0 0.0
      %283 = vmatpush1.msra.mxu0 %v242
      %284 = vmatprep.subr.mxu0 0.0
      %285 = vmatpush1.msra.mxu0 %v241
      %286 = vmatprep.subr.mxu0 0.0
      %287 = vmatpush2.msra.mxu0 0.0
      %288 = vmatprep.subr.mxu0 0.0
      %289 = vmatpush2.msra.mxu0 0.0
      %290 = vmatprep.subr.mxu0 0.0
      %291 = vmatpush2.msra.mxu0 0.0
      %292 = vmatprep.subr.mxu0 0.0
      %293 = vmatpush2.msra.mxu0 0.0
      %294 = vmatprep.subr.mxu0 0.0
      %295 = vmatpush2.msra.mxu0 0.0
      %296 = vmatprep.subr.mxu0 0.0
      %297 = vmatpush2.msra.mxu0 0.0
      %298 = vmatprep.subr.mxu0 0.0
      %299 = vmatpush2.msra.mxu0 0.0
      %300 = vmatprep.subr.mxu0 0.0
      %301 = vmatpush2.msra.mxu0 0.0
      %302 = vmatprep.subr.mxu0 0.0
      %303 = vmatpush2.msra.mxu0 0.0
      %304 = vmatprep.subr.mxu0 0.0
      %305 = vmatpush2.msra.mxu0 0.0
      %306 = vmatprep.subr.mxu0 0.0
      %307 = vmatpush2.msra.mxu0 0.0
      %308 = vmatprep.subr.mxu0 0.0
      %309 = vmatpush2.msra.mxu0 0.0
      %310 = vmatprep.subr.mxu0 0.0
      %311 = vmatpush2.msra.mxu0 0.0
      %312 = vmatprep.subr.mxu0 0.0
      %313 = vmatpush2.msra.mxu0 0.0
      %314 = vmatprep.subr.mxu0 0.0
      %315 = vmatpush2.msra.mxu0 0.0
      %316 = vmatprep.subr.mxu0 0.0
      %317 = vmatpush2.msra.mxu0 0.0
      %318 = vmatprep.mubr.f32.mxu0 0.0
      %319 = vmatmul.mubr.f32.gmra.mxu0 %v252
      %v320 = vpop.f32.mrf.mxu0
      %v321 = vadd.f32 %v248, %v320
      %v322 = vpop.f32.mrf.mxu0
      %323 = vdwg.mxu0
      %s324 = sld [smem:[#allocation2]]
      %vm325 = vcmp.ge.f32.partialorder %v321, 0.0
      %v326 = vstv %s324
      %v327 = vmul.f32 %v326, %v321
      %v328 = vsel %vm325, %v321, %v327
      %v329 = vld [vmem:[%s236] sm:$0xff]
      %v330 = vadd.f32 %v328, %v329
      %vm331 = vcmask 523264
      %332 = vst.msk [vmem:[%s240] sm:$0xff] %vm331, %v330
      %p333 = scmp.lt.s32.totalorder %s17, 15
      %s334 = scalar_select %p333, %s17, 15
      %s335 = smul.addr %s334, 8
      %s336 = scalar_lea.vmem %s5, %s335
      // Predicated region
      $region41: #{fcn_head_forward.6} parent=39 // pred_check
        %p337 = pneg %p150
      $region42: #{fcn_head_forward.6} parent=39 // pred_check_branch
        %339 = sbr.rel (%p337) target = $region44
      $region43: #{fcn_head_forward.6} parent=39 // pred_region
        _
      $region44: #{fcn_head_forward.6} parent=39 // pred_fallthru
        _
    $region40: #{fcn_head_forward.6} parent=5 // pred_fallthru
      _
    %p340 = scmp.le.s32.totalorder 2, %s12
    // Predicated region
    $region45: #{fcn_head_forward.6} parent=5 // pred_check
      %p341 = pneg %p340
    $region46: #{fcn_head_forward.6} parent=5 // pred_check_branch
      %343 = sbr.rel (%p341) target = $region48
    $region47: #{fcn_head_forward.6} parent=5 // pred_region
      %s344 = ssub.s32 %s12, 2
      // Predicated region
      $region49: #{fcn_head_forward.6} parent=47 // pred_check
        %p345 = pneg %p156
      $region50: #{fcn_head_forward.6} parent=47 // pred_check_branch
        %347 = sbr.rel (%p345) target = $region52
      $region51: #{fcn_head_forward.6} parent=47 // pred_region
        %p348 = scmp.lt.s32.totalorder %s18, 15
        %s349 = scalar_select %p348, %s18, 15
        %s350 = smul.addr %s349, 8
        %s351 = scalar_lea.vmem %s5, %s350
      $region52: #{fcn_head_forward.6} parent=47 // pred_fallthru
        _
    $region48: #{fcn_head_forward.6} parent=5 // pred_fallthru
      _
  $region6: #{fcn_head_forward.6} parent=0 // loop_footer
    %s16 = sadd.s32 1, %s12
  $region7: #{fcn_head_forward.6} parent=0 // loop_footer_branch
    %11 = sbr.rel target = $region3
  $region8: #{fcn_head_forward.6} parent=0 // loop_exit
    _

// kernel: fcn_head_forward.7
$region0: #{fcn_head_forward.7}
  #allocation0 [shape = 'u32[]', space=smem, size = 0x4, offset = 0x4, fixed_abs, tag = 'smem constant byte address 0x4 - core index']
  #allocation1 [shape = 'u32[144,128]{1,0:T(1,128)}', space=vmem, size = 0x12000, scoped, tag = 'internal scratch']
  #allocation2 [shape = 'f32[8,100]{1,0:T(8,128)}', space=vmem, size = 0x1000, scoped, tag = 'scratch operand']
  #allocation3 [shape = 'f32[1,1]{1,0:T(1,128)S(6)}', space=smem, size = 0x200, scoped, tag = 'scoped memory for fcn_head_forward.7']
  %s0 = inlined_call_operand.vmem [shape: f32[2,10,8,122], index: 0, kind: input, shape index: {}]
  %s1 = inlined_call_operand.vmem [shape: f32[3,9,8,8], index: 1, kind: input, shape index: {}]
  %s2 = inlined_call_operand.vmem [shape: f32[8,1], index: 2, kind: input, shape index: {}]
  %s3 = inlined_call_operand.<no memory space> [shape: f32[1,1], index: 3, kind: input, shape index: {}]
  %s4 = inlined_call_operand.vmem [shape: f32[4,8], index: 4, kind: input, shape index: {}]
  %s5 = inlined_call_operand.vmem [shape: f32[4,1], index: 5, kind: input, shape index: {}]
  %s6 = inlined_call_operand.vmem [shape: f32[2,8,4,100], index: 6, kind: output, shape index: {}]
  %s7 = sld [smem:[#allocation0]]
  $region65: #{fcn_head_forward.7} parent=0
    _
  %s9 = ssub.s32 1, %s7
  %s10 = scalar_select 0, %s9, %s7
  %11 = sst [smem:[#allocation3]] %s3
  loop: start=0, step=1, limit=50
  $region2: #{fcn_head_forward.7} parent=0 // loop_pre_header
    _
  $region3: #{fcn_head_forward.7} parent=0 // loop_header
    %s13 = sphi 0, %s17
    %p14 = scmp.ge.s32.totalorder %s13, 50
    %s20 = sphi 0, %s39
    %s21 = sphi 0, %s35
    %s22 = sphi 0, %s31
    %s23 = sphi 0, %s20
    %s24 = sphi 0, %s21
    %s25 = sphi 0, %s22
    %s26 = sphi 0, %s23
    %s27 = sphi 0, %s24
    %s28 = sphi 0, %s25
    %s46 = sphi 0, %s48
    %s49 = sphi 0, %s46
    %s50 = sphi 0, %s49
    %s66 = sphi 0, %s50
    %s72 = sphi 0, %s74
    %s75 = sphi 0, %s72
    %s76 = sphi 0, %s75
    %s92 = sphi 0, %s76
    %s96 = sphi 0, %s96
    %s98 = sphi 0, %s96
    %s99 = sphi 0, %s98
    %s113 = sphi 0, %s99
    %s117 = sphi 0, %s117
    %s119 = sphi 0, %s117
    %s120 = sphi 0, %s119
    %s134 = sphi 0, %s120
    %s138 = sphi 0, %s138
    %s140 = sphi 0, %s138
    %s141 = sphi 0, %s140
    %s155 = sphi 0, %s141
    %s159 = sphi 0, %s159
    %s161 = sphi 0, %s159
    %s162 = sphi 0, %s161
    %s176 = sphi 0, %s162
    %s184 = sphi 0, %s186
    %s187 = sphi 0, %s184
    %s188 = sphi 0, %s187
    %s204 = sphi 0, %s188
  $region4: #{fcn_head_forward.7} parent=0 // loop_header_branch
    %16 = sbr.rel (%p14) target = $region8
  $region5: #{fcn_head_forward.7} parent=0 // loop_body
    %s18 = ssub.s32 %s13, 1
    %s19 = ssub.s32 %s13, 2
    %s29 = sadd.s32 1, %s22
    %p30 = scmp.ge.s32.totalorder %s29, 3
    %s31 = scalar_select %p30, 0, %s29
    %s32 = sadd.s32 1, %s21
    %s33 = scalar_select %p30, %s32, %s21
    %p34 = scmp.ge.s32.totalorder %s33, 8
    %s35 = scalar_select %p34, 0, %s33
    %s36 = sadd.s32 1, %s20
    %s37 = scalar_select %p34, %s36, %s20
    %p38 = scmp.ge.s32.totalorder %s37, 2
    %s39 = scalar_select %p38, 0, %s37
    %s40 = sadd.s32 %s21, %s22
    %s41 = sadd.s32 %s35, %s31
    %s42 = ssub.s32 %s20, %s39
    %s43 = ssub.s32 %s40, %s41
    %s44 = sor.u32 %s42, %s43
    %p45 = scmp.eq.s32.totalorder %s44, 0
    %s47 = sadd.s32 %s46, 1
    %s48 = scalar_select %p45, %s46, %s47
    %p51 = pneg %p45
    %p52 = scmp.eq.s32.totalorder %s13, 47
    %p53 = por %p51, %p52
    %p54 = scmp.ne.s32.totalorder %s46, %s49
    %p55 = scmp.eq.s32.totalorder %s13, 0
    %p56 = por %p54, %p55
    %p57 = scmp.ne.s32.totalorder %s46, %s49
    %p58 = scmp.eq.s32.totalorder %s18, 47
    %p59 = por %p57, %p58
    %p60 = scmp.ne.s32.totalorder %s49, %s50
    %p61 = scmp.eq.s32.totalorder %s18, 0
    %p62 = por %p60, %p61
    %p63 = scmp.ne.s32.totalorder %s49, %s50
    %p64 = scmp.eq.s32.totalorder %s19, 47
    %p65 = por %p63, %p64
    %p67 = scmp.ne.s32.totalorder %s50, %s66
    %p68 = scmp.eq.s32.totalorder %s19, 0
    %p69 = por %p67, %p68
    %s70 = ssub.s32 %s22, %s31
    %p71 = scmp.eq.s32.totalorder %s70, 0
    %s73 = sadd.s32 %s72, 1
    %s74 = scalar_select %p71, %s72, %s73
    %p77 = pneg %p71
    %p78 = scmp.eq.s32.totalorder %s13, 47
    %p79 = por %p77, %p78
    %p80 = scmp.ne.s32.totalorder %s72, %s75
    %p81 = scmp.eq.s32.totalorder %s13, 0
    %p82 = por %p80, %p81
    %p83 = scmp.ne.s32.totalorder %s72, %s75
    %p84 = scmp.eq.s32.totalorder %s18, 47
    %p85 = por %p83, %p84
    %p86 = scmp.ne.s32.totalorder %s75, %s76
    %p87 = scmp.eq.s32.totalorder %s18, 0
    %p88 = por %p86, %p87
    %p89 = scmp.ne.s32.totalorder %s75, %s76
    %p90 = scmp.eq.s32.totalorder %s19, 47
    %p91 = por %p89, %p90
    %p93 = scmp.ne.s32.totalorder %s76, %s92
    %p94 = scmp.eq.s32.totalorder %s19, 0
    %p95 = por %p93, %p94
    %s97 = sadd.s32 %s96, 1
    %p100 = scmp.eq.s32.totalorder %s13, 47
    %p101 = scmp.ne.s32.totalorder %s96, %s98
    %p102 = scmp.eq.s32.totalorder %s13, 0
    %p103 = por %p101, %p102
    %p104 = scmp.ne.s32.totalorder %s96, %s98
    %p105 = scmp.eq.s32.totalorder %s18, 47
    %p106 = por %p104, %p105
    %p107 = scmp.ne.s32.totalorder %s98, %s99
    %p108 = scmp.eq.s32.totalorder %s18, 0
    %p109 = por %p107, %p108
    %p110 = scmp.ne.s32.totalorder %s98, %s99
    %p111 = scmp.eq.s32.totalorder %s19, 47
    %p112 = por %p110, %p111
    %p114 = scmp.ne.s32.totalorder %s99, %s113
    %p115 = scmp.eq.s32.totalorder %s19, 0
    %p116 = por %p114, %p115
    %s118 = sadd.s32 %s117, 1
    %p121 = scmp.eq.s32.totalorder %s13, 47
    %p122 = scmp.ne.s32.totalorder %s117, %s119
    %p123 = scmp.eq.s32.totalorder %s13, 0
    %p124 = por %p122, %p123
    %p125 = scmp.ne.s32.totalorder %s117, %s119
    %p126 = scmp.eq.s32.totalorder %s18, 47
    %p127 = por %p125, %p126
    %p128 = scmp.ne.s32.totalorder %s119, %s120
    %p129 = scmp.eq.s32.totalorder %s18, 0
    %p130 = por %p128, %p129
    %p131 = scmp.ne.s32.totalorder %s119, %s120
    %p132 = scmp.eq.s32.totalorder %s19, 47
    %p133 = por %p131, %p132
    %p135 = scmp.ne.s32.totalorder %s120, %s134
    %p136 = scmp.eq.s32.totalorder %s19, 0
    %p137 = por %p135, %p136
    %s139 = sadd.s32 %s138, 1
    %p142 = scmp.eq.s32.totalorder %s13, 47
    %p143 = scmp.ne.s32.totalorder %s138, %s140
    %p144 = scmp.eq.s32.totalorder %s13, 0
    %p145 = por %p143, %p144
    %p146 = scmp.ne.s32.totalorder %s138, %s140
    %p147 = scmp.eq.s32.totalorder %s18, 47
    %p148 = por %p146, %p147
    %p149 = scmp.ne.s32.totalorder %s140, %s141
    %p150 = scmp.eq.s32.totalorder %s18, 0
    %p151 = por %p149, %p150
    %p152 = scmp.ne.s32.totalorder %s140, %s141
    %p153 = scmp.eq.s32.totalorder %s19, 47
    %p154 = por %p152, %p153
    %p156 = scmp.ne.s32.totalorder %s141, %s155
    %p157 = scmp.eq.s32.totalorder %s19, 0
    %p158 = por %p156, %p157
    %s160 = sadd.s32 %s159, 1
    %p163 = scmp.eq.s32.totalorder %s13, 47
    %p164 = scmp.ne.s32.totalorder %s159, %s161
    %p165 = scmp.eq.s32.totalorder %s13, 0
    %p166 = por %p164, %p165
    %p167 = scmp.ne.s32.totalorder %s159, %s161
    %p168 = scmp.eq.s32.totalorder %s18, 47
    %p169 = por %p167, %p168
    %p170 = scmp.ne.s32.totalorder %s161, %s162
    %p171 = scmp.eq.s32.totalorder %s18, 0
    %p172 = por %p170, %p171
    %p173 = scmp.ne.s32.totalorder %s161, %s162
    %p174 = scmp.eq.s32.totalorder %s19, 47
    %p175 = por %p173, %p174
    %p177 = scmp.ne.s32.totalorder %s162, %s176
    %p178 = scmp.eq.s32.totalorder %s19, 0
    %p179 = por %p177, %p178
    %s180 = ssub.s32 %s20, %s39
    %s181 = ssub.s32 %s21, %s35
    %s182 = sor.u32 %s180, %s181
    %p183 = scmp.eq.s32.totalorder %s182, 0
    %s185 = sadd.s32 %s184, 1
    %s186 = scalar_select %p183, %s184, %s185
    %p189 = pneg %p183
    %p190 = scmp.eq.s32.totalorder %s13, 47
    %p191 = por %p189, %p190
    %p192 = scmp.ne.s32.totalorder %s184, %s187
    %p193 = scmp.eq.s32.totalorder %s13, 0
    %p194 = por %p192, %p193
    %p195 = scmp.ne.s32.totalorder %s184, %s187
    %p196 = scmp.eq.s32.totalorder %s18, 47
    %p197 = por %p195, %p196
    %p198 = scmp.ne.s32.totalorder %s187, %s188
    %p199 = scmp.eq.s32.totalorder %s18, 0
    %p200 = por %p198, %p199
    %p201 = scmp.ne.s32.totalorder %s187, %s188
    %p202 = scmp.eq.s32.totalorder %s19, 47
    %p203 = por %p201, %p202
    %p205 = scmp.ne.s32.totalorder %s188, %s204
    %p206 = scmp.eq.s32.totalorder %s19, 0
    %p207 = por %p205, %p206
    %p208 = scmp.le.s32.totalorder 1, %s13
    %p209 = scmp.lt.s32.totalorder %s13, 49
    %p210 = pnand %p208, %p209
    %p211 = pneg %p210
    // Predicated region
    $region9: #{fcn_head_forward.7} parent=5 // pred_check
      _
    $region10: #{fcn_head_forward.7} parent=5 // pred_check_branch
      %213 = sbr.rel (%p210) target = $region12
    $region11: #{fcn_head_forward.7} parent=5 // pred_region
      %s214 = ssub.s32 %s13, 1
      // Predicated region
      $region13: #{fcn_head_forward.7} parent=11 // pred_check
        %p215 = pneg %p109
      $region14: #{fcn_head_forward.7} parent=11 // pred_check_branch
        %217 = sbr.rel (%p215) target = $region16
      $region15: #{fcn_head_forward.7} parent=11 // pred_region
        _
      $region16: #{fcn_head_forward.7} parent=11 // pred_fallthru
        _
      // Predicated region
      $region17: #{fcn_head_forward.7} parent=11 // pred_check
        %p218 = pneg %p130
      $region18: #{fcn_head_forward.7} parent=11 // pred_check_branch
        %220 = sbr.rel (%p218) target = $region20
      $region19: #{fcn_head_forward.7} parent=11 // pred_region
        _
      $region20: #{fcn_head_forward.7} parent=11 // pred_fallthru
        _
      // Predicated region
      $region21: #{fcn_head_forward.7} parent=11 // pred_check
        %p221 = pneg %p151
      $region22: #{fcn_head_forward.7} parent=11 // pred_check_branch
        %223 = sbr.rel (%p221) target = $region24
      $region23: #{fcn_head_forward.7} parent=11 // pred_region
        _
      $region24: #{fcn_head_forward.7} parent=11 // pred_fallthru
        _
      // Predicated region
      $region25: #{fcn_head_forward.7} parent=11 // pred_check
        %p224 = pneg %p172
      $region26: #{fcn_head_forward.7} parent=11 // pred_check_branch
        %226 = sbr.rel (%p224) target = $region28
      $region27: #{fcn_head_forward.7} parent=11 // pred_region
        _
      $region28: #{fcn_head_forward.7} parent=11 // pred_fallthru
        _
    $region12: #{fcn_head_forward.7} parent=5 // pred_fallthru
      _
    %p227 = scmp.lt.s32.totalorder %s13, 48
    // Predicated region
    $region29: #{fcn_head_forward.7} parent=5 // pred_check
      %p228 = pneg %p227
    $region30: #{fcn_head_forward.7} parent=5 // pred_check_branch
      %230 = sbr.rel (%p228) target = $region32
    $region31: #{fcn_head_forward.7} parent=5 // pred_region
      // Predicated region
      $region33: #{fcn_head_forward.7} parent=31 // pred_check
        %p231 = pneg %p56
      $region34: #{fcn_head_forward.7} parent=31 // pred_check_branch
        %233 = sbr.rel (%p231) target = $region36
      $region35: #{fcn_head_forward.7} parent=31 // pred_region
        %s234 = sadd.s32 %s21, %s22
        %p235 = scmp.lt.s32.totalorder %s20, 1
        %s236 = scalar_select %p235, %s20, 1
        %p237 = scmp.lt.s32.totalorder %s234, 9
        %s238 = scalar_select %p237, %s234, 9
        %s239 = smul.addr %s236, 10
        %s240 = sadd.s32 %s238, %s239
        %s241 = smul.addr %s240, 8
        %s242 = scalar_lea.vmem %s0, %s241
        %s243 = sadd.s32 %s21, %s22
      $region36: #{fcn_head_forward.7} parent=31 // pred_fallthru
        _
      // Predicated region
      $region37: #{fcn_head_forward.7} parent=31 // pred_check
        %p244 = pneg %p82
      $region38: #{fcn_head_forward.7} parent=31 // pred_check_branch
        %246 = sbr.rel (%p244) target = $region40
      $region39: #{fcn_head_forward.7} parent=31 // pred_region
        %p247 = scmp.lt.s32.totalorder %s22, 2
        %s248 = scalar_select %p247, %s22, 2
        %s249 = smul.addr %s248, 9
        %s250 = smul.addr %s249, 8
        %s251 = scalar_lea.vmem %s1, %s250
      $region40: #{fcn_head_forward.7} parent=31 // pred_fallthru
        _
    $region32: #{fcn_head_forward.7} parent=5 // pred_fallthru
      _
    %p252 = scmp.le.s32.totalorder 1, %s13
    %p253 = scmp.lt.s32.totalorder %s13, 49
    %p254 = pnand %p252, %p253
    %p255 = pneg %p254
    // Predicated region
    $region41: #{fcn_head_forward.7} parent=5 // pred_check
      _
    $region42: #{fcn_head_forward.7} parent=5 // pred_check_branch
      %257 = sbr.rel (%p254) target = $region44
    $region43: #{fcn_head_forward.7} parent=5 // pred_region
      %s258 = ssub.s32 %s13, 1
      %s259 = sadd.s32 %s24, %s25
      %p260 = scmp.lt.s32.totalorder %s23, 1
      %s261 = scalar_select %p260, %s23, 1
      %p262 = scmp.lt.s32.totalorder %s259, 9
      %s263 = scalar_select %p262, %s259, 9
      %s264 = smul.addr %s261, 10
      %s265 = sadd.s32 %s263, %s264
      %s266 = smul.addr %s265, 8
      %s267 = scalar_lea.vmem %s0, %s266
      %p268 = pneg %p62
      %p269 = pneg %p59
      %p270 = scmp.lt.s32.totalorder %s25, 2
      %s271 = scalar_select %p270, %s25, 2
      %s272 = smul.addr %s271, 9
      %s273 = smul.addr %s272, 8
      %s274 = scalar_lea.vmem %s1, %s273
      %p275 = pneg %p88
      %p276 = pneg %p85
      %p277 = pneg %p109
      %p278 = pneg %p106
      %p279 = pneg %p130
      %p280 = pneg %p127
      %p281 = pneg %p151
      %p282 = pneg %p148
      %p283 = pneg %p172
      %p284 = pneg %p169
      %p285 = pneg %p200
      %p286 = pneg %p197
      %p287 = scmp.lt.s32.totalorder %s23, 1
      %s288 = scalar_select %p287, %s23, 1
      %p289 = scmp.lt.s32.totalorder %s24, 7
      %s290 = scalar_select %p289, %s24, 7
      %s291 = smul.addr %s288, 8
      %s292 = sadd.s32 %s290, %s291
      %s293 = smul.addr %s292, 4
      %s294 = scalar_lea.vmem %s6, %s293
      %s295 = sadd.s32 %s24, %s25
      %p296 = scmp.lt.s32.totalorder %s23, 1
      %s297 = scalar_select %p296, %s23, 1
      %p298 = scmp.lt.s32.totalorder %s295, 9
      %s299 = scalar_select %p298, %s295, 9
      %s300 = smul.addr %s297, 10
      %s301 = sadd.s32 %s299, %s300
      %s302 = smul.addr %s301, 8
      %s303 = scalar_lea.vmem %s0, %s302
      %s304 = sadd.s32 %s24, %s25
      %p305 = scmp.lt.s32.totalorder %s25, 2
      %s306 = scalar_select %p305, %s25, 2
      %s307 = smul.addr %s306, 9
      %s308 = smul.addr %s307, 8
      %s309 = scalar_lea.vmem %s1, %s308
      %p310 = scmp.lt.s32.totalorder %s23, 1
      %s311 = scalar_select %p310, %s23, 1
      %p312 = scmp.lt.s32.totalorder %s24, 7
      %s313 = scalar_select %p312, %s24, 7
      %s314 = smul.addr %s311, 8
      %s315 = sadd.s32 %s313, %s314
      %s316 = smul.addr %s315, 4
      %s317 = scalar_lea.vmem %s6, %s316
      %p318 = scmp.eq.s32.totalorder %s25, 0
      // Predicated region
      $region45: #{fcn_head_forward.7} parent=43 // pred_check
        %p319 = pneg %p318
      $region46: #{fcn_head_forward.7} parent=43 // pred_check_branch
        %321 = sbr.rel (%p319) target = $region48
      $region47: #{fcn_head_forward.7} parent=43 // pred_region
        %vm322 = vcmask 818176
        %323 = vst.msk [vmem:[#allocation2] sm:$0xff] %vm322, 0.0
      $region48: #{fcn_head_forward.7} parent=43 // pred_fallthru
        _
      %v324 = vld [vmem:[%s303] sm:$0xff]
      %v325 = vld [vmem:[#allocation2] sm:$0xff]
      %v326 = vld [vmem:[%s309] sm:$0xff]
      %vm327 = vcmask 64512
      %v329 = vsel %vm327, %v326, 0
      %331 = vmatprep.subr.mxu0 0.0
      %332 = vmatpush1.msra.mxu0 0.0
      %333 = vmatprep.subr.mxu0 0.0
      %334 = vmatpush1.msra.mxu0 0.0
      %335 = vmatprep.subr.mxu0 0.0
      %336 = vmatpush1.msra.mxu0 0.0
      %337 = vmatprep.subr.mxu0 0.0
      %338 = vmatpush1.msra.mxu0 0.0
      %339 = vmatprep.subr.mxu0 0.0
      %340 = vmatpush1.msra.mxu0 0.0
      %341 = vmatprep.subr.mxu0 0.0
      %342 = vmatpush1.msra.mxu0 0.0
      %343 = vmatprep.subr.mxu0 0.0
      %344 = vmatpush1.msra.mxu0 0.0
      %345 = vmatprep.subr.mxu0 0.0
      %346 = vmatpush1.msra.mxu0 0.0
      %347 = vmatprep.subr.mxu0 0.0
      %348 = vmatpush1.msra.mxu0 0.0
      %349 = vmatprep.subr.mxu0 0.0
      %350 = vmatpush1.msra.mxu0 0.0
      %351 = vmatprep.subr.mxu0 0.0
      %352 = vmatpush1.msra.mxu0 0.0
      %353 = vmatprep.subr.mxu0 0.0
      %354 = vmatpush1.msra.mxu0 0.0
      %355 = vmatprep.subr.mxu0 0.0
      %356 = vmatpush1.msra.mxu0 0.0
      %357 = vmatprep.subr.mxu0 0.0
      %358 = vmatpush1.msra.mxu0 0.0
      %359 = vmatprep.subr.mxu0 0.0
      %360 = vmatpush1.msra.mxu0 0.0
      %361 = vmatprep.subr.mxu0 0.0
      %362 = vmatpush1.msra.mxu0 %v324
      %363 = vmatprep.subr.mxu0 0.0
      %364 = vmatpush2.msra.mxu0 0.0
      %365 = vmatprep.subr.mxu0 0.0
      %366 = vmatpush2.msra.mxu0 0.0
      %367 = vmatprep.subr.mxu0 0.0
      %368 = vmatpush2.msra.mxu0 0.0
      %369 = vmatprep.subr.mxu0 0.0
      %370 = vmatpush2.msra.mxu0 0.0
      %371 = vmatprep.subr.mxu0 0.0
      %372 = vmatpush2.msra.mxu0 0.0
      %373 = vmatprep.subr.mxu0 0.0
      %374 = vmatpush2.msra.mxu0 0.0
      %375 = vmatprep.subr.mxu0 0.0
      %376 = vmatpush2.msra.mxu0 0.0
      %377 = vmatprep.subr.mxu0 0.0
      %378 = vmatpush2.msra.mxu0 0.0
      %379 = vmatprep.subr.mxu0 0.0
      %380 = vmatpush2.msra.mxu0 0.0
      %381 = vmatprep.subr.mxu0 0.0
      %382 = vmatpush2.msra.mxu0 0.0
      %383 = vmatprep.subr.mxu0 0.0
      %384 = vmatpush2.msra.mxu0 0.0
      %385 = vmatprep.subr.mxu0 0.0
      %386 = vmatpush2.msra.mxu0 0.0
      %387 = vmatprep.subr.mxu0 0.0
      %388 = vmatpush2.msra.mxu0 0.0
      %389 = vmatprep.subr.mxu0 0.0
      %390 = vmatpush2.msra.mxu0 0.0
      %391 = vmatprep.subr.mxu0 0.0
      %392 = vmatpush2.msra.mxu0 0.0
      %393 = vmatprep.subr.mxu0 0.0
      %394 = vmatpush2.msra.mxu0 0.0
      %395 = vmatprep.mubr.f32.mxu0 0.0
      %396 = vmatmul.mubr.f32.gmra.mxu0 %v329
      %v397 = vpop.f32.mrf.mxu0
      %v398 = vadd.f32 0.0, %v397
      %v399 = vpop.f32.mrf.mxu0
      %400 = vdwg.mxu0
      %v401 = vadd.f32 %v325, %v398
      %s402 = scalar_lea.vmem %s309, 8
      %v403 = vld [vmem:[%s402] sm:$0xff]
      %405 = vrot.lane.b32.xlu0 %v324, 127
      %v406 = vpop.permute.xlu0 %405
      %v409 = vsel %vm327, %v403, 0
      %411 = vmatprep.subr.mxu0 0.0
      %412 = vmatpush1.msra.mxu0 0.0
      %413 = vmatprep.subr.mxu0 0.0
      %414 = vmatpush1.msra.mxu0 0.0
      %415 = vmatprep.subr.mxu0 0.0
      %416 = vmatpush1.msra.mxu0 0.0
      %417 = vmatprep.subr.mxu0 0.0
      %418 = vmatpush1.msra.mxu0 0.0
      %419 = vmatprep.subr.mxu0 0.0
      %420 = vmatpush1.msra.mxu0 0.0
      %421 = vmatprep.subr.mxu0 0.0
      %422 = vmatpush1.msra.mxu0 0.0
      %423 = vmatprep.subr.mxu0 0.0
      %424 = vmatpush1.msra.mxu0 0.0
      %425 = vmatprep.subr.mxu0 0.0
      %426 = vmatpush1.msra.mxu0 0.0
      %427 = vmatprep.subr.mxu0 0.0
      %428 = vmatpush1.msra.mxu0 0.0
      %429 = vmatprep.subr.mxu0 0.0
      %430 = vmatpush1.msra.mxu0 0.0
      %431 = vmatprep.subr.mxu0 0.0
      %432 = vmatpush1.msra.mxu0 0.0
      %433 = vmatprep.subr.mxu0 0.0
      %434 = vmatpush1.msra.mxu0 0.0
      %435 = vmatprep.subr.mxu0 0.0
      %436 = vmatpush1.msra.mxu0 0.0
      %437 = vmatprep.subr.mxu0 0.0
      %438 = vmatpush1.msra.mxu0 0.0
      %439 = vmatprep.subr.mxu0 0.0
      %440 = vmatpush1.msra.mxu0 0.0
      %441 = vmatprep.subr.mxu0 0.0
      %442 = vmatpush1.msra.mxu0 %v406
      %443 = vmatprep.subr.mxu0 0.0
      %444 = vmatpush2.msra.mxu0 0.0
      %445 = vmatprep.subr.mxu0 0.0
      %446 = vmatpush2.msra.mxu0 0.0
      %447 = vmatprep.subr.mxu0 0.0
      %448 = vmatpush2.msra.mxu0 0.0
      %449 = vmatprep.subr.mxu0 0.0
      %450 = vmatpush2.msra.mxu0 0.0
      %451 = vmatprep.subr.mxu0 0.0
      %452 = vmatpush2.msra.mxu0 0.0
      %453 = vmatprep.subr.mxu0 0.0
      %454 = vmatpush2.msra.mxu0 0.0
      %455 = vmatprep.subr.mxu0 0.0
      %456 = vmatpush2.msra.mxu0 0.0
      %457 = vmatprep.subr.mxu0 0.0
      %458 = vmatpush2.msra.mxu0 0.0
      %459 = vmatprep.subr.mxu0 0.0
      %460 = vmatpush2.msra.mxu0 0.0
      %461 = vmatprep.subr.mxu0 0.0
      %462 = vmatpush2.msra.mxu0 0.0
      %463 = vmatprep.subr.mxu0 0.0
      %464 = vmatpush2.msra.mxu0 0.0
      %465 = vmatprep.subr.mxu0 0.0
      %466 = vmatpush2.msra.mxu0 0.0
      %467 = vmatprep.subr.mxu0 0.0
      %468 = vmatpush2.msra.mxu0 0.0
      %469 = vmatprep.subr.mxu0 0.0
      %470 = vmatpush2.msra.mxu0 0.0
      %471 = vmatprep.subr.mxu0 0.0
      %472 = vmatpush2.msra.mxu0 0.0
      %473 = vmatprep.subr.mxu0 0.0
      %474 = vmatpush2.msra.mxu0 0.0
      %475 = vmatprep.mubr.f32.mxu0 0.0
      %476 = vmatmul.mubr.f32.gmra.mxu0 %v409
      %v477 = vpop.f32.mrf.mxu0
      %v478 = vadd.f32 0.0, %v477
      %v479 = vpop.f32.mrf.mxu0
      %480 = vdwg.mxu0
      %v481 = vadd.f32 %v401, %v478
      %s482 = scalar_lea.vmem %s309, 16
      %v483 = vld [vmem:[%s482] sm:$0xff]
      %484 = vrot.lane.b32.xlu0 %v324, 126
      %v485 = vpop.permute.xlu0 %484
      %v488 = vsel %vm327, %v483, 0
      %490 = vmatprep.subr.mxu0 0.0
      %491 = vmatpush1.msra.mxu0 0.0
      %492 = vmatprep.subr.mxu0 0.0
      %493 = vmatpush1.msra.mxu0 0.0
      %494 = vmatprep.subr.mxu0 0.0
      %495 = vmatpush1.msra.mxu0 0.0
      %496 = vmatprep.subr.mxu0 0.0
      %497 = vmatpush1.msra.mxu0 0.0
      %498 = vmatprep.subr.mxu0 0.0
      %499 = vmatpush1.msra.mxu0 0.0
      %500 = vmatprep.subr.mxu0 0.0
      %501 = vmatpush1.msra.mxu0 0.0
      %502 = vmatprep.subr.mxu0 0.0
      %503 = vmatpush1.msra.mxu0 0.0
      %504 = vmatprep.subr.mxu0 0.0
      %505 = vmatpush1.msra.mxu0 0.0
      %506 = vmatprep.subr.mxu0 0.0
      %507 = vmatpush1.msra.mxu0 0.0
      %508 = vmatprep.subr.mxu0 0.0
      %509 = vmatpush1.msra.mxu0 0.0
      %510 = vmatprep.subr.mxu0 0.0
      %511 = vmatpush1.msra.mxu0 0.0
      %512 = vmatprep.subr.mxu0 0.0
      %513 = vmatpush1.msra.mxu0 0.0
      %514 = vmatprep.subr.mxu0 0.0
      %515 = vmatpush1.msra.mxu0 0.0
      %516 = vmatprep.subr.mxu0 0.0
      %517 = vmatpush1.msra.mxu0 0.0
      %518 = vmatprep.subr.mxu0 0.0
      %519 = vmatpush1.msra.mxu0 0.0
      %520 = vmatprep.subr.mxu0 0.0
      %521 = vmatpush1.msra.mxu0 %v485
      %522 = vmatprep.subr.mxu0 0.0
      %523 = vmatpush2.msra.mxu0 0.0
      %524 = vmatprep.subr.mxu0 0.0
      %525 = vmatpush2.msra.mxu0 0.0
      %526 = vmatprep.subr.mxu0 0.0
      %527 = vmatpush2.msra.mxu0 0.0
      %528 = vmatprep.subr.mxu0 0.0
      %529 = vmatpush2.msra.mxu0 0.0
      %530 = vmatprep.subr.mxu0 0.0
      %531 = vmatpush2.msra.mxu0 0.0
      %532 = vmatprep.subr.mxu0 0.0
      %533 = vmatpush2.msra.mxu0 0.0
      %534 = vmatprep.subr.mxu0 0.0
      %535 = vmatpush2.msra.mxu0 0.0
      %536 = vmatprep.subr.mxu0 0.0
      %537 = vmatpush2.msra.mxu0 0.0
      %538 = vmatprep.subr.mxu0 0.0
      %539 = vmatpush2.msra.mxu0 0.0
      %540 = vmatprep.subr.mxu0 0.0
      %541 = vmatpush2.msra.mxu0 0.0
      %542 = vmatprep.subr.mxu0 0.0
      %543 = vmatpush2.msra.mxu0 0.0
      %544 = vmatprep.subr.mxu0 0.0
      %545 = vmatpush2.msra.mxu0 0.0
      %546 = vmatprep.subr.mxu0 0.0
      %547 = vmatpush2.msra.mxu0 0.0
      %548 = vmatprep.subr.mxu0 0.0
      %549 = vmatpush2.msra.mxu0 0.0
      %550 = vmatprep.subr.mxu0 0.0
      %551 = vmatpush2.msra.mxu0 0.0
      %552 = vmatprep.subr.mxu0 0.0
      %553 = vmatpush2.msra.mxu0 0.0
      %554 = vmatprep.mubr.f32.mxu0 0.0
      %555 = vmatmul.mubr.f32.gmra.mxu0 %v488
      %v556 = vpop.f32.mrf.mxu0
      %v557 = vadd.f32 0.0, %v556
      %v558 = vpop.f32.mrf.mxu0
      %559 = vdwg.mxu0
      %v560 = vadd.f32 %v481, %v557
      %s561 = scalar_lea.vmem %s309, 24
      %v562 = vld [vmem:[%s561] sm:$0xff]
      %563 = vrot.lane.b32.xlu0 %v324, 118
      %v564 = vpop.permute.xlu0 %563
      %v567 = vsel %vm327, %v562, 0
      %569 = vmatprep.subr.mxu0 0.0
      %570 = vmatpush1.msra.mxu0 0.0
      %571 = vmatprep.subr.mxu0 0.0
      %572 = vmatpush1.msra.mxu0 0.0
      %573 = vmatprep.subr.mxu0 0.0
      %574 = vmatpush1.msra.mxu0 0.0
      %575 = vmatprep.subr.mxu0 0.0
      %576 = vmatpush1.msra.mxu0 0.0
      %577 = vmatprep.subr.mxu0 0.0
      %578 = vmatpush1.msra.mxu0 0.0
      %579 = vmatprep.subr.mxu0 0.0
      %580 = vmatpush1.msra.mxu0 0.0
      %581 = vmatprep.subr.mxu0 0.0
      %582 = vmatpush1.msra.mxu0 0.0
      %583 = vmatprep.subr.mxu0 0.0
      %584 = vmatpush1.msra.mxu0 0.0
      %585 = vmatprep.subr.mxu0 0.0
      %586 = vmatpush1.msra.mxu0 0.0
      %587 = vmatprep.subr.mxu0 0.0
      %588 = vmatpush1.msra.mxu0 0.0
      %589 = vmatprep.subr.mxu0 0.0
      %590 = vmatpush1.msra.mxu0 0.0
      %591 = vmatprep.subr.mxu0 0.0
      %592 = vmatpush1.msra.mxu0 0.0
      %593 = vmatprep.subr.mxu0 0.0
      %594 = vmatpush1.msra.mxu0 0.0
      %595 = vmatprep.subr.mxu0 0.0
      %596 = vmatpush1.msra.mxu0 0.0
      %597 = vmatprep.subr.mxu0 0.0
      %598 = vmatpush1.msra.mxu0 0.0
      %599 = vmatprep.subr.mxu0 0.0
      %600 = vmatpush1.msra.mxu0 %v564
      %601 = vmatprep.subr.mxu0 0.0
      %602 = vmatpush2.msra.mxu0 0.0
      %603 = vmatprep.subr.mxu0 0.0
      %604 = vmatpush2.msra.mxu0 0.0
      %605 = vmatprep.subr.mxu0 0.0
      %606 = vmatpush2.msra.mxu0 0.0
      %607 = vmatprep.subr.mxu0 0.0
      %608 = vmatpush2.msra.mxu0 0.0
      %609 = vmatprep.subr.mxu0 0.0
      %610 = vmatpush2.msra.mxu0 0.0
      %611 = vmatprep.subr.mxu0 0.0
      %612 = vmatpush2.msra.mxu0 0.0
      %613 = vmatprep.subr.mxu0 0.0
      %614 = vmatpush2.msra.mxu0 0.0
      %615 = vmatprep.subr.mxu0 0.0
      %616 = vmatpush2.msra.mxu0 0.0
      %617 = vmatprep.subr.mxu0 0.0
      %618 = vmatpush2.msra.mxu0 0.0
      %619 = vmatprep.subr.mxu0 0.0
      %620 = vmatpush2.msra.mxu0 0.0
      %621 = vmatprep.subr.mxu0 0.0
      %622 = vmatpush2.msra.mxu0 0.0
      %623 = vmatprep.subr.mxu0 0.0
      %624 = vmatpush2.msra.mxu0 0.0
      %625 = vmatprep.subr.mxu0 0.0
      %626 = vmatpush2.msra.mxu0 0.0
      %627 = vmatprep.subr.mxu0 0.0
      %628 = vmatpush2.msra.mxu0 0.0
      %629 = vmatprep.subr.mxu0 0.0
      %630 = vmatpush2.msra.mxu0 0.0
      %631 = vmatprep.subr.mxu0 0.0
      %632 = vmatpush2.msra.mxu0 0.0
      %633 = vmatprep.mubr.f32.mxu0 0.0
      %634 = vmatmul.mubr.f32.gmra.mxu0 %v567
      %v635 = vpop.f32.mrf.mxu0
      %v636 = vadd.f32 0.0, %v635
      %v637 = vpop.f32.mrf.mxu0
      %638 = vdwg.mxu0
      %v639 = vadd.f32 %v560, %v636
      %s640 = scalar_lea.vmem %s309, 32
      %v641 = vld [vmem:[%s640] sm:$0xff]
      %642 = vrot.lane.b32.xlu0 %v324, 117
      %v643 = vpop.permute.xlu0 %642
      %v646 = vsel %vm327, %v641, 0
      %648 = vmatprep.subr.mxu0 0.0
      %649 = vmatpush1.msra.mxu0 0.0
      %650 = vmatprep.subr.mxu0 0.0
      %651 = vmatpush1.msra.mxu0 0.0
      %652 = vmatprep.subr.mxu0 0.0
      %653 = vmatpush1.msra.mxu0 0.0
      %654 = vmatprep.subr.mxu0 0.0
      %655 = vmatpush1.msra.mxu0 0.0
      %656 = vmatprep.subr.mxu0 0.0
      %657 = vmatpush1.msra.mxu0 0.0
      %658 = vmatprep.subr.mxu0 0.0
      %659 = vmatpush1.msra.mxu0 0.0
      %660 = vmatprep.subr.mxu0 0.0
      %661 = vmatpush1.msra.mxu0 0.0
      %662 = vmatprep.subr.mxu0 0.0
      %663 = vmatpush1.msra.mxu0 0.0
      %664 = vmatprep.subr.mxu0 0.0
      %665 = vmatpush1.msra.mxu0 0.0
      %666 = vmatprep.subr.mxu0 0.0
      %667 = vmatpush1.msra.mxu0 0.0
      %668 = vmatprep.subr.mxu0 0.0
      %669 = vmatpush1.msra.mxu0 0.0
      %670 = vmatprep.subr.mxu0 0.0
      %671 = vmatpush1.msra.mxu0 0.0
      %672 = vmatprep.subr.mxu0 0.0
      %673 = vmatpush1.msra.mxu0 0.0
      %674 = vmatprep.subr.mxu0 0.0
      %675 = vmatpush1.msra.mxu0 0.0
      %676 = vmatprep.subr.mxu0 0.0
      %677 = vmatpush1.msra.mxu0 0.0
      %678 = vmatprep.subr.mxu0 0.0
      %679 = vmatpush1.msra.mxu0 %v643
      %680 = vmatprep.subr.mxu0 0.0
      %681 = vmatpush2.msra.mxu0 0.0
      %682 = vmatprep.subr.mxu0 0.0
      %683 = vmatpush2.msra.mxu0 0.0
      %684 = vmatprep.subr.mxu0 0.0
      %685 = vmatpush2.msra.mxu0 0.0
      %686 = vmatprep.subr.mxu0 0.0
      %687 = vmatpush2.msra.mxu0 0.0
      %688 = vmatprep.subr.mxu0 0.0
      %689 = vmatpush2.msra.mxu0 0.0
      %690 = vmatprep.subr.mxu0 0.0
      %691 = vmatpush2.msra.mxu0 0.0
      %692 = vmatprep.subr.mxu0 0.0
      %693 = vmatpush2.msra.mxu0 0.0
      %694 = vmatprep.subr.mxu0 0.0
      %695 = vmatpush2.msra.mxu0 0.0
      %696 = vmatprep.subr.mxu0 0.0
      %697 = vmatpush2.msra.mxu0 0.0
      %698 = vmatprep.subr.mxu0 0.0
      %699 = vmatpush2.msra.mxu0 0.0
      %700 = vmatprep.subr.mxu0 0.0
      %701 = vmatpush2.msra.mxu0 0.0
      %702 = vmatprep.subr.mxu0 0.0
      %703 = vmatpush2.msra.mxu0 0.0
      %704 = vmatprep.subr.mxu0 0.0
      %705 = vmatpush2.msra.mxu0 0.0
      %706 = vmatprep.subr.mxu0 0.0
      %707 = vmatpush2.msra.mxu0 0.0
      %708 = vmatprep.subr.mxu0 0.0
      %709 = vmatpush2.msra.mxu0 0.0
      %710 = vmatprep.subr.mxu0 0.0
      %711 = vmatpush2.msra.mxu0 0.0
      %712 = vmatprep.mubr.f32.mxu0 0.0
      %713 = vmatmul.mubr.f32.gmra.mxu0 %v646
      %v714 = vpop.f32.mrf.mxu0
      %v715 = vadd.f32 0.0, %v714
      %v716 = vpop.f32.mrf.mxu0
      %717 = vdwg.mxu0
      %v718 = vadd.f32 %v639, %v715
      %s719 = scalar_lea.vmem %s309, 40
      %v720 = vld [vmem:[%s719] sm:$0xff]
      %721 = vrot.lane.b32.xlu0 %v324, 116
      %v722 = vpop.permute.xlu0 %721
      %v725 = vsel %vm327, %v720, 0
      %727 = vmatprep.subr.mxu0 0.0
      %728 = vmatpush1.msra.mxu0 0.0
      %729 = vmatprep.subr.mxu0 0.0
      %730 = vmatpush1.msra.mxu0 0.0
      %731 = vmatprep.subr.mxu0 0.0
      %732 = vmatpush1.msra.mxu0 0.0
      %733 = vmatprep.subr.mxu0 0.0
      %734 = vmatpush1.msra.mxu0 0.0
      %735 = vmatprep.subr.mxu0 0.0
      %736 = vmatpush1.msra.mxu0 0.0
      %737 = vmatprep.subr.mxu0 0.0
      %738 = vmatpush1.msra.mxu0 0.0
      %739 = vmatprep.subr.mxu0 0.0
      %740 = vmatpush1.msra.mxu0 0.0
      %741 = vmatprep.subr.mxu0 0.0
      %742 = vmatpush1.msra.mxu0 0.0
      %743 = vmatprep.subr.mxu0 0.0
      %744 = vmatpush1.msra.mxu0 0.0
      %745 = vmatprep.subr.mxu0 0.0
      %746 = vmatpush1.msra.mxu0 0.0
      %747 = vmatprep.subr.mxu0 0.0
      %748 = vmatpush1.msra.mxu0 0.0
      %749 = vmatprep.subr.mxu0 0.0
      %750 = vmatpush1.msra.mxu0 0.0
      %751 = vmatprep.subr.mxu0 0.0
      %752 = vmatpush1.msra.mxu0 0.0
      %753 = vmatprep.subr.mxu0 0.0
      %754 = vmatpush1.msra.mxu0 0.0
      %755 = vmatprep.subr.mxu0 0.0
      %756 = vmatpush1.msra.mxu0 0.0
      %757 = vmatprep.subr.mxu0 0.0
      %758 = vmatpush1.msra.mxu0 %v722
      %759 = vmatprep.subr.mxu0 0.0
      %760 = vmatpush2.msra.mxu0 0.0
      %761 = vmatprep.subr.mxu0 0.0
      %762 = vmatpush2.msra.mxu0 0.0
      %763 = vmatprep.subr.mxu0 0.0
      %764 = vmatpush2.msra.mxu0 0.0
      %765 = vmatprep.subr.mxu0 0.0
      %766 = vmatpush2.msra.mxu0 0.0
      %767 = vmatprep.subr.mxu0 0.0
      %768 = vmatpush2.msra.mxu0 0.0
      %769 = vmatprep.subr.mxu0 0.0
      %770 = vmatpush2.msra.mxu0 0.0
      %771 = vmatprep.subr.mxu0 0.0
      %772 = vmatpush2.msra.mxu0 0.0
      %773 = vmatprep.subr.mxu0 0.0
      %774 = vmatpush2.msra.mxu0 0.0
      %775 = vmatprep.subr.mxu0 0.0
      %776 = vmatpush2.msra.mxu0 0.0
      %777 = vmatprep.subr.mxu0 0.0
      %778 = vmatpush2.msra.mxu0 0.0
      %779 = vmatprep.subr.mxu0 0.0
      %780 = vmatpush2.msra.mxu0 0.0
      %781 = vmatprep.subr.mxu0 0.0
      %782 = vmatpush2.msra.mxu0 0.0
      %783 = vmatprep.subr.mxu0 0.0
      %784 = vmatpush2.msra.mxu0 0.0
      %785 = vmatprep.subr.mxu0 0.0
      %786 = vmatpush2.msra.mxu0 0.0
      %787 = vmatprep.subr.mxu0 0.0
      %788 = vmatpush2.msra.mxu0 0.0
      %789 = vmatprep.subr.mxu0 0.0
      %790 = vmatpush2.msra.mxu0 0.0
      %791 = vmatprep.mubr.f32.mxu0 0.0
      %792 = vmatmul.mubr.f32.gmra.mxu0 %v725
      %v793 = vpop.f32.mrf.mxu0
      %v794 = vadd.f32 0.0, %v793
      %v795 = vpop.f32.mrf.mxu0
      %796 = vdwg.mxu0
      %v797 = vadd.f32 %v718, %v794
      %s798 = scalar_lea.vmem %s309, 48
      %v799 = vld [vmem:[%s798] sm:$0xff]
      %800 = vrot.lane.b32.xlu0 %v324, 108
      %v801 = vpop.permute.xlu0 %800
      %v804 = vsel %vm327, %v799, 0
      %806 = vmatprep.subr.mxu0 0.0
      %807 = vmatpush1.msra.mxu0 0.0
      %808 = vmatprep.subr.mxu0 0.0
      %809 = vmatpush1.msra.mxu0 0.0
      %810 = vmatprep.subr.mxu0 0.0
      %811 = vmatpush1.msra.mxu0 0.0
      %812 = vmatprep.subr.mxu0 0.0
      %813 = vmatpush1.msra.mxu0 0.0
      %814 = vmatprep.subr.mxu0 0.0
      %815 = vmatpush1.msra.mxu0 0.0
      %816 = vmatprep.subr.mxu0 0.0
      %817 = vmatpush1.msra.mxu0 0.0
      %818 = vmatprep.subr.mxu0 0.0
      %819 = vmatpush1.msra.mxu0 0.0
      %820 = vmatprep.subr.mxu0 0.0
      %821 = vmatpush1.msra.mxu0 0.0
      %822 = vmatprep.subr.mxu0 0.0
      %823 = vmatpush1.msra.mxu0 0.0
      %824 = vmatprep.subr.mxu0 0.0
      %825 = vmatpush1.msra.mxu0 0.0
      %826 = vmatprep.subr.mxu0 0.0
      %827 = vmatpush1.msra.mxu0 0.0
      %828 = vmatprep.subr.mxu0 0.0
      %829 = vmatpush1.msra.mxu0 0.0
      %830 = vmatprep.subr.mxu0 0.0
      %831 = vmatpush1.msra.mxu0 0.0
      %832 = vmatprep.subr.mxu0 0.0
      %833 = vmatpush1.msra.mxu0 0.0
      %834 = vmatprep.subr.mxu0 0.0
      %835 = vmatpush1.msra.mxu0 0.0
      %836 = vmatprep.subr.mxu0 0.0
      %837 = vmatpush1.msra.mxu0 %v801
      %838 = vmatprep.subr.mxu0 0.0
      %839 = vmatpush2.msra.mxu0 0.0
      %840 = vmatprep.subr.mxu0 0.0
      %841 = vmatpush2.msra.mxu0 0.0
      %842 = vmatprep.subr.mxu0 0.0
      %843 = vmatpush2.msra.mxu0 0.0
      %844 = vmatprep.subr.mxu0 0.0
      %845 = vmatpush2.msra.mxu0 0.0
      %846 = vmatprep.subr.mxu0 0.0
      %847 = vmatpush2.msra.mxu0 0.0
      %848 = vmatprep.subr.mxu0 0.0
      %849 = vmatpush2.msra.mxu0 0.0
      %850 = vmatprep.subr.mxu0 0.0
      %851 = vmatpush2.msra.mxu0 0.0
      %852 = vmatprep.subr.mxu0 0.0
      %853 = vmatpush2.msra.mxu0 0.0
      %854 = vmatprep.subr.mxu0 0.0
      %855 = vmatpush2.msra.mxu0 0.0
      %856 = vmatprep.subr.mxu0 0.0
      %857 = vmatpush2.msra.mxu0 0.0
      %858 = vmatprep.subr.mxu0 0.0
      %859 = vmatpush2.msra.mxu0 0.0
      %860 = vmatprep.subr.mxu0 0.0
      %861 = vmatpush2.msra.mxu0 0.0
      %862 = vmatprep.subr.mxu0 0.0
      %863 = vmatpush2.msra.mxu0 0.0
      %864 = vmatprep.subr.mxu0 0.0
      %865 = vmatpush2.msra.mxu0 0.0
      %866 = vmatprep.subr.mxu0 0.0
      %867 = vmatpush2.msra.mxu0 0.0
      %868 = vmatprep.subr.mxu0 0.0
      %869 = vmatpush2.msra.mxu0 0.0
      %870 = vmatprep.mubr.f32.mxu0 0.0
      %871 = vmatmul.mubr.f32.gmra.mxu0 %v804
      %v872 = vpop.f32.mrf.mxu0
      %v873 = vadd.f32 0.0, %v872
      %v874 = vpop.f32.mrf.mxu0
      %875 = vdwg.mxu0
      %v876 = vadd.f32 %v797, %v873
      %s877 = scalar_lea.vmem %s309, 56
      %v878 = vld [vmem:[%s877] sm:$0xff]
      %879 = vrot.lane.b32.xlu0 %v324, 107
      %v880 = vpop.permute.xlu0 %879
      %v883 = vsel %vm327, %v878, 0
      %885 = vmatprep.subr.mxu0 0.0
      %886 = vmatpush1.msra.mxu0 0.0
      %887 = vmatprep.subr.mxu0 0.0
      %888 = vmatpush1.msra.mxu0 0.0
      %889 = vmatprep.subr.mxu0 0.0
      %890 = vmatpush1.msra.mxu0 0.0
      %891 = vmatprep.subr.mxu0 0.0
      %892 = vmatpush1.msra.mxu0 0.0
      %893 = vmatprep.subr.mxu0 0.0
      %894 = vmatpush1.msra.mxu0 0.0
      %895 = vmatprep.subr.mxu0 0.0
      %896 = vmatpush1.msra.mxu0 0.0
      %897 = vmatprep.subr.mxu0 0.0
      %898 = vmatpush1.msra.mxu0 0.0
      %899 = vmatprep.subr.mxu0 0.0
      %900 = vmatpush1.msra.mxu0 0.0
      %901 = vmatprep.subr.mxu0 0.0
      %902 = vmatpush1.msra.mxu0 0.0
      %903 = vmatprep.subr.mxu0 0.0
      %904 = vmatpush1.msra.mxu0 0.0
      %905 = vmatprep.subr.mxu0 0.0
      %906 = vmatpush1.msra.mxu0 0.0
      %907 = vmatprep.subr.mxu0 0.0
      %908 = vmatpush1.msra.mxu0 0.0
      %909 = vmatprep.subr.mxu0 0.0
      %910 = vmatpush1.msra.mxu0 0.0
      %911 = vmatprep.subr.mxu0 0.0
      %912 = vmatpush1.msra.mxu0 0.0
      %913 = vmatprep.subr.mxu0 0.0
      %914 = vmatpush1.msra.mxu0 0.0
      %915 = vmatprep.subr.mxu0 0.0
      %916 = vmatpush1.msra.mxu0 %v880
      %917 = vmatprep.subr.mxu0 0.0
      %918 = vmatpush2.msra.mxu0 0.0
      %919 = vmatprep.subr.mxu0 0.0
      %920 = vmatpush2.msra.mxu0 0.0
      %921 = vmatprep.subr.mxu0 0.0
      %922 = vmatpush2.msra.mxu0 0.0
      %923 = vmatprep.subr.mxu0 0.0
      %924 = vmatpush2.msra.mxu0 0.0
      %925 = vmatprep.subr.mxu0 0.0
      %926 = vmatpush2.msra.mxu0 0.0
      %927 = vmatprep.subr.mxu0 0.0
      %928 = vmatpush2.msra.mxu0 0.0
      %929 = vmatprep.subr.mxu0 0.0
      %930 = vmatpush2.msra.mxu0 0.0
      %931 = vmatprep.subr.mxu0 0.0
      %932 = vmatpush2.msra.mxu0 0.0
      %933 = vmatprep.subr.mxu0 0.0
      %934 = vmatpush2.msra.mxu0 0.0
      %935 = vmatprep.subr.mxu0 0.0
      %936 = vmatpush2.msra.mxu0 0.0
      %937 = vmatprep.subr.mxu0 0.0
      %938 = vmatpush2.msra.mxu0 0.0
      %939 = vmatprep.subr.mxu0 0.0
      %940 = vmatpush2.msra.mxu0 0.0
      %941 = vmatprep.subr.mxu0 0.0
      %942 = vmatpush2.msra.mxu0 0.0
      %943 = vmatprep.subr.mxu0 0.0
      %944 = vmatpush2.msra.mxu0 0.0
      %945 = vmatprep.subr.mxu0 0.0
      %946 = vmatpush2.msra.mxu0 0.0
      %947 = vmatprep.subr.mxu0 0.0
      %948 = vmatpush2.msra.mxu0 0.0
      %949 = vmatprep.mubr.f32.mxu0 0.0
      %950 = vmatmul.mubr.f32.gmra.mxu0 %v883
      %v951 = vpop.f32.mrf.mxu0
      %v952 = vadd.f32 0.0, %v951
      %v953 = vpop.f32.mrf.mxu0
      %954 = vdwg.mxu0
      %v955 = vadd.f32 %v876, %v952
      %s956 = scalar_lea.vmem %s309, 64
      %v957 = vld [vmem:[%s956] sm:$0xff]
      %958 = vrot.lane.b32.xlu0 %v324, 106
      %v959 = vpop.permute.xlu0 %958
      %v962 = vsel %vm327, %v957, 0
      %964 = vmatprep.subr.mxu0 0.0
      %965 = vmatpush1.msra.mxu0 0.0
      %966 = vmatprep.subr.mxu0 0.0
      %967 = vmatpush1.msra.mxu0 0.0
      %968 = vmatprep.subr.mxu0 0.0
      %969 = vmatpush1.msra.mxu0 0.0
      %970 = vmatprep.subr.mxu0 0.0
      %971 = vmatpush1.msra.mxu0 0.0
      %972 = vmatprep.subr.mxu0 0.0
      %973 = vmatpush1.msra.mxu0 0.0
      %974 = vmatprep.subr.mxu0 0.0
      %975 = vmatpush1.msra.mxu0 0.0
      %976 = vmatprep.subr.mxu0 0.0
      %977 = vmatpush1.msra.mxu0 0.0
      %978 = vmatprep.subr.mxu0 0.0
      %979 = vmatpush1.msra.mxu0 0.0
      %980 = vmatprep.subr.mxu0 0.0
      %981 = vmatpush1.msra.mxu0 0.0
      %982 = vmatprep.subr.mxu0 0.0
      %983 = vmatpush1.msra.mxu0 0.0
      %984 = vmatprep.subr.mxu0 0.0
      %985 = vmatpush1.msra.mxu0 0.0
      %986 = vmatprep.subr.mxu0 0.0
      %987 = vmatpush1.msra.mxu0 0.0
      %988 = vmatprep.subr.mxu0 0.0
      %989 = vmatpush1.msra.mxu0 0.0
      %990 = vmatprep.subr.mxu0 0.0
      %991 = vmatpush1.msra.mxu0 0.0
      %992 = vmatprep.subr.mxu0 0.0
      %993 = vmatpush1.msra.mxu0 0.0
      %994 = vmatprep.subr.mxu0 0.0
      %995 = vmatpush1.msra.mxu0 %v959
      %996 = vmatprep.subr.mxu0 0.0
      %997 = vmatpush2.msra.mxu0 0.0
      %998 = vmatprep.subr.mxu0 0.0
      %999 = vmatpush2.msra.mxu0 0.0
      %1000 = vmatprep.subr.mxu0 0.0
      %1001 = vmatpush2.msra.mxu0 0.0
      %1002 = vmatprep.subr.mxu0 0.0
      %1003 = vmatpush2.msra.mxu0 0.0
      %1004 = vmatprep.subr.mxu0 0.0
      %1005 = vmatpush2.msra.mxu0 0.0
      %1006 = vmatprep.subr.mxu0 0.0
      %1007 = vmatpush2.msra.mxu0 0.0
      %1008 = vmatprep.subr.mxu0 0.0
      %1009 = vmatpush2.msra.mxu0 0.0
      %1010 = vmatprep.subr.mxu0 0.0
      %1011 = vmatpush2.msra.mxu0 0.0
      %1012 = vmatprep.subr.mxu0 0.0
      %1013 = vmatpush2.msra.mxu0 0.0
      %1014 = vmatprep.subr.mxu0 0.0
      %1015 = vmatpush2.msra.mxu0 0.0
      %1016 = vmatprep.subr.mxu0 0.0
      %1017 = vmatpush2.msra.mxu0 0.0
      %1018 = vmatprep.subr.mxu0 0.0
      %1019 = vmatpush2.msra.mxu0 0.0
      %1020 = vmatprep.subr.mxu0 0.0
      %1021 = vmatpush2.msra.mxu0 0.0
      %1022 = vmatprep.subr.mxu0 0.0
      %1023 = vmatpush2.msra.mxu0 0.0
      %1024 = vmatprep.subr.mxu0 0.0
      %1025 = vmatpush2.msra.mxu0 0.0
      %1026 = vmatprep.subr.mxu0 0.0
      %1027 = vmatpush2.msra.mxu0 0.0
      %1028 = vmatprep.mubr.f32.mxu0 0.0
      %1029 = vmatmul.mubr.f32.gmra.mxu0 %v962
      %v1030 = vpop.f32.mrf.mxu0
      %v1031 = vadd.f32 0.0, %v1030
      %v1032 = vpop.f32.mrf.mxu0
      %1033 = vdwg.mxu0
      %v1034 = vadd.f32 %v955, %v1031
      %vm1035 = vcmask 818176
      %1036 = vst.msk [vmem:[#allocation2] sm:$0xff] %vm1035, %v1034
      %p1037 = scmp.eq.s32.totalorder %s25, 2
      // Predicated region
      $region49: #{fcn_head_forward.7} parent=43 // pred_check
        %p1038 = pneg %p1037
      $region50: #{fcn_head_forward.7} parent=43 // pred_check_branch
        %1040 = sbr.rel (%p1038) target = $region52
      $region51: #{fcn_head_forward.7} parent=43 // pred_region
        %v1041 = vld [vmem:[#allocation2] sm:$0xff]
        %v1042 = vld [vmem:[%s2] sm:$0xff]
        %1044 = vset.pattern.permute.xlu0 0
        %1045 = vperm.xlu0 %1044, %v1042
        %v1046 = vpop.permute.xlu0 %1045
        %v1048 = vadd.f32 %v1041, %v1046
        %s1049 = sld [smem:[#allocation3]]
        %vm1050 = vcmp.ge.f32.partialorder %v1048, 0.0
        %v1051 = vstv %s1049
        %v1052 = vmul.f32 %v1051, %v1048
        %v1053 = vsel %vm1050, %v1048, %v1052
        %v1054 = vld [vmem:[%s4] sm:$0xf]
        %v1055 = vld [vmem:[%s5] sm:$0xf]
        %1057 = vset.pattern.permute.xlu0 0
        %1058 = vperm.xlu0 %1057, %v1055
        %v1059 = vpop.permute.xlu0 %1058
        %v1062 = vsel %vm327, %v1054, 0
        %1064 = vmatprep.subr.mxu0 0.0
        %1065 = vmatpush1.msra.mxu0 0.0
        %1066 = vmatprep.subr.mxu0 0.0
        %1067 = vmatpush1.msra.mxu0 0.0
        %1068 = vmatprep.subr.mxu0 0.0
        %1069 = vmatpush1.msra.mxu0 0.0
        %1070 = vmatprep.subr.mxu0 0.0
        %1071 = vmatpush1.msra.mxu0 0.0
        %1072 = vmatprep.subr.mxu0 0.0
        %1073 = vmatpush1.msra.mxu0 0.0
        %1074 = vmatprep.subr.mxu0 0.0
        %1075 = vmatpush1.msra.mxu0 0.0
        %1076 = vmatprep.subr.mxu0 0.0
        %1077 = vmatpush1.msra.mxu0 0.0
        %1078 = vmatprep.subr.mxu0 0.0
        %1079 = vmatpush1.msra.mxu0 0.0
        %1080 = vmatprep.subr.mxu0 0.0
        %1081 = vmatpush1.msra.mxu0 0.0
        %1082 = vmatprep.subr.mxu0 0.0
        %1083 = vmatpush1.msra.mxu0 0.0
        %1084 = vmatprep.subr.mxu0 0.0
        %1085 = vmatpush1.msra.mxu0 0.0
        %1086 = vmatprep.subr.mxu0 0.0
        %1087 = vmatpush1.msra.mxu0 0.0
        %1088 = vmatprep.subr.mxu0 0.0
        %1089 = vmatpush1.msra.mxu0 0.0
        %1090 = vmatprep.subr.mxu0 0.0
        %1091 = vmatpush1.msra.mxu0 0.0
        %1092 = vmatprep.subr.mxu0 0.0
        %1093 = vmatpush1.msra.mxu0 0.0
        %1094 = vmatprep.subr.mxu0 0.0
        %1095 = vmatpush1.msra.mxu0 %v1053
        %1096 = vmatprep.subr.mxu0 0.0
        %1097 = vmatpush2.msra.mxu0 0.0
        %1098 = vmatprep.subr.mxu0 0.0
        %1099 = vmatpush2.msra.mxu0 0.0
        %1100 = vmatprep.subr.mxu0 0.0
        %1101 = vmatpush2.msra.mxu0 0.0
        %1102 = vmatprep.subr.mxu0 0.0
        %1103 = vmatpush2.msra.mxu0 0.0
        %1104 = vmatprep.subr.mxu0 0.0
        %1105 = vmatpush2.msra.mxu0 0.0
        %1106 = vmatprep.subr.mxu0 0.0
        %1107 = vmatpush2.msra.mxu0 0.0
        %1108 = vmatprep.subr.mxu0 0.0
        %1109 = vmatpush2.msra.mxu0 0.0
        %1110 = vmatprep.subr.mxu0 0.0
        %1111 = vmatpush2.msra.mxu0 0.0
        %1112 = vmatprep.subr.mxu0 0.0
        %1113 = vmatpush2.msra.mxu0 0.0
        %1114 = vmatprep.subr.mxu0 0.0
        %1115 = vmatpush2.msra.mxu0 0.0
        %1116 = vmatprep.subr.mxu0 0.0
        %1117 = vmatpush2.msra.mxu0 0.0
        %1118 = vmatprep.subr.mxu0 0.0
        %1119 = vmatpush2.msra.mxu0 0.0
        %1120 = vmatprep.subr.mxu0 0.0
        %1121 = vmatpush2.msra.mxu0 0.0
        %1122 = vmatprep.subr.mxu0 0.0
        %1123 = vmatpush2.msra.mxu0 0.0
        %1124 = vmatprep.subr.mxu0 0.0
        %1125 = vmatpush2.msra.mxu0 0.0
        %1126 = vmatprep.subr.mxu0 0.0
        %1127 = vmatpush2.msra.mxu0 0.0
        %1128 = vmatprep.mubr.f32.mxu0 0.0
        %1129 = vmatmul.mubr.f32.gmra.mxu0 %v1062
        %v1130 = vpop.f32.mrf.mxu0
        %v1131 = vadd.f32 %v1059, %v1130
        %v1132 = vpop.f32.mrf.mxu0
        %1133 = vdwg.mxu0
        %vm1134 = vcmask 814080
        %1135 = vst.msk [vmem:[%s317] sm:$0xf] %vm1134, %v1131
      $region52: #{fcn_head_forward.7} parent=43 // pred_fallthru
        _
      %p1136 = scmp.lt.s32.totalorder %s23, 1
      %s1137 = scalar_select %p1136, %s23, 1
      %p1138 = scmp.lt.s32.totalorder %s24, 7
      %s1139 = scalar_select %p1138, %s24, 7
      %s1140 = smul.addr %s1137, 8
      %s1141 = sadd.s32 %s1139, %s1140
      %s1142 = smul.addr %s1141, 4
      %s1143 = scalar_lea.vmem %s6, %s1142
      // Predicated region
      $region53: #{fcn_head_forward.7} parent=43 // pred_check
        %p1144 = pneg %p197
      $region54: #{fcn_head_forward.7} parent=43 // pred_check_branch
        %1146 = sbr.rel (%p1144) target = $region56
      $region55: #{fcn_head_forward.7} parent=43 // pred_region
        _
      $region56: #{fcn_head_forward.7} parent=43 // pred_fallthru
        _
    $region44: #{fcn_head_forward.7} parent=5 // pred_fallthru
      _
    %p1147 = scmp.le.s32.totalorder 2, %s13
    // Predicated region
    $region57: #{fcn_head_forward.7} parent=5 // pred_check
      %p1148 = pneg %p1147
    $region58: #{fcn_head_forward.7} parent=5 // pred_check_branch
      %1150 = sbr.rel (%p1148) target = $region60
    $region59: #{fcn_head_forward.7} parent=5 // pred_region
      %s1151 = ssub.s32 %s13, 2
      // Predicated region
      $region61: #{fcn_head_forward.7} parent=59 // pred_check
        %p1152 = pneg %p203
      $region62: #{fcn_head_forward.7} parent=59 // pred_check_branch
        %1154 = sbr.rel (%p1152) target = $region64
      $region63: #{fcn_head_forward.7} parent=59 // pred_region
        %p1155 = scmp.lt.s32.totalorder %s26, 1
        %s1156 = scalar_select %p1155, %s26, 1
        %p1157 = scmp.lt.s32.totalorder %s27, 7
        %s1158 = scalar_select %p1157, %s27, 7
        %s1159 = smul.addr %s1156, 8
        %s1160 = sadd.s32 %s1158, %s1159
        %s1161 = smul.addr %s1160, 4
        %s1162 = scalar_lea.vmem %s6, %s1161
      $region64: #{fcn_head_forward.7} parent=59 // pred_fallthru
        _
    $region60: #{fcn_head_forward.7} parent=5 // pred_fallthru
      _
  $region6: #{fcn_head_forward.7} parent=0 // loop_footer
    %s17 = sadd.s32 1, %s13
  $region7: #{fcn_head_forward.7} parent=0 // loop_footer_branch
    %12 = sbr.rel target = $region3
  $region8: #{fcn_head_forward.7} parent=0 // loop_exit
    _

</llo_original>
